<compile_context>
chip_gen: v5e
topology: v5e:2x2
jax: 0.10.0
libtpu: 0.0.40
codegen_flags: <defaults>
</compile_context>

<pallas_src>
import functools

import jax
import jax.numpy as jnp
from jax.experimental import pallas as pl
from jax.experimental.pallas import tpu as pltpu


# ---------------------------------------------------------------------------
# Kernel 1: fused QKV projection (1x1 conv == per-pixel matmul).
# ---------------------------------------------------------------------------
def _qkv_proj_kernel(x_ref, wqv_ref, bqv_ref, wk_ref, bk_ref,
                     q_ref, kt_ref, v_ref, *, n_head, d, c):
    # x_ref:   [1, TP, C]  bf16
    # wqv_ref: [C, 2C]     bf16 (columns: q heads then v heads; q pre-scaled)
    # bqv_ref: [1, 2C]     f32
    # wk_ref:  [C, C]      bf16 (k conv weight, [out, in], pre-scaled)
    # bk_ref:  [C, 1]      f32
    # q_ref:   [1, n_head, TP, d] bf16
    # kt_ref:  [1, n_head, d, TP] bf16   (K already transposed)
    # v_ref:   [1, n_head, TP, d] bf16
    x = x_ref[0]                                                   # [TP, C]
    # One wide MXU matmul (N = 2C, contraction = C) for q and v.
    acc_qv = jnp.dot(x, wqv_ref[...],
                     preferred_element_type=jnp.float32) + bqv_ref[...]   # [TP, 2C]
    # K emitted pre-transposed: [C, TP] = Wk (contract C) x  (A.B^T MXU pattern,
    # no explicit transpose instruction; store is lane-dense in TP).
    acc_kt = jax.lax.dot_general(
        wk_ref[...], x, (((1,), (1,)), ((), ())),
        preferred_element_type=jnp.float32) + bk_ref[...]                 # [C, TP]
    for hh in range(n_head):                    # static unroll, n_head is small
        q_ref[0, hh] = acc_qv[:, hh * d:(hh + 1) * d].astype(q_ref.dtype)
        v_ref[0, hh] = acc_qv[:, c + hh * d:c + (hh + 1) * d].astype(v_ref.dtype)
        kt_ref[0, hh] = acc_kt[hh * d:(hh + 1) * d, :].astype(kt_ref.dtype)


# ---------------------------------------------------------------------------
# Kernel 2: flash attention; grid (N, head, Q-tile, KV-tile), KV innermost.
# ---------------------------------------------------------------------------
def _flash_attn_kernel(q_ref, kt_ref, v_ref, o_ref, m_sc, l_sc, acc_sc):
    # q_ref: [1, 1, TQ, d] bf16 (scale folded in)
    # kt_ref: [1, 1, d, TK] bf16 (pre-transposed K, scale folded in)
    # v_ref: [1, 1, TK, d] bf16
    # o_ref: [1, 1, TQ, d] or [1, TQ, d] bf16
    # m_sc/l_sc: [TQ, 1] f32 ; acc_sc: [TQ, d] f32
    ki = pl.program_id(3)

    @pl.when(ki == 0)
    def _():
        m_sc[...] = jnp.full(m_sc.shape, -jnp.inf, dtype=m_sc.dtype)
        l_sc[...] = jnp.zeros(l_sc.shape, dtype=l_sc.dtype)
        acc_sc[...] = jnp.zeros(acc_sc.shape, dtype=acc_sc.dtype)

    q = q_ref[0, 0]                                        # [TQ, d]
    kt = kt_ref[0, 0]                                      # [d, TK]
    s = jnp.dot(q, kt, preferred_element_type=jnp.float32)  # [TQ, TK] on the MXU

    m_prev = m_sc[...]
    m_new = jnp.maximum(m_prev, jnp.max(s, axis=-1, keepdims=True))
    alpha = jnp.exp(m_prev - m_new)
    p = jnp.exp(s - m_new)                                 # f32
    l_sc[...] = alpha * l_sc[...] + jnp.sum(p, axis=-1, keepdims=True)
    acc_sc[...] = alpha * acc_sc[...] + jnp.dot(
        p.astype(v_ref.dtype), v_ref[0, 0], preferred_element_type=jnp.float32)
    m_sc[...] = m_new

    @pl.when(ki == pl.num_programs(3) - 1)
    def _():
        inv_l = pl.reciprocal(l_sc[...], approx=True)      # once per Q tile
        out = (acc_sc[...] * inv_l).astype(o_ref.dtype)
        o_ref[...] = out.reshape(o_ref.shape)


# ---------------------------------------------------------------------------
# Kernel 3: out projection (1x1 conv) + bias + residual, single matmul.
# ---------------------------------------------------------------------------
def _out_proj_kernel(x_ref, y_ref, w_ref, b_ref, o_ref):
    # x_ref: [1, TP, C] (input dtype) ; y_ref: [1, TP, C] bf16 (heads on lane axis)
    # w_ref: [C, C] bf16 (wout^T)     ; b_ref: [1, C] f32 ; o_ref: [1, TP, C]
    acc = x_ref[0].astype(jnp.float32) + b_ref[...]               # residual + bias
    acc = acc + jnp.dot(y_ref[0], w_ref[...],
                        preferred_element_type=jnp.float32)       # contraction = C
    o_ref[0] = acc.astype(o_ref.dtype)


# ---------------------------------------------------------------------------
# Helpers
# ---------------------------------------------------------------------------
def _tile(total, desired):
    """Largest tile <= desired dividing `total`, preferring multiples of 128
    (MXU / lane width), then multiples of 8 (sublane); else the full axis.
    NOTE: the full-axis fallback can blow up VMEM for huge awkward HW; such
    shapes should pass explicit tile sizes."""
    if total <= desired:
        return total
    for align in (128, 8):
        t = (desired // align) * align
        while t >= align:
            if total % t == 0:
                return t
            t -= align
    return total


def _shrink_for_parallel(total, tile, other_parallel):
    """v7x has 2 TensorCores sharded over 'parallel' grid axes: make sure the
    product of parallel iterations is >= 2 by shrinking the tile if needed."""
    while other_parallel * (total // tile) < 2:
        smaller = _tile(total, max(tile // 2, 8))
        if smaller >= tile:
            break
        tile = smaller
    return tile


def _vmem_limit(block_bytes):
    """Generation-aware VMEM request: ~100 MiB cap on 128 MiB parts (v5e/v6e),
    ~80% of physical on v7x (leaves headroom for Mosaic internal scratch)."""
    phys = 128 << 20
    try:
        info = pltpu.get_tpu_info()
        phys = int(getattr(info, "vmem_capacity_bytes", phys) or phys)
    except Exception:
        pass
    cap = min(int(phys * 0.8), 100 << 20)
    need = 4 * block_bytes + (4 << 20)   # double-buffering + temporaries headroom
    return int(min(max(need, 16 << 20), cap))


# ---------------------------------------------------------------------------
# Wrapper
# ---------------------------------------------------------------------------
def self_att_2d(x_nchw, wqkv, bqkv, wout, bout, *, n_head=1,
                tile_q=512, tile_kv=512, tile_p=512):
    """SelfAtt2d forward.

    x_nchw: [N, C, H, W]; wqkv: [3C, C]; bqkv: [3C]; wout: [C, C]; bout: [C].
    """
    n, c, h, w = x_nchw.shape
    assert c % n_head == 0
    d = c // n_head
    hw = h * w

    tq = _tile(hw, tile_q)
    tk = _tile(hw, tile_kv)
    tp = _tile(hw, tile_p)
    tp = _shrink_for_parallel(hw, tp, n)
    tq = _shrink_for_parallel(hw, tq, n * n_head)

    # ---- layout / weight re-packing glue (plain JAX, trace-time only) ----
    x_hwc = jnp.transpose(x_nchw.reshape(n, c, hw), (0, 2, 1))      # [N, HW, C]
    x_bf = x_hwc.astype(jnp.bfloat16)

    scale = jnp.float32(float(d) ** -0.25)          # applied to both q and k
    wqkv_f = wqkv.astype(jnp.float32)
    bqkv_f = bqkv.astype(jnp.float32)
    # q+v packed columns [C, 2C]: q heads first, then v heads (torch chunk order).
    w_qv = jnp.concatenate(
        [jnp.transpose(wqkv_f[0:c]) * scale, jnp.transpose(wqkv_f[2 * c:3 * c])],
        axis=1).astype(jnp.bfloat16)
    b_qv = jnp.concatenate(
        [bqkv_f[0:c] * scale, bqkv_f[2 * c:3 * c]]).reshape(1, 2 * c)
    # k conv weight kept [out, in] so kernel 1 emits K^T directly.
    w_k = (wqkv_f[c:2 * c] * scale).astype(jnp.bfloat16)             # [C, C]
    b_k = (bqkv_f[c:2 * c] * scale).reshape(c, 1)
    # out-proj: channels-last matmul uses W^T.
    w_o = jnp.transpose(wout).astype(jnp.bfloat16)                   # [C, C]
    b_o = bout.reshape(1, c).astype(jnp.float32)

    # ---- 1) QKV projection --------------------------------------------------
    qkv_block_bytes = (tp * c * 2 + 3 * c * c * 2 + 3 * c * 4
                       + tp * 3 * c * 4 + tp * 3 * c * 2)
    q_heads, kt_heads, v_heads = pl.pallas_call(
        functools.partial(_qkv_proj_kernel, n_head=n_head, d=d, c=c),
        out_shape=(
            jax.ShapeDtypeStruct((n, n_head, hw, d), jnp.bfloat16),
            jax.ShapeDtypeStruct((n, n_head, d, hw), jnp.bfloat16),
            jax.ShapeDtypeStruct((n, n_head, hw, d), jnp.bfloat16),
        ),
        grid_spec=pltpu.PrefetchScalarGridSpec(
            num_scalar_prefetch=0,
            grid=(n, hw // tp),
            in_specs=[
                pl.BlockSpec((1, tp, c), lambda i, p: (i, p, 0)),
                pl.BlockSpec((c, 2 * c), lambda i, p: (0, 0)),
                pl.BlockSpec((1, 2 * c), lambda i, p: (0, 0)),
                pl.BlockSpec((c, c), lambda i, p: (0, 0)),
                pl.BlockSpec((c, 1), lambda i, p: (0, 0)),
            ],
            out_specs=[
                pl.BlockSpec((1, n_head, tp, d), lambda i, p: (i, 0, p, 0)),
                pl.BlockSpec((1, n_head, d, tp), lambda i, p: (i, 0, 0, p)),
                pl.BlockSpec((1, n_head, tp, d), lambda i, p: (i, 0, p, 0)),
            ],
        ),
        compiler_params=pltpu.CompilerParams(
            dimension_semantics=("parallel", "parallel"),
            vmem_limit_bytes=_vmem_limit(qkv_block_bytes)),
        cost_estimate=pl.CostEstimate(
            flops=2 * n * hw * c * 3 * c,
            transcendentals=0,
            bytes_accessed=n * hw * c * 2 + 3 * c * c * 2 + 3 * n * hw * c * 2),
    )(x_bf, w_qv, b_qv, w_k, b_k)

    # ---- 2) flash attention --------------------------------------------------
    n_q_tiles = hw // tq
    n_k_tiles = hw // tk
    # Deepen the K/V pipeline when the per-step K/V DMA is small (d small) and
    # there are enough KV steps for it to matter.
    kv_kwargs = ({"pipeline_mode": pl.Buffered(3)}
                 if (d <= 64 and n_k_tiles >= 3) else {})

    if d % 128 == 0:
        # Heads concatenated on the lane axis directly from the out_spec
        # (lane-dense stores; kernel 3 consumes it as-is).
        att_out_shape = jax.ShapeDtypeStruct((n, hw, c), jnp.bfloat16)
        att_out_spec = pl.BlockSpec((1, tq, d), lambda i, hh, qi, ki: (i, qi, hh))
    else:
        att_out_shape = jax.ShapeDtypeStruct((n, n_head, hw, d), jnp.bfloat16)
        att_out_spec = pl.BlockSpec((1, 1, tq, d),
                                    lambda i, hh, qi, ki: (i, hh, qi, 0))

    att_block_bytes = (tq * d * 2 + 2 * tk * d * 2 + tq * d * 2
                       + 2 * tq * tk * 4 + tq * d * 4 + 2 * tq * 4)
    y_att = pl.pallas_call(
        _flash_attn_kernel,
        out_shape=att_out_shape,
        grid_spec=pltpu.PrefetchScalarGridSpec(
            num_scalar_prefetch=0,
            grid=(n, n_head, n_q_tiles, n_k_tiles),
            in_specs=[
                pl.BlockSpec((1, 1, tq, d),
                             lambda i, hh, qi, ki: (i, hh, qi, 0)),
                pl.BlockSpec((1, 1, d, tk),
                             lambda i, hh, qi, ki: (i, hh, 0, ki), **kv_kwargs),
                pl.BlockSpec((1, 1, tk, d),
                             lambda i, hh, qi, ki: (i, hh, ki, 0), **kv_kwargs),
            ],
            out_specs=att_out_spec,
            scratch_shapes=[
                pltpu.VMEM((tq, 1), jnp.float32),    # running max
                pltpu.VMEM((tq, 1), jnp.float32),    # running sum
                pltpu.VMEM((tq, d), jnp.float32),    # output accumulator
            ],
        ),
        compiler_params=pltpu.CompilerParams(
            dimension_semantics=("parallel", "parallel", "parallel", "arbitrary"),
            vmem_limit_bytes=_vmem_limit(att_block_bytes)),
        cost_estimate=pl.CostEstimate(
            flops=4 * n * n_head * hw * hw * d,
            transcendentals=n * n_head * hw * hw,
            bytes_accessed=2 * n * n_head * hw * d * 2
                           + 2 * n * n_head * n_q_tiles * hw * d * 2),
    )(q_heads, kt_heads, v_heads)

    if d % 128 == 0:
        y_flat = y_att                                          # already [N, HW, C]
    else:
        # Cheap XLA reshape to concatenate heads on the lane axis so kernel 3
        # is a single contraction-over-C matmul with a lane-dense y read.
        y_flat = jnp.transpose(y_att, (0, 2, 1, 3)).reshape(n, hw, c)

    # ---- 3) out projection + bias + residual ---------------------------------
    xbytes = x_hwc.dtype.itemsize
    out_block_bytes = (2 * tp * c * xbytes + tp * c * 2 + c * c * 2 + c * 4
                       + tp * c * 4)
    out_hwc = pl.pallas_call(
        _out_proj_kernel,
        out_shape=jax.ShapeDtypeStruct((n, hw, c), x_nchw.dtype),
        grid_spec=pltpu.PrefetchScalarGridSpec(
            num_scalar_prefetch=0,
            grid=(n, hw // tp),
            in_specs=[
                pl.BlockSpec((1, tp, c), lambda i, p: (i, p, 0)),
                pl.BlockSpec((1, tp, c), lambda i, p: (i, p, 0)),
                pl.BlockSpec((c, c), lambda i, p: (0, 0)),
                pl.BlockSpec((1, c), lambda i, p: (0, 0)),
            ],
            out_specs=pl.BlockSpec((1, tp, c), lambda i, p: (i, p, 0)),
        ),
        compiler_params=pltpu.CompilerParams(
            dimension_semantics=("parallel", "parallel"),
            vmem_limit_bytes=_vmem_limit(out_block_bytes)),
        cost_estimate=pl.CostEstimate(
            flops=2 * n * hw * c * c,
            transcendentals=0,
            bytes_accessed=2 * n * hw * c * xbytes + n * hw * c * 2 + c * c * 2),
    )(x_hwc, y_flat, w_o, b_o)

    return jnp.transpose(out_hwc, (0, 2, 1)).reshape(n, c, h, w)


# ---------------------------------------------------------------------------
# Pure-JAX mirror of the PyTorch forward (correctness check).
# ---------------------------------------------------------------------------
def self_att_2d_reference(x, wqkv, bqkv, wout, bout, *, n_head=1):
    n, c, h, w = x.shape
    hw = h * w
    d = c // n_head
    xf = x.reshape(n, c, hw)
    qkv = jnp.einsum('oc,nci->noi', wqkv, xf) + bqkv[None, :, None]   # [n,3c,hw]
    qkv = qkv.reshape(n, 3 * n_head, d, hw).transpose(0, 1, 3, 2)     # [n,3H,hw,d]
    q, k, v = jnp.split(qkv, 3, axis=1)
    scale = d ** (-0.25)
    att = jax.nn.softmax(
        jnp.einsum('nhqd,nhkd->nhqk', q * scale, k * scale), axis=-1)
    y = jnp.einsum('nhqk,nhkd->nhqd', att, v)
    y = y.transpose(0, 1, 3, 2).reshape(n, c, hw)
    out_y = jnp.einsum('oc,nci->noi', wout, y) + bout[None, :, None]
    return (xf + out_y).reshape(n, c, h, w)


if __name__ == "__main__":
    # Small shapes consistent with the module: batch=2, c_in=4, 16x16 spatial.
    N, C, H, W = 2, 4, 16, 16
    N_HEAD = 2

    key = jax.random.PRNGKey(0)
    kx, k1, k2, k3, k4 = jax.random.split(key, 5)

    x = jax.random.normal(kx, (N, C, H, W), dtype=jnp.float32)
    # Deterministic synthetic parameters (Conv2d 1x1 weights squeezed to 2D).
    wqkv = jax.random.normal(k1, (3 * C, C), dtype=jnp.float32) * 0.2
    bqkv = jax.random.normal(k2, (3 * C,), dtype=jnp.float32) * 0.1
    wout = jax.random.normal(k3, (C, C), dtype=jnp.float32) * 0.2
    bout = jax.random.normal(k4, (C,), dtype=jnp.float32) * 0.1

    # 128-sized tiles on a 256-pixel map exercise the multi-tile online softmax
    # (2 Q tiles x 2 KV tiles per head) and the multi-tile projection grids.
    att_fn = jax.jit(functools.partial(self_att_2d, n_head=N_HEAD,
                                       tile_q=128, tile_kv=128, tile_p=128))
    out = jax.block_until_ready(att_fn(x, wqkv, bqkv, wout, bout))

    ref = self_att_2d_reference(x, wqkv, bqkv, wout, bout, n_head=N_HEAD)
    assert out.shape == (N, C, H, W)
    # bf16 MXU operands + approx reciprocal -> looser tolerance than pure f32.
    max_err = float(jnp.max(jnp.abs(out - ref)))
    assert jnp.allclose(out, ref, rtol=2e-2, atol=2e-2), (
        f"mismatch vs reference (max abs err {max_err})")

    print("KERNEL_OK")
</pallas_src>

<mosaic_0001>
module attributes {stable_mosaic.version = 11 : i64} {
  func.func @_flash_attn_kernel(%arg0: i32, %arg1: i32, %arg2: i32, %arg3: i32, %arg4: memref<1x1x128x2xbf16, #tpu.memory_space<vmem>>, %arg5: memref<1x1x2x128xbf16, #tpu.memory_space<vmem>>, %arg6: memref<1x1x128x2xbf16, #tpu.memory_space<vmem>>, %arg7: memref<1x1x128x2xbf16, #tpu.memory_space<vmem>>, %arg8: memref<128x1xf32, #tpu.memory_space<vmem>>, %arg9: memref<128x1xf32, #tpu.memory_space<vmem>>, %arg10: memref<128x2xf32, #tpu.memory_space<vmem>>) attributes {dimension_semantics = [#tpu.dimension_semantics<parallel>, #tpu.dimension_semantics<parallel>, #tpu.dimension_semantics<parallel>, #tpu.dimension_semantics<arbitrary>], iteration_bounds = array<i64: 2, 2, 2, 2>, scalar_prefetch = 0 : i64, scratch_operands = 3 : i64, tpu.core_type = #tpu.core_type<tc>, window_params = [{transform_indices = @transform_0, window_bounds = array<i64: 1, 1, 128, 2>}, {transform_indices = @transform_1, window_bounds = array<i64: 1, 1, 2, 128>}, {transform_indices = @transform_2, window_bounds = array<i64: 1, 1, 128, 2>}, {transform_indices = @transform_3, window_bounds = array<i64: 1, 1, 128, 2>}]} {
    %c0_i32 = arith.constant 0 : i32
    %0 = arith.cmpi eq, %arg3, %c0_i32 : i32
    %1 = arith.extui %0 : i1 to i32
    %c0_i32_0 = arith.constant 0 : i32
    %2 = arith.cmpi ne, %1, %c0_i32_0 : i32
    scf.if %2 {
      %cst_28 = arith.constant 0xFF800000 : f32
      %36 = vector.broadcast %cst_28 : f32 to vector<128x1xf32>
      %c0_29 = arith.constant 0 : index
      %c0_30 = arith.constant 0 : index
      %37 = vector.load %arg8[%c0_29, %c0_30] : memref<128x1xf32, #tpu.memory_space<vmem>>, vector<128x1xf32>
      tpu.vector_store %arg8[%c0_29, %c0_30], %36 {strides = array<i32>} : memref<128x1xf32, #tpu.memory_space<vmem>>, vector<128x1xf32>,
      %cst_31 = arith.constant 0.000000e+00 : f32
      %38 = vector.broadcast %cst_31 : f32 to vector<128x1xf32>
      %c0_32 = arith.constant 0 : index
      %c0_33 = arith.constant 0 : index
      %39 = vector.load %arg9[%c0_32, %c0_33] : memref<128x1xf32, #tpu.memory_space<vmem>>, vector<128x1xf32>
      tpu.vector_store %arg9[%c0_32, %c0_33], %38 {strides = array<i32>} : memref<128x1xf32, #tpu.memory_space<vmem>>, vector<128x1xf32>,
      %cst_34 = arith.constant 0.000000e+00 : f32
      %40 = vector.broadcast %cst_34 : f32 to vector<128x2xf32>
      %c0_35 = arith.constant 0 : index
      %c0_36 = arith.constant 0 : index
      %41 = vector.load %arg10[%c0_35, %c0_36] : memref<128x2xf32, #tpu.memory_space<vmem>>, vector<128x2xf32>
      tpu.vector_store %arg10[%c0_35, %c0_36], %40 {strides = array<i32>} : memref<128x2xf32, #tpu.memory_space<vmem>>, vector<128x2xf32>,
    } else {
    }
    %c0 = arith.constant 0 : index
    %c0_1 = arith.constant 0 : index
    %c0_2 = arith.constant 0 : index
    %c0_3 = arith.constant 0 : index
    %3 = vector.load %arg4[%c0, %c0_1, %c0_2, %c0_3] : memref<1x1x128x2xbf16, #tpu.memory_space<vmem>>, vector<1x1x128x2xbf16>
    %4 = vector.shape_cast %3 : vector<1x1x128x2xbf16> to vector<128x2xbf16>
    %c0_4 = arith.constant 0 : index
    %c0_5 = arith.constant 0 : index
    %c0_6 = arith.constant 0 : index
    %c0_7 = arith.constant 0 : index
    %5 = vector.load %arg5[%c0_4, %c0_5, %c0_6, %c0_7] : memref<1x1x2x128xbf16, #tpu.memory_space<vmem>>, vector<1x1x2x128xbf16>
    %6 = vector.shape_cast %5 : vector<1x1x2x128xbf16> to vector<2x128xbf16>
    %cst = arith.constant dense<0.000000e+00> : vector<128x128xf32>
    %7 = tpu.matmul %4, %6, %cst {dimension_numbers = #tpu.dot_dimension_numbers<[1], [0], [0], [1], [0, 0, 1, 1], [], []>} : vector<128x2xbf16>, vector<2x128xbf16>, vector<128x128xf32> -> vector<128x128xf32>
    %c0_8 = arith.constant 0 : index
    %c0_9 = arith.constant 0 : index
    %8 = vector.load %arg8[%c0_8, %c0_9] : memref<128x1xf32, #tpu.memory_space<vmem>>, vector<128x1xf32>
    %cst_10 = arith.constant dense<0xFF800000> : vector<128xf32>
    %9 = vector.multi_reduction <maximumf>, %7, %cst_10 [1] : vector<128x128xf32> to vector<128xf32>
    %10 = vector.shape_cast %9 : vector<128xf32> to vector<128x1xf32>
    %11 = arith.maximumf %8, %10 : vector<128x1xf32>
    %12 = arith.subf %8, %11 : vector<128x1xf32>
    %13 = math.exp %12 : vector<128x1xf32>
    %14 = vector.broadcast %11 : vector<128x1xf32> to vector<128x128xf32>
    %15 = arith.subf %7, %14 : vector<128x128xf32>
    %16 = math.exp %15 : vector<128x128xf32>
    %c0_11 = arith.constant 0 : index
    %c0_12 = arith.constant 0 : index
    %17 = vector.load %arg9[%c0_11, %c0_12] : memref<128x1xf32, #tpu.memory_space<vmem>>, vector<128x1xf32>
    %18 = arith.mulf %13, %17 : vector<128x1xf32>
    %cst_13 = arith.constant dense<0.000000e+00> : vector<128xf32>
    %19 = vector.multi_reduction <add>, %16, %cst_13 [1] : vector<128x128xf32> to vector<128xf32>
    %20 = vector.shape_cast %19 : vector<128xf32> to vector<128x1xf32>
    %21 = arith.addf %18, %20 : vector<128x1xf32>
    %c0_14 = arith.constant 0 : index
    %c0_15 = arith.constant 0 : index
    %22 = vector.load %arg9[%c0_14, %c0_15] : memref<128x1xf32, #tpu.memory_space<vmem>>, vector<128x1xf32>
    tpu.vector_store %arg9[%c0_14, %c0_15], %21 {strides = array<i32>} : memref<128x1xf32, #tpu.memory_space<vmem>>, vector<128x1xf32>,
    %c0_16 = arith.constant 0 : index
    %c0_17 = arith.constant 0 : index
    %23 = vector.load %arg10[%c0_16, %c0_17] : memref<128x2xf32, #tpu.memory_space<vmem>>, vector<128x2xf32>
    %24 = vector.broadcast %13 : vector<128x1xf32> to vector<128x2xf32>
    %25 = arith.mulf %24, %23 : vector<128x2xf32>
    %26 = arith.truncf %16 : vector<128x128xf32> to vector<128x128xbf16>
    %c0_18 = arith.constant 0 : index
    %c0_19 = arith.constant 0 : index
    %c0_20 = arith.constant 0 : index
    %c0_21 = arith.constant 0 : index
    %27 = vector.load %arg6[%c0_18, %c0_19, %c0_20, %c0_21] : memref<1x1x128x2xbf16, #tpu.memory_space<vmem>>, vector<1x1x128x2xbf16>
    %28 = vector.shape_cast %27 : vector<1x1x128x2xbf16> to vector<128x2xbf16>
    %cst_22 = arith.constant dense<0.000000e+00> : vector<128x2xf32>
    %29 = tpu.matmul %26, %28, %cst_22 {dimension_numbers = #tpu.dot_dimension_numbers<[1], [0], [0], [1], [0, 0, 1, 1], [], []>} : vector<128x128xbf16>, vector<128x2xbf16>, vector<128x2xf32> -> vector<128x2xf32>
    %30 = arith.addf %25, %29 : vector<128x2xf32>
    %c0_23 = arith.constant 0 : index
    %c0_24 = arith.constant 0 : index
    %31 = vector.load %arg10[%c0_23, %c0_24] : memref<128x2xf32, #tpu.memory_space<vmem>>, vector<128x2xf32>
    tpu.vector_store %arg10[%c0_23, %c0_24], %30 {strides = array<i32>} : memref<128x2xf32, #tpu.memory_space<vmem>>, vector<128x2xf32>,
    %c0_25 = arith.constant 0 : index
    %c0_26 = arith.constant 0 : index
    %32 = vector.load %arg8[%c0_25, %c0_26] : memref<128x1xf32, #tpu.memory_space<vmem>>, vector<128x1xf32>
    tpu.vector_store %arg8[%c0_25, %c0_26], %11 {strides = array<i32>} : memref<128x1xf32, #tpu.memory_space<vmem>>, vector<128x1xf32>,
    %c1_i32 = arith.constant 1 : i32
    %33 = arith.cmpi eq, %arg3, %c1_i32 : i32
    %34 = arith.extui %33 : i1 to i32
    %c0_i32_27 = arith.constant 0 : i32
    %35 = arith.cmpi ne, %34, %c0_i32_27 : i32
    scf.if %35 {
      %c0_28 = arith.constant 0 : index
      %c0_29 = arith.constant 0 : index
      %36 = vector.load %arg9[%c0_28, %c0_29] : memref<128x1xf32, #tpu.memory_space<vmem>>, vector<128x1xf32>
      %37 = tpu.reciprocal %36 {approx = true} : vector<128x1xf32> -> vector<128x1xf32>
      %c0_30 = arith.constant 0 : index
      %c0_31 = arith.constant 0 : index
      %38 = vector.load %arg10[%c0_30, %c0_31] : memref<128x2xf32, #tpu.memory_space<vmem>>, vector<128x2xf32>
      %39 = vector.broadcast %37 : vector<128x1xf32> to vector<128x2xf32>
      %40 = arith.mulf %38, %39 : vector<128x2xf32>
      %41 = arith.truncf %40 : vector<128x2xf32> to vector<128x2xbf16>
      %42 = vector.shape_cast %41 : vector<128x2xbf16> to vector<1x1x128x2xbf16>
      %c0_32 = arith.constant 0 : index
      %c0_33 = arith.constant 0 : index
      %c0_34 = arith.constant 0 : index
      %c0_35 = arith.constant 0 : index
      %43 = vector.load %arg7[%c0_32, %c0_33, %c0_34, %c0_35] : memref<1x1x128x2xbf16, #tpu.memory_space<vmem>>, vector<1x1x128x2xbf16>
      tpu.vector_store %arg7[%c0_32, %c0_33, %c0_34, %c0_35], %42 {strides = array<i32>} : memref<1x1x128x2xbf16, #tpu.memory_space<vmem>>, vector<1x1x128x2xbf16>,
    } else {
    }
    return
  }
  func.func @transform_0(%arg0: i32, %arg1: i32, %arg2: i32, %arg3: i32) -> (i32, i32, i32, i32) {
    %c0_i32 = arith.constant 0 : i32
    %c0_i32_0 = arith.constant 0 : i32
    return %arg0, %arg1, %arg2, %c0_i32 : i32, i32, i32, i32
  }
  func.func @transform_1(%arg0: i32, %arg1: i32, %arg2: i32, %arg3: i32) -> (i32, i32, i32, i32) {
    %c0_i32 = arith.constant 0 : i32
    %c0_i32_0 = arith.constant 0 : i32
    return %arg0, %arg1, %c0_i32, %arg3 : i32, i32, i32, i32
  }
  func.func @transform_2(%arg0: i32, %arg1: i32, %arg2: i32, %arg3: i32) -> (i32, i32, i32, i32) {
    %c0_i32 = arith.constant 0 : i32
    %c0_i32_0 = arith.constant 0 : i32
    return %arg0, %arg1, %arg3, %c0_i32 : i32, i32, i32, i32
  }
  func.func @transform_3(%arg0: i32, %arg1: i32, %arg2: i32, %arg3: i32) -> (i32, i32, i32, i32) {
    %c0_i32 = arith.constant 0 : i32
    %c0_i32_0 = arith.constant 0 : i32
    return %arg0, %arg1, %arg2, %c0_i32 : i32, i32, i32, i32
  }
}

module attributes {stable_mosaic.version = 11 : i64} {
  func.func @_qkv_proj_kernel(%arg0: i32, %arg1: i32, %arg2: memref<1x128x4xbf16, #tpu.memory_space<vmem>>, %arg3: memref<4x8xbf16, #tpu.memory_space<vmem>>, %arg4: memref<1x8xf32, #tpu.memory_space<vmem>>, %arg5: memref<4x4xbf16, #tpu.memory_space<vmem>>, %arg6: memref<4x1xf32, #tpu.memory_space<vmem>>, %arg7: memref<1x2x128x2xbf16, #tpu.memory_space<vmem>>, %arg8: memref<1x2x2x128xbf16, #tpu.memory_space<vmem>>, %arg9: memref<1x2x128x2xbf16, #tpu.memory_space<vmem>>) attributes {dimension_semantics = [#tpu.dimension_semantics<parallel>, #tpu.dimension_semantics<parallel>], iteration_bounds = array<i64: 2, 2>, scalar_prefetch = 0 : i64, scratch_operands = 0 : i64, tpu.core_type = #tpu.core_type<tc>, window_params = [{transform_indices = @transform_0, window_bounds = array<i64: 1, 128, 4>}, {pipeline_mode = #tpu.pipeline_mode<synchronous>, transform_indices = @transform_1, window_bounds = array<i64: 4, 8>}, {pipeline_mode = #tpu.pipeline_mode<synchronous>, transform_indices = @transform_2, window_bounds = array<i64: 1, 8>}, {pipeline_mode = #tpu.pipeline_mode<synchronous>, transform_indices = @transform_3, window_bounds = array<i64: 4, 4>}, {pipeline_mode = #tpu.pipeline_mode<synchronous>, transform_indices = @transform_4, window_bounds = array<i64: 4, 1>}, {transform_indices = @transform_5, window_bounds = array<i64: 1, 2, 128, 2>}, {transform_indices = @transform_6, window_bounds = array<i64: 1, 2, 2, 128>}, {transform_indices = @transform_7, window_bounds = array<i64: 1, 2, 128, 2>}]} {
    %c0 = arith.constant 0 : index
    %c0_0 = arith.constant 0 : index
    %c0_1 = arith.constant 0 : index
    %0 = vector.load %arg2[%c0, %c0_0, %c0_1] : memref<1x128x4xbf16, #tpu.memory_space<vmem>>, vector<1x128x4xbf16>
    %1 = vector.shape_cast %0 : vector<1x128x4xbf16> to vector<128x4xbf16>
    %c0_2 = arith.constant 0 : index
    %c0_3 = arith.constant 0 : index
    %2 = vector.load %arg3[%c0_2, %c0_3] : memref<4x8xbf16, #tpu.memory_space<vmem>>, vector<4x8xbf16>
    %cst = arith.constant dense<0.000000e+00> : vector<128x8xf32>
    %3 = tpu.matmul %1, %2, %cst {dimension_numbers = #tpu.dot_dimension_numbers<[1], [0], [0], [1], [0, 0, 1, 1], [], []>} : vector<128x4xbf16>, vector<4x8xbf16>, vector<128x8xf32> -> vector<128x8xf32>
    %c0_4 = arith.constant 0 : index
    %c0_5 = arith.constant 0 : index
    %4 = vector.load %arg4[%c0_4, %c0_5] : memref<1x8xf32, #tpu.memory_space<vmem>>, vector<1x8xf32>
    %5 = vector.broadcast %4 : vector<1x8xf32> to vector<128x8xf32>
    %6 = arith.addf %3, %5 : vector<128x8xf32>
    %c0_6 = arith.constant 0 : index
    %c0_7 = arith.constant 0 : index
    %7 = vector.load %arg5[%c0_6, %c0_7] : memref<4x4xbf16, #tpu.memory_space<vmem>>, vector<4x4xbf16>
    %cst_8 = arith.constant dense<0.000000e+00> : vector<4x128xf32>
    %8 = tpu.matmul %7, %1, %cst_8 {dimension_numbers = #tpu.dot_dimension_numbers<[1], [1], [0], [0], [0, 0, 1, 0], [], []>} : vector<4x4xbf16>, vector<128x4xbf16>, vector<4x128xf32> -> vector<4x128xf32>
    %c0_9 = arith.constant 0 : index
    %c0_10 = arith.constant 0 : index
    %9 = vector.load %arg6[%c0_9, %c0_10] : memref<4x1xf32, #tpu.memory_space<vmem>>, vector<4x1xf32>
    %10 = vector.broadcast %9 : vector<4x1xf32> to vector<4x128xf32>
    %11 = arith.addf %8, %10 : vector<4x128xf32>
    %12 = vector.extract_strided_slice %6 {offsets = [0, 0], sizes = [128, 2], strides = [1, 1]} : vector<128x8xf32> to vector<128x2xf32>
    %13 = arith.truncf %12 : vector<128x2xf32> to vector<128x2xbf16>
    %c0_11 = arith.constant 0 : index
    %c0_12 = arith.constant 0 : index
    %c0_13 = arith.constant 0 : index
    %c0_14 = arith.constant 0 : index
    %14 = vector.load %arg7[%c0_11, %c0_12, %c0_13, %c0_14] : memref<1x2x128x2xbf16, #tpu.memory_space<vmem>>, vector<1x1x128x2xbf16>
    %15 = vector.shape_cast %14 : vector<1x1x128x2xbf16> to vector<128x2xbf16>
    %16 = vector.shape_cast %13 : vector<128x2xbf16> to vector<1x1x128x2xbf16>
    tpu.vector_store %arg7[%c0_11, %c0_12, %c0_13, %c0_14], %16 {strides = array<i32>} : memref<1x2x128x2xbf16, #tpu.memory_space<vmem>>, vector<1x1x128x2xbf16>,
    %17 = vector.extract_strided_slice %6 {offsets = [0, 4], sizes = [128, 2], strides = [1, 1]} : vector<128x8xf32> to vector<128x2xf32>
    %18 = arith.truncf %17 : vector<128x2xf32> to vector<128x2xbf16>
    %c0_15 = arith.constant 0 : index
    %c0_16 = arith.constant 0 : index
    %c0_17 = arith.constant 0 : index
    %c0_18 = arith.constant 0 : index
    %19 = vector.load %arg9[%c0_15, %c0_16, %c0_17, %c0_18] : memref<1x2x128x2xbf16, #tpu.memory_space<vmem>>, vector<1x1x128x2xbf16>
    %20 = vector.shape_cast %19 : vector<1x1x128x2xbf16> to vector<128x2xbf16>
    %21 = vector.shape_cast %18 : vector<128x2xbf16> to vector<1x1x128x2xbf16>
    tpu.vector_store %arg9[%c0_15, %c0_16, %c0_17, %c0_18], %21 {strides = array<i32>} : memref<1x2x128x2xbf16, #tpu.memory_space<vmem>>, vector<1x1x128x2xbf16>,
    %22 = vector.extract_strided_slice %11 {offsets = [0, 0], sizes = [2, 128], strides = [1, 1]} : vector<4x128xf32> to vector<2x128xf32>
    %23 = arith.truncf %22 : vector<2x128xf32> to vector<2x128xbf16>
    %c0_19 = arith.constant 0 : index
    %c0_20 = arith.constant 0 : index
    %c0_21 = arith.constant 0 : index
    %c0_22 = arith.constant 0 : index
    %24 = vector.load %arg8[%c0_19, %c0_20, %c0_21, %c0_22] : memref<1x2x2x128xbf16, #tpu.memory_space<vmem>>, vector<1x1x2x128xbf16>
    %25 = vector.shape_cast %24 : vector<1x1x2x128xbf16> to vector<2x128xbf16>
    %26 = vector.shape_cast %23 : vector<2x128xbf16> to vector<1x1x2x128xbf16>
    tpu.vector_store %arg8[%c0_19, %c0_20, %c0_21, %c0_22], %26 {strides = array<i32>} : memref<1x2x2x128xbf16, #tpu.memory_space<vmem>>, vector<1x1x2x128xbf16>,
    %27 = vector.extract_strided_slice %6 {offsets = [0, 2], sizes = [128, 2], strides = [1, 1]} : vector<128x8xf32> to vector<128x2xf32>
    %28 = arith.truncf %27 : vector<128x2xf32> to vector<128x2xbf16>
    %c0_23 = arith.constant 0 : index
    %c1 = arith.constant 1 : index
    %c0_24 = arith.constant 0 : index
    %c0_25 = arith.constant 0 : index
    %29 = vector.load %arg7[%c0_23, %c1, %c0_24, %c0_25] : memref<1x2x128x2xbf16, #tpu.memory_space<vmem>>, vector<1x1x128x2xbf16>
    %30 = vector.shape_cast %29 : vector<1x1x128x2xbf16> to vector<128x2xbf16>
    %31 = vector.shape_cast %28 : vector<128x2xbf16> to vector<1x1x128x2xbf16>
    tpu.vector_store %arg7[%c0_23, %c1, %c0_24, %c0_25], %31 {strides = array<i32>} : memref<1x2x128x2xbf16, #tpu.memory_space<vmem>>, vector<1x1x128x2xbf16>,
    %32 = vector.extract_strided_slice %6 {offsets = [0, 6], sizes = [128, 2], strides = [1, 1]} : vector<128x8xf32> to vector<128x2xf32>
    %33 = arith.truncf %32 : vector<128x2xf32> to vector<128x2xbf16>
    %c0_26 = arith.constant 0 : index
    %c1_27 = arith.constant 1 : index
    %c0_28 = arith.constant 0 : index
    %c0_29 = arith.constant 0 : index
    %34 = vector.load %arg9[%c0_26, %c1_27, %c0_28, %c0_29] : memref<1x2x128x2xbf16, #tpu.memory_space<vmem>>, vector<1x1x128x2xbf16>
    %35 = vector.shape_cast %34 : vector<1x1x128x2xbf16> to vector<128x2xbf16>
    %36 = vector.shape_cast %33 : vector<128x2xbf16> to vector<1x1x128x2xbf16>
    tpu.vector_store %arg9[%c0_26, %c1_27, %c0_28, %c0_29], %36 {strides = array<i32>} : memref<1x2x128x2xbf16, #tpu.memory_space<vmem>>, vector<1x1x128x2xbf16>,
    %37 = vector.extract_strided_slice %11 {offsets = [2, 0], sizes = [2, 128], strides = [1, 1]} : vector<4x128xf32> to vector<2x128xf32>
    %38 = arith.truncf %37 : vector<2x128xf32> to vector<2x128xbf16>
    %c0_30 = arith.constant 0 : index
    %c1_31 = arith.constant 1 : index
    %c0_32 = arith.constant 0 : index
    %c0_33 = arith.constant 0 : index
    %39 = vector.load %arg8[%c0_30, %c1_31, %c0_32, %c0_33] : memref<1x2x2x128xbf16, #tpu.memory_space<vmem>>, vector<1x1x2x128xbf16>
    %40 = vector.shape_cast %39 : vector<1x1x2x128xbf16> to vector<2x128xbf16>
    %41 = vector.shape_cast %38 : vector<2x128xbf16> to vector<1x1x2x128xbf16>
    tpu.vector_store %arg8[%c0_30, %c1_31, %c0_32, %c0_33], %41 {strides = array<i32>} : memref<1x2x2x128xbf16, #tpu.memory_space<vmem>>, vector<1x1x2x128xbf16>,
    return
  }
  func.func @transform_0(%arg0: i32, %arg1: i32) -> (i32, i32, i32) {
    %c0_i32 = arith.constant 0 : i32
    %c0_i32_0 = arith.constant 0 : i32
    return %arg0, %arg1, %c0_i32 : i32, i32, i32
  }
  func.func @transform_1(%arg0: i32, %arg1: i32) -> (i32, i32) {
    %c0_i32 = arith.constant 0 : i32
    %c0_i32_0 = arith.constant 0 : i32
    %c0_i32_1 = arith.constant 0 : i32
    return %c0_i32, %c0_i32_0 : i32, i32
  }
  func.func @transform_2(%arg0: i32, %arg1: i32) -> (i32, i32) {
    %c0_i32 = arith.constant 0 : i32
    %c0_i32_0 = arith.constant 0 : i32
    %c0_i32_1 = arith.constant 0 : i32
    return %c0_i32, %c0_i32_0 : i32, i32
  }
  func.func @transform_3(%arg0: i32, %arg1: i32) -> (i32, i32) {
    %c0_i32 = arith.constant 0 : i32
    %c0_i32_0 = arith.constant 0 : i32
    %c0_i32_1 = arith.constant 0 : i32
    return %c0_i32, %c0_i32_0 : i32, i32
  }
  func.func @transform_4(%arg0: i32, %arg1: i32) -> (i32, i32) {
    %c0_i32 = arith.constant 0 : i32
    %c0_i32_0 = arith.constant 0 : i32
    %c0_i32_1 = arith.constant 0 : i32
    return %c0_i32, %c0_i32_0 : i32, i32
  }
  func.func @transform_5(%arg0: i32, %arg1: i32) -> (i32, i32, i32, i32) {
    %c0_i32 = arith.constant 0 : i32
    %c0_i32_0 = arith.constant 0 : i32
    %c0_i32_1 = arith.constant 0 : i32
    return %arg0, %c0_i32, %arg1, %c0_i32_0 : i32, i32, i32, i32
  }
  func.func @transform_6(%arg0: i32, %arg1: i32) -> (i32, i32, i32, i32) {
    %c0_i32 = arith.constant 0 : i32
    %c0_i32_0 = arith.constant 0 : i32
    %c0_i32_1 = arith.constant 0 : i32
    return %arg0, %c0_i32, %c0_i32_0, %arg1 : i32, i32, i32, i32
  }
  func.func @transform_7(%arg0: i32, %arg1: i32) -> (i32, i32, i32, i32) {
    %c0_i32 = arith.constant 0 : i32
    %c0_i32_0 = arith.constant 0 : i32
    %c0_i32_1 = arith.constant 0 : i32
    return %arg0, %c0_i32, %arg1, %c0_i32_0 : i32, i32, i32, i32
  }
}

module attributes {stable_mosaic.version = 11 : i64} {
  func.func @_out_proj_kernel(%arg0: i32, %arg1: i32, %arg2: memref<1x128x4xf32, #tpu.memory_space<vmem>>, %arg3: memref<1x128x4xbf16, #tpu.memory_space<vmem>>, %arg4: memref<4x4xbf16, #tpu.memory_space<vmem>>, %arg5: memref<1x4xf32, #tpu.memory_space<vmem>>, %arg6: memref<1x128x4xf32, #tpu.memory_space<vmem>>) attributes {dimension_semantics = [#tpu.dimension_semantics<parallel>, #tpu.dimension_semantics<parallel>], iteration_bounds = array<i64: 2, 2>, scalar_prefetch = 0 : i64, scratch_operands = 0 : i64, tpu.core_type = #tpu.core_type<tc>, window_params = [{transform_indices = @transform_0, window_bounds = array<i64: 1, 128, 4>}, {transform_indices = @transform_1, window_bounds = array<i64: 1, 128, 4>}, {pipeline_mode = #tpu.pipeline_mode<synchronous>, transform_indices = @transform_2, window_bounds = array<i64: 4, 4>}, {pipeline_mode = #tpu.pipeline_mode<synchronous>, transform_indices = @transform_3, window_bounds = array<i64: 1, 4>}, {transform_indices = @transform_4, window_bounds = array<i64: 1, 128, 4>}]} {
    %c0 = arith.constant 0 : index
    %c0_0 = arith.constant 0 : index
    %c0_1 = arith.constant 0 : index
    %0 = vector.load %arg2[%c0, %c0_0, %c0_1] : memref<1x128x4xf32, #tpu.memory_space<vmem>>, vector<1x128x4xf32>
    %1 = vector.shape_cast %0 : vector<1x128x4xf32> to vector<128x4xf32>
    %c0_2 = arith.constant 0 : index
    %c0_3 = arith.constant 0 : index
    %2 = vector.load %arg5[%c0_2, %c0_3] : memref<1x4xf32, #tpu.memory_space<vmem>>, vector<1x4xf32>
    %3 = vector.broadcast %2 : vector<1x4xf32> to vector<128x4xf32>
    %4 = arith.addf %1, %3 : vector<128x4xf32>
    %c0_4 = arith.constant 0 : index
    %c0_5 = arith.constant 0 : index
    %c0_6 = arith.constant 0 : index
    %5 = vector.load %arg3[%c0_4, %c0_5, %c0_6] : memref<1x128x4xbf16, #tpu.memory_space<vmem>>, vector<1x128x4xbf16>
    %6 = vector.shape_cast %5 : vector<1x128x4xbf16> to vector<128x4xbf16>
    %c0_7 = arith.constant 0 : index
    %c0_8 = arith.constant 0 : index
    %7 = vector.load %arg4[%c0_7, %c0_8] : memref<4x4xbf16, #tpu.memory_space<vmem>>, vector<4x4xbf16>
    %cst = arith.constant dense<0.000000e+00> : vector<128x4xf32>
    %8 = tpu.matmul %6, %7, %cst {dimension_numbers = #tpu.dot_dimension_numbers<[1], [0], [0], [1], [0, 0, 1, 1], [], []>} : vector<128x4xbf16>, vector<4x4xbf16>, vector<128x4xf32> -> vector<128x4xf32>
    %9 = arith.addf %4, %8 : vector<128x4xf32>
    %c0_9 = arith.constant 0 : index
    %c0_10 = arith.constant 0 : index
    %c0_11 = arith.constant 0 : index
    %10 = vector.load %arg6[%c0_9, %c0_10, %c0_11] : memref<1x128x4xf32, #tpu.memory_space<vmem>>, vector<1x128x4xf32>
    %11 = vector.shape_cast %10 : vector<1x128x4xf32> to vector<128x4xf32>
    %12 = vector.shape_cast %9 : vector<128x4xf32> to vector<1x128x4xf32>
    tpu.vector_store %arg6[%c0_9, %c0_10, %c0_11], %12 {strides = array<i32>} : memref<1x128x4xf32, #tpu.memory_space<vmem>>, vector<1x128x4xf32>,
    return
  }
  func.func @transform_0(%arg0: i32, %arg1: i32) -> (i32, i32, i32) {
    %c0_i32 = arith.constant 0 : i32
    %c0_i32_0 = arith.constant 0 : i32
    return %arg0, %arg1, %c0_i32 : i32, i32, i32
  }
  func.func @transform_1(%arg0: i32, %arg1: i32) -> (i32, i32, i32) {
    %c0_i32 = arith.constant 0 : i32
    %c0_i32_0 = arith.constant 0 : i32
    return %arg0, %arg1, %c0_i32 : i32, i32, i32
  }
  func.func @transform_2(%arg0: i32, %arg1: i32) -> (i32, i32) {
    %c0_i32 = arith.constant 0 : i32
    %c0_i32_0 = arith.constant 0 : i32
    %c0_i32_1 = arith.constant 0 : i32
    return %c0_i32, %c0_i32_0 : i32, i32
  }
  func.func @transform_3(%arg0: i32, %arg1: i32) -> (i32, i32) {
    %c0_i32 = arith.constant 0 : i32
    %c0_i32_0 = arith.constant 0 : i32
    %c0_i32_1 = arith.constant 0 : i32
    return %c0_i32, %c0_i32_0 : i32, i32
  }
  func.func @transform_4(%arg0: i32, %arg1: i32) -> (i32, i32, i32) {
    %c0_i32 = arith.constant 0 : i32
    %c0_i32_0 = arith.constant 0 : i32
    return %arg0, %arg1, %c0_i32 : i32, i32, i32
  }
}

</mosaic_0001>

<llo_original>
// kernel: self_att_2d.3
$region0: #{self_att_2d.3}
  #allocation0 [shape = 'u32[]', space=smem, size = 0x4, offset = 0x4, fixed_abs, tag = 'smem constant byte address 0x4 - core index']
  #allocation1 [shape = 'u32[72,128]{1,0:T(1,128)}', space=vmem, size = 0x9000, scoped, tag = 'internal scratch']
  %s0 = inlined_call_operand.vmem [shape: bf16[2,256,4], index: 0, kind: input, shape index: {}]
  %s1 = inlined_call_operand.vmem [shape: bf16[4,8], index: 1, kind: input, shape index: {}]
  %s2 = inlined_call_operand.vmem [shape: f32[1,8], index: 2, kind: input, shape index: {}]
  %s3 = inlined_call_operand.vmem [shape: bf16[4,4], index: 3, kind: input, shape index: {}]
  %s4 = inlined_call_operand.vmem [shape: f32[4,1], index: 4, kind: input, shape index: {}]
  %s5 = inlined_call_operand.vmem [shape: bf16[2,2,256,2], index: 5, kind: output, shape index: {0}]
  %s6 = inlined_call_operand.vmem [shape: bf16[2,2,2,256], index: 6, kind: output, shape index: {1}]
  %s7 = inlined_call_operand.vmem [shape: bf16[2,2,256,2], index: 7, kind: output, shape index: {2}]
  %8 = xla_tuple %s5, %s6, %s7
  %s9 = sld [smem:[#allocation0]]
  $region173: #{self_att_2d.3} parent=0
    _
  %s11 = ssub.s32 1, %s9
  %s12 = scalar_select 0, %s11, %s9
  $region1: #{self_att_2d.3} parent=0
    #allocation2 [shape = 'u8[131072]{0}', space=vmem, size = 0x20000, scoped, tag = 'output window, operand 0']
    #allocation3 [shape = 'u8[2048]{0}', space=vmem, size = 0x800, scoped, tag = 'output window, operand 1']
    #allocation4 [shape = 'u8[131072]{0}', space=vmem, size = 0x20000, scoped, tag = 'output window, operand 2']
    loop: start=0, step=1, limit=6
    $region2: #{self_att_2d.3} parent=1 // loop_pre_header
      _
    $region3: #{self_att_2d.3} parent=1 // loop_header
      %s14 = sphi 0, %s18
      %p15 = scmp.ge.s32.totalorder %s14, 6
      %s21 = sphi 0, %s33
      %s22 = sphi 0, %s29
      %s23 = sphi 0, %s21
      %s24 = sphi 0, %s22
      %s25 = sphi 0, %s23
      %s26 = sphi 0, %s24
      %s38 = sphi 0, %s40
      %s41 = sphi 0, %s38
      %s42 = sphi 0, %s41
      %s58 = sphi 0, %s42
      %s62 = sphi 0, %s62
      %s64 = sphi 0, %s62
      %s65 = sphi 0, %s64
      %s79 = sphi 0, %s65
      %s83 = sphi 0, %s83
      %s85 = sphi 0, %s83
      %s86 = sphi 0, %s85
      %s100 = sphi 0, %s86
      %s104 = sphi 0, %s104
      %s106 = sphi 0, %s104
      %s107 = sphi 0, %s106
      %s121 = sphi 0, %s107
      %s125 = sphi 0, %s125
      %s127 = sphi 0, %s125
      %s128 = sphi 0, %s127
      %s142 = sphi 0, %s128
      %s150 = sphi 0, %s152
      %s153 = sphi 0, %s150
      %s154 = sphi 0, %s153
      %s170 = sphi 0, %s154
      %s178 = sphi 0, %s180
      %s181 = sphi 0, %s178
      %s182 = sphi 0, %s181
      %s198 = sphi 0, %s182
      %s206 = sphi 0, %s208
      %s209 = sphi 0, %s206
      %s210 = sphi 0, %s209
      %s226 = sphi 0, %s210
    $region4: #{self_att_2d.3} parent=1 // loop_header_branch
      %17 = sbr.rel (%p15) target = $region8
    $region5: #{self_att_2d.3} parent=1 // loop_body
      %s19 = ssub.s32 %s14, 1
      %s20 = ssub.s32 %s14, 2
      %s27 = sadd.s32 1, %s22
      %p28 = scmp.ge.s32.totalorder %s27, 2
      %s29 = scalar_select %p28, 0, %s27
      %s30 = sadd.s32 1, %s21
      %s31 = scalar_select %p28, %s30, %s21
      %p32 = scmp.ge.s32.totalorder %s31, 2
      %s33 = scalar_select %p32, 0, %s31
      %s34 = ssub.s32 %s21, %s33
      %s35 = ssub.s32 %s22, %s29
      %s36 = sor.u32 %s34, %s35
      %p37 = scmp.eq.s32.totalorder %s36, 0
      %s39 = sadd.s32 %s38, 1
      %s40 = scalar_select %p37, %s38, %s39
      %p43 = pneg %p37
      %p44 = scmp.eq.s32.totalorder %s14, 3
      %p45 = por %p43, %p44
      %p46 = scmp.ne.s32.totalorder %s38, %s41
      %p47 = scmp.eq.s32.totalorder %s14, 0
      %p48 = por %p46, %p47
      %p49 = scmp.ne.s32.totalorder %s38, %s41
      %p50 = scmp.eq.s32.totalorder %s19, 3
      %p51 = por %p49, %p50
      %p52 = scmp.ne.s32.totalorder %s41, %s42
      %p53 = scmp.eq.s32.totalorder %s19, 0
      %p54 = por %p52, %p53
      %p55 = scmp.ne.s32.totalorder %s41, %s42
      %p56 = scmp.eq.s32.totalorder %s20, 3
      %p57 = por %p55, %p56
      %p59 = scmp.ne.s32.totalorder %s42, %s58
      %p60 = scmp.eq.s32.totalorder %s20, 0
      %p61 = por %p59, %p60
      %s63 = sadd.s32 %s62, 1
      %p66 = scmp.eq.s32.totalorder %s14, 3
      %p67 = scmp.ne.s32.totalorder %s62, %s64
      %p68 = scmp.eq.s32.totalorder %s14, 0
      %p69 = por %p67, %p68
      %p70 = scmp.ne.s32.totalorder %s62, %s64
      %p71 = scmp.eq.s32.totalorder %s19, 3
      %p72 = por %p70, %p71
      %p73 = scmp.ne.s32.totalorder %s64, %s65
      %p74 = scmp.eq.s32.totalorder %s19, 0
      %p75 = por %p73, %p74
      %p76 = scmp.ne.s32.totalorder %s64, %s65
      %p77 = scmp.eq.s32.totalorder %s20, 3
      %p78 = por %p76, %p77
      %p80 = scmp.ne.s32.totalorder %s65, %s79
      %p81 = scmp.eq.s32.totalorder %s20, 0
      %p82 = por %p80, %p81
      %s84 = sadd.s32 %s83, 1
      %p87 = scmp.eq.s32.totalorder %s14, 3
      %p88 = scmp.ne.s32.totalorder %s83, %s85
      %p89 = scmp.eq.s32.totalorder %s14, 0
      %p90 = por %p88, %p89
      %p91 = scmp.ne.s32.totalorder %s83, %s85
      %p92 = scmp.eq.s32.totalorder %s19, 3
      %p93 = por %p91, %p92
      %p94 = scmp.ne.s32.totalorder %s85, %s86
      %p95 = scmp.eq.s32.totalorder %s19, 0
      %p96 = por %p94, %p95
      %p97 = scmp.ne.s32.totalorder %s85, %s86
      %p98 = scmp.eq.s32.totalorder %s20, 3
      %p99 = por %p97, %p98
      %p101 = scmp.ne.s32.totalorder %s86, %s100
      %p102 = scmp.eq.s32.totalorder %s20, 0
      %p103 = por %p101, %p102
      %s105 = sadd.s32 %s104, 1
      %p108 = scmp.eq.s32.totalorder %s14, 3
      %p109 = scmp.ne.s32.totalorder %s104, %s106
      %p110 = scmp.eq.s32.totalorder %s14, 0
      %p111 = por %p109, %p110
      %p112 = scmp.ne.s32.totalorder %s104, %s106
      %p113 = scmp.eq.s32.totalorder %s19, 3
      %p114 = por %p112, %p113
      %p115 = scmp.ne.s32.totalorder %s106, %s107
      %p116 = scmp.eq.s32.totalorder %s19, 0
      %p117 = por %p115, %p116
      %p118 = scmp.ne.s32.totalorder %s106, %s107
      %p119 = scmp.eq.s32.totalorder %s20, 3
      %p120 = por %p118, %p119
      %p122 = scmp.ne.s32.totalorder %s107, %s121
      %p123 = scmp.eq.s32.totalorder %s20, 0
      %p124 = por %p122, %p123
      %s126 = sadd.s32 %s125, 1
      %p129 = scmp.eq.s32.totalorder %s14, 3
      %p130 = scmp.ne.s32.totalorder %s125, %s127
      %p131 = scmp.eq.s32.totalorder %s14, 0
      %p132 = por %p130, %p131
      %p133 = scmp.ne.s32.totalorder %s125, %s127
      %p134 = scmp.eq.s32.totalorder %s19, 3
      %p135 = por %p133, %p134
      %p136 = scmp.ne.s32.totalorder %s127, %s128
      %p137 = scmp.eq.s32.totalorder %s19, 0
      %p138 = por %p136, %p137
      %p139 = scmp.ne.s32.totalorder %s127, %s128
      %p140 = scmp.eq.s32.totalorder %s20, 3
      %p141 = por %p139, %p140
      %p143 = scmp.ne.s32.totalorder %s128, %s142
      %p144 = scmp.eq.s32.totalorder %s20, 0
      %p145 = por %p143, %p144
      %s146 = ssub.s32 %s21, %s33
      %s147 = ssub.s32 %s22, %s29
      %s148 = sor.u32 %s146, %s147
      %p149 = scmp.eq.s32.totalorder %s148, 0
      %s151 = sadd.s32 %s150, 1
      %s152 = scalar_select %p149, %s150, %s151
      %p155 = pneg %p149
      %p156 = scmp.eq.s32.totalorder %s14, 3
      %p157 = por %p155, %p156
      %p158 = scmp.ne.s32.totalorder %s150, %s153
      %p159 = scmp.eq.s32.totalorder %s14, 0
      %p160 = por %p158, %p159
      %p161 = scmp.ne.s32.totalorder %s150, %s153
      %p162 = scmp.eq.s32.totalorder %s19, 3
      %p163 = por %p161, %p162
      %p164 = scmp.ne.s32.totalorder %s153, %s154
      %p165 = scmp.eq.s32.totalorder %s19, 0
      %p166 = por %p164, %p165
      %p167 = scmp.ne.s32.totalorder %s153, %s154
      %p168 = scmp.eq.s32.totalorder %s20, 3
      %p169 = por %p167, %p168
      %p171 = scmp.ne.s32.totalorder %s154, %s170
      %p172 = scmp.eq.s32.totalorder %s20, 0
      %p173 = por %p171, %p172
      %s174 = ssub.s32 %s21, %s33
      %s175 = ssub.s32 %s22, %s29
      %s176 = sor.u32 %s174, %s175
      %p177 = scmp.eq.s32.totalorder %s176, 0
      %s179 = sadd.s32 %s178, 1
      %s180 = scalar_select %p177, %s178, %s179
      %p183 = pneg %p177
      %p184 = scmp.eq.s32.totalorder %s14, 3
      %p185 = por %p183, %p184
      %p186 = scmp.ne.s32.totalorder %s178, %s181
      %p187 = scmp.eq.s32.totalorder %s14, 0
      %p188 = por %p186, %p187
      %p189 = scmp.ne.s32.totalorder %s178, %s181
      %p190 = scmp.eq.s32.totalorder %s19, 3
      %p191 = por %p189, %p190
      %p192 = scmp.ne.s32.totalorder %s181, %s182
      %p193 = scmp.eq.s32.totalorder %s19, 0
      %p194 = por %p192, %p193
      %p195 = scmp.ne.s32.totalorder %s181, %s182
      %p196 = scmp.eq.s32.totalorder %s20, 3
      %p197 = por %p195, %p196
      %p199 = scmp.ne.s32.totalorder %s182, %s198
      %p200 = scmp.eq.s32.totalorder %s20, 0
      %p201 = por %p199, %p200
      %s202 = ssub.s32 %s21, %s33
      %s203 = ssub.s32 %s22, %s29
      %s204 = sor.u32 %s202, %s203
      %p205 = scmp.eq.s32.totalorder %s204, 0
      %s207 = sadd.s32 %s206, 1
      %s208 = scalar_select %p205, %s206, %s207
      %p211 = pneg %p205
      %p212 = scmp.eq.s32.totalorder %s14, 3
      %p213 = por %p211, %p212
      %p214 = scmp.ne.s32.totalorder %s206, %s209
      %p215 = scmp.eq.s32.totalorder %s14, 0
      %p216 = por %p214, %p215
      %p217 = scmp.ne.s32.totalorder %s206, %s209
      %p218 = scmp.eq.s32.totalorder %s19, 3
      %p219 = por %p217, %p218
      %p220 = scmp.ne.s32.totalorder %s209, %s210
      %p221 = scmp.eq.s32.totalorder %s19, 0
      %p222 = por %p220, %p221
      %p223 = scmp.ne.s32.totalorder %s209, %s210
      %p224 = scmp.eq.s32.totalorder %s20, 3
      %p225 = por %p223, %p224
      %p227 = scmp.ne.s32.totalorder %s210, %s226
      %p228 = scmp.eq.s32.totalorder %s20, 0
      %p229 = por %p227, %p228
      %p230 = scmp.le.s32.totalorder 1, %s14
      %p231 = scmp.lt.s32.totalorder %s14, 5
      %p232 = pnand %p230, %p231
      %p233 = pneg %p232
      // Predicated region
      $region9: #{self_att_2d.3} parent=5 // pred_check
        _
      $region10: #{self_att_2d.3} parent=5 // pred_check_branch
        %235 = sbr.rel (%p232) target = $region12
      $region11: #{self_att_2d.3} parent=5 // pred_region
        %s236 = ssub.s32 %s14, 1
        // Predicated region
        $region13: #{self_att_2d.3} parent=11 // pred_check
          %p237 = pneg %p75
        $region14: #{self_att_2d.3} parent=11 // pred_check_branch
          %239 = sbr.rel (%p237) target = $region16
        $region15: #{self_att_2d.3} parent=11 // pred_region
          _
        $region16: #{self_att_2d.3} parent=11 // pred_fallthru
          _
        // Predicated region
        $region17: #{self_att_2d.3} parent=11 // pred_check
          %p240 = pneg %p96
        $region18: #{self_att_2d.3} parent=11 // pred_check_branch
          %242 = sbr.rel (%p240) target = $region20
        $region19: #{self_att_2d.3} parent=11 // pred_region
          _
        $region20: #{self_att_2d.3} parent=11 // pred_fallthru
          _
        // Predicated region
        $region21: #{self_att_2d.3} parent=11 // pred_check
          %p243 = pneg %p117
        $region22: #{self_att_2d.3} parent=11 // pred_check_branch
          %245 = sbr.rel (%p243) target = $region24
        $region23: #{self_att_2d.3} parent=11 // pred_region
          _
        $region24: #{self_att_2d.3} parent=11 // pred_fallthru
          _
        // Predicated region
        $region25: #{self_att_2d.3} parent=11 // pred_check
          %p246 = pneg %p138
        $region26: #{self_att_2d.3} parent=11 // pred_check_branch
          %248 = sbr.rel (%p246) target = $region28
        $region27: #{self_att_2d.3} parent=11 // pred_region
          _
        $region28: #{self_att_2d.3} parent=11 // pred_fallthru
          _
      $region12: #{self_att_2d.3} parent=5 // pred_fallthru
        _
      %p249 = scmp.lt.s32.totalorder %s14, 4
      // Predicated region
      $region29: #{self_att_2d.3} parent=5 // pred_check
        %p250 = pneg %p249
      $region30: #{self_att_2d.3} parent=5 // pred_check_branch
        %252 = sbr.rel (%p250) target = $region32
      $region31: #{self_att_2d.3} parent=5 // pred_region
        // Predicated region
        $region33: #{self_att_2d.3} parent=31 // pred_check
          %p253 = pneg %p48
        $region34: #{self_att_2d.3} parent=31 // pred_check_branch
          %255 = sbr.rel (%p253) target = $region36
        $region35: #{self_att_2d.3} parent=31 // pred_region
          %s256 = smul.u32 16, %s22
          %p257 = scmp.lt.s32.totalorder %s21, 1
          %s258 = scalar_select %p257, %s21, 1
          %p259 = scmp.lt.s32.totalorder %s256, 31
          %s260 = scalar_select %p259, %s256, 31
          %s261 = smul.addr %s258, 32
          %s262 = sadd.s32 %s260, %s261
          %s263 = smul.addr %s262, 4
          %s264 = scalar_lea.vmem %s0, %s263
          %s265 = smul.u32 16, %s22
        $region36: #{self_att_2d.3} parent=31 // pred_fallthru
          _
      $region32: #{self_att_2d.3} parent=5 // pred_fallthru
        _
      %p266 = scmp.le.s32.totalorder 1, %s14
      %p267 = scmp.lt.s32.totalorder %s14, 5
      %p268 = pnand %p266, %p267
      %p269 = pneg %p268
      // Predicated region
      $region37: #{self_att_2d.3} parent=5 // pred_check
        _
      $region38: #{self_att_2d.3} parent=5 // pred_check_branch
        %271 = sbr.rel (%p268) target = $region40
      $region39: #{self_att_2d.3} parent=5 // pred_region
        %s272 = ssub.s32 %s14, 1
        %s273 = smul.u32 16, %s24
        %p274 = scmp.lt.s32.totalorder %s23, 1
        %s275 = scalar_select %p274, %s23, 1
        %p276 = scmp.lt.s32.totalorder %s273, 31
        %s277 = scalar_select %p276, %s273, 31
        %s278 = smul.addr %s275, 32
        %s279 = sadd.s32 %s277, %s278
        %s280 = smul.addr %s279, 4
        %s281 = scalar_lea.vmem %s0, %s280
        %p282 = pneg %p54
        %p283 = pneg %p51
        %p284 = pneg %p75
        %p285 = pneg %p72
        %p286 = pneg %p96
        %p287 = pneg %p93
        %p288 = pneg %p117
        %p289 = pneg %p114
        %p290 = pneg %p138
        %p291 = pneg %p135
        %p292 = pneg %p166
        %p293 = pneg %p163
        %s294 = sand.u32 %s153, 1
        %s295 = sand.u32 %s153, 1
        %s296 = smul.addr %s295, 128
        %s297 = scalar_lea.vmem [#allocation2], %s296
        %p298 = pneg %p194
        %p299 = pneg %p191
        %s300 = sand.u32 %s181, 1
        %s301 = sand.u32 %s181, 1
        %s302 = smul.addr %s301, 2
        %s303 = scalar_lea.vmem [#allocation3], %s302
        %p304 = pneg %p222
        %p305 = pneg %p219
        %s306 = sand.u32 %s209, 1
        %s307 = sand.u32 %s209, 1
        %s308 = smul.addr %s307, 128
        %s309 = scalar_lea.vmem [#allocation4], %s308
        %s310 = smul.u32 16, %s24
        %p311 = scmp.lt.s32.totalorder %s23, 1
        %s312 = scalar_select %p311, %s23, 1
        %p313 = scmp.lt.s32.totalorder %s310, 31
        %s314 = scalar_select %p313, %s310, 31
        %s315 = smul.addr %s312, 32
        %s316 = sadd.s32 %s314, %s315
        %s317 = smul.addr %s316, 4
        %s318 = scalar_lea.vmem %s0, %s317
        %s319 = smul.u32 16, %s24
        %s320 = smul.u32 16, %s24
        %s321 = smul.u32 16, %s24
        %v323 = vld [vmem:[%s318] sm:$0xf]
        %v324 = vld [vmem:[%s318 + $0x4] sm:$0xf]
        %v325 = vld [vmem:[%s318 + $0x8] sm:$0xf]
        %v326 = vld [vmem:[%s318 + $0xc] sm:$0xf]
        %v327 = vld [vmem:[%s318 + $0x10] sm:$0xf]
        %v328 = vld [vmem:[%s318 + $0x14] sm:$0xf]
        %v329 = vld [vmem:[%s318 + $0x18] sm:$0xf]
        %v330 = vld [vmem:[%s318 + $0x1c] sm:$0xf]
        %v331 = vld [vmem:[%s318 + $0x20] sm:$0xf]
        %v332 = vld [vmem:[%s318 + $0x24] sm:$0xf]
        %v333 = vld [vmem:[%s318 + $0x28] sm:$0xf]
        %v334 = vld [vmem:[%s318 + $0x2c] sm:$0xf]
        %v335 = vld [vmem:[%s318 + $0x30] sm:$0xf]
        %v336 = vld [vmem:[%s318 + $0x34] sm:$0xf]
        %v337 = vld [vmem:[%s318 + $0x38] sm:$0xf]
        %v338 = vld [vmem:[%s318 + $0x3c] sm:$0xf]
        %v339 = vld [vmem:[%s1] sm:$0x3]
        %v340 = vld [vmem:[%s2] sm:$0x1]
        %v342 = vperm.slane %v340, 0
        %v360 = vunpack.c.l.b16 %v323
        %v361 = vunpack.c.l.b16 %v324
        %v362 = vunpack.c.l.b16 %v325
        %v363 = vunpack.c.l.b16 %v326
        %v364 = vunpack.c.l.b16 %v327
        %v365 = vunpack.c.l.b16 %v328
        %v366 = vunpack.c.l.b16 %v329
        %v367 = vunpack.c.l.b16 %v330
        %v368 = vunpack.c.l.b16 %v331
        %v369 = vunpack.c.l.b16 %v332
        %v370 = vunpack.c.l.b16 %v333
        %v371 = vunpack.c.l.b16 %v334
        %v372 = vunpack.c.l.b16 %v335
        %v373 = vunpack.c.l.b16 %v336
        %v374 = vunpack.c.l.b16 %v337
        %v375 = vunpack.c.l.b16 %v338
        %v376 = vpack.c.b16 %v361, %v360
        %v377 = vpack.c.b16 %v363, %v362
        %v378 = vpack.c.b16 %v365, %v364
        %v379 = vpack.c.b16 %v367, %v366
        %v380 = vpack.c.b16 %v369, %v368
        %v381 = vpack.c.b16 %v371, %v370
        %v382 = vpack.c.b16 %v373, %v372
        %v383 = vpack.c.b16 %v375, %v374
        %vm384 = vcmask 31744
        %v386 = vsel %vm384, %v376, 0
        %v389 = vsel %vm384, %v377, 0
        %v392 = vsel %vm384, %v378, 0
        %v395 = vsel %vm384, %v379, 0
        %v398 = vsel %vm384, %v380, 0
        %v401 = vsel %vm384, %v381, 0
        %v404 = vsel %vm384, %v382, 0
        %v407 = vsel %vm384, %v383, 0
        %vm409 = vcmask 1041408
        %v411 = vsel %vm409, %v339, 0
        %413 = vmatpush.bf16.msra.mxu0 0
        %414 = vmatpush.bf16.msra.mxu0 0
        %415 = vmatpush.bf16.msra.mxu0 0
        %416 = vmatpush.bf16.msra.mxu0 0
        %417 = vmatpush.bf16.msra.mxu0 0
        %418 = vmatpush.bf16.msra.mxu0 0
        %419 = vmatpush.bf16.msra.mxu0 0
        %420 = vmatpush.bf16.msra.mxu0 %v411
        %421 = vmatmul.bf16.gmra.mxu0 %v386
        %v422 = vpop.f32.mrf.mxu0
        %v423 = vadd.f32 %v342, %v422
        %v424 = vpop.f32.mrf.mxu0
        %v425 = vadd.f32 %v342, %v424
        %426 = vmatmul.bf16.gmra.mxu0 %v389
        %v427 = vpop.f32.mrf.mxu0
        %v428 = vadd.f32 %v342, %v427
        %v429 = vpop.f32.mrf.mxu0
        %v430 = vadd.f32 %v342, %v429
        %431 = vmatmul.bf16.gmra.mxu0 %v392
        %v432 = vpop.f32.mrf.mxu0
        %v433 = vadd.f32 %v342, %v432
        %v434 = vpop.f32.mrf.mxu0
        %v435 = vadd.f32 %v342, %v434
        %436 = vmatmul.bf16.gmra.mxu0 %v395
        %v437 = vpop.f32.mrf.mxu0
        %v438 = vadd.f32 %v342, %v437
        %v439 = vpop.f32.mrf.mxu0
        %v440 = vadd.f32 %v342, %v439
        %441 = vmatmul.bf16.gmra.mxu0 %v398
        %v442 = vpop.f32.mrf.mxu0
        %v443 = vadd.f32 %v342, %v442
        %v444 = vpop.f32.mrf.mxu0
        %v445 = vadd.f32 %v342, %v444
        %446 = vmatmul.bf16.gmra.mxu0 %v401
        %v447 = vpop.f32.mrf.mxu0
        %v448 = vadd.f32 %v342, %v447
        %v449 = vpop.f32.mrf.mxu0
        %v450 = vadd.f32 %v342, %v449
        %451 = vmatmul.bf16.gmra.mxu0 %v404
        %v452 = vpop.f32.mrf.mxu0
        %v453 = vadd.f32 %v342, %v452
        %v454 = vpop.f32.mrf.mxu0
        %v455 = vadd.f32 %v342, %v454
        %456 = vmatmul.bf16.gmra.mxu0 %v407
        %v457 = vpop.f32.mrf.mxu0
        %v458 = vadd.f32 %v342, %v457
        %v459 = vpop.f32.mrf.mxu0
        %v460 = vadd.f32 %v342, %v459
        %461 = vdwg.mxu0
        %v462 = vld [vmem:[%s3] sm:$0x3]
        %v463 = vld [vmem:[%s4] sm:$0xf]
        %465 = vset.pattern.permute.xlu0 0
        %466 = vperm.xlu0 %465, %v463
        %v467 = vpop.permute.xlu0 %466
        %v470 = vsel %vm384, %v462, 0
        %472 = vmatpush.bf16.xpose.msra.mxu0 %v407
        %473 = vmatpush.bf16.xpose.msra.mxu0 %v404
        %474 = vmatpush.bf16.xpose.msra.mxu0 %v401
        %475 = vmatpush.bf16.xpose.msra.mxu0 %v398
        %476 = vmatpush.bf16.xpose.msra.mxu0 %v395
        %477 = vmatpush.bf16.xpose.msra.mxu0 %v392
        %478 = vmatpush.bf16.xpose.msra.mxu0 %v389
        %479 = vmatpush.bf16.xpose.msra.mxu0 %v386
        %480 = vmatmul.bf16.gmra.mxu0 %v470
        %v481 = vpop.f32.mrf.mxu0
        %v482 = vadd.f32 %v467, %v481
        %v483 = vpop.f32.mrf.mxu0
        %484 = vdwg.mxu0
        %v485 = vpack.c.bf16 %v423, %v423
        %v486 = vpack.c.bf16 %v425, %v425
        %v487 = vpack.c.bf16 %v428, %v428
        %v488 = vpack.c.bf16 %v430, %v430
        %v489 = vpack.c.bf16 %v433, %v433
        %v490 = vpack.c.bf16 %v435, %v435
        %v491 = vpack.c.bf16 %v438, %v438
        %v492 = vpack.c.bf16 %v440, %v440
        %v493 = vpack.c.bf16 %v443, %v443
        %v494 = vpack.c.bf16 %v445, %v445
        %v495 = vpack.c.bf16 %v448, %v448
        %v496 = vpack.c.bf16 %v450, %v450
        %v497 = vpack.c.bf16 %v453, %v453
        %v498 = vpack.c.bf16 %v455, %v455
        %v499 = vpack.c.bf16 %v458, %v458
        %v500 = vpack.c.bf16 %v460, %v460
        %vm501 = vcmask 11264
        %502 = vst.msk [vmem:[%s297] sm:$0xf] %vm501, %v485
        %503 = vst.msk [vmem:[%s297 + $0x4] sm:$0xf] %vm501, %v486
        %504 = vst.msk [vmem:[%s297 + $0x8] sm:$0xf] %vm501, %v487
        %505 = vst.msk [vmem:[%s297 + $0xc] sm:$0xf] %vm501, %v488
        %506 = vst.msk [vmem:[%s297 + $0x10] sm:$0xf] %vm501, %v489
        %507 = vst.msk [vmem:[%s297 + $0x14] sm:$0xf] %vm501, %v490
        %508 = vst.msk [vmem:[%s297 + $0x18] sm:$0xf] %vm501, %v491
        %509 = vst.msk [vmem:[%s297 + $0x1c] sm:$0xf] %vm501, %v492
        %510 = vst.msk [vmem:[%s297 + $0x20] sm:$0xf] %vm501, %v493
        %511 = vst.msk [vmem:[%s297 + $0x24] sm:$0xf] %vm501, %v494
        %512 = vst.msk [vmem:[%s297 + $0x28] sm:$0xf] %vm501, %v495
        %513 = vst.msk [vmem:[%s297 + $0x2c] sm:$0xf] %vm501, %v496
        %514 = vst.msk [vmem:[%s297 + $0x30] sm:$0xf] %vm501, %v497
        %515 = vst.msk [vmem:[%s297 + $0x34] sm:$0xf] %vm501, %v498
        %516 = vst.msk [vmem:[%s297 + $0x38] sm:$0xf] %vm501, %v499
        %517 = vst.msk [vmem:[%s297 + $0x3c] sm:$0xf] %vm501, %v500
        %534 = vrot.lane.b32.xlu0 %v485, 124
        %v535 = vpop.permute.xlu0 %534
        %536 = vrot.lane.b32.xlu0 %v486, 124
        %v537 = vpop.permute.xlu0 %536
        %538 = vrot.lane.b32.xlu0 %v487, 124
        %v539 = vpop.permute.xlu0 %538
        %540 = vrot.lane.b32.xlu0 %v488, 124
        %v541 = vpop.permute.xlu0 %540
        %542 = vrot.lane.b32.xlu0 %v489, 124
        %v543 = vpop.permute.xlu0 %542
        %544 = vrot.lane.b32.xlu0 %v490, 124
        %v545 = vpop.permute.xlu0 %544
        %546 = vrot.lane.b32.xlu0 %v491, 124
        %v547 = vpop.permute.xlu0 %546
        %548 = vrot.lane.b32.xlu0 %v492, 124
        %v549 = vpop.permute.xlu0 %548
        %550 = vrot.lane.b32.xlu0 %v493, 124
        %v551 = vpop.permute.xlu0 %550
        %552 = vrot.lane.b32.xlu0 %v494, 124
        %v553 = vpop.permute.xlu0 %552
        %554 = vrot.lane.b32.xlu0 %v495, 124
        %v555 = vpop.permute.xlu0 %554
        %556 = vrot.lane.b32.xlu0 %v496, 124
        %v557 = vpop.permute.xlu0 %556
        %558 = vrot.lane.b32.xlu0 %v497, 124
        %v559 = vpop.permute.xlu0 %558
        %560 = vrot.lane.b32.xlu0 %v498, 124
        %v561 = vpop.permute.xlu0 %560
        %562 = vrot.lane.b32.xlu0 %v499, 124
        %v563 = vpop.permute.xlu0 %562
        %564 = vrot.lane.b32.xlu0 %v500, 124
        %v565 = vpop.permute.xlu0 %564
        %582 = vst.msk [vmem:[%s309] sm:$0xf] %vm501, %v535
        %583 = vst.msk [vmem:[%s309 + $0x4] sm:$0xf] %vm501, %v537
        %584 = vst.msk [vmem:[%s309 + $0x8] sm:$0xf] %vm501, %v539
        %585 = vst.msk [vmem:[%s309 + $0xc] sm:$0xf] %vm501, %v541
        %586 = vst.msk [vmem:[%s309 + $0x10] sm:$0xf] %vm501, %v543
        %587 = vst.msk [vmem:[%s309 + $0x14] sm:$0xf] %vm501, %v545
        %588 = vst.msk [vmem:[%s309 + $0x18] sm:$0xf] %vm501, %v547
        %589 = vst.msk [vmem:[%s309 + $0x1c] sm:$0xf] %vm501, %v549
        %590 = vst.msk [vmem:[%s309 + $0x20] sm:$0xf] %vm501, %v551
        %591 = vst.msk [vmem:[%s309 + $0x24] sm:$0xf] %vm501, %v553
        %592 = vst.msk [vmem:[%s309 + $0x28] sm:$0xf] %vm501, %v555
        %593 = vst.msk [vmem:[%s309 + $0x2c] sm:$0xf] %vm501, %v557
        %594 = vst.msk [vmem:[%s309 + $0x30] sm:$0xf] %vm501, %v559
        %595 = vst.msk [vmem:[%s309 + $0x34] sm:$0xf] %vm501, %v561
        %596 = vst.msk [vmem:[%s309 + $0x38] sm:$0xf] %vm501, %v563
        %597 = vst.msk [vmem:[%s309 + $0x3c] sm:$0xf] %vm501, %v565
        %v598 = vpack.c.bf16 %v482, %v482
        %599 = vst [vmem:[%s303] sm:$0x1] %v598
        %600 = vrot.lane.b32.xlu0 %v485, 126
        %v601 = vpop.permute.xlu0 %600
        %602 = vrot.lane.b32.xlu0 %v486, 126
        %v603 = vpop.permute.xlu0 %602
        %604 = vrot.lane.b32.xlu0 %v487, 126
        %v605 = vpop.permute.xlu0 %604
        %606 = vrot.lane.b32.xlu0 %v488, 126
        %v607 = vpop.permute.xlu0 %606
        %608 = vrot.lane.b32.xlu0 %v489, 126
        %v609 = vpop.permute.xlu0 %608
        %610 = vrot.lane.b32.xlu0 %v490, 126
        %v611 = vpop.permute.xlu0 %610
        %612 = vrot.lane.b32.xlu0 %v491, 126
        %v613 = vpop.permute.xlu0 %612
        %614 = vrot.lane.b32.xlu0 %v492, 126
        %v615 = vpop.permute.xlu0 %614
        %616 = vrot.lane.b32.xlu0 %v493, 126
        %v617 = vpop.permute.xlu0 %616
        %618 = vrot.lane.b32.xlu0 %v494, 126
        %v619 = vpop.permute.xlu0 %618
        %620 = vrot.lane.b32.xlu0 %v495, 126
        %v621 = vpop.permute.xlu0 %620
        %622 = vrot.lane.b32.xlu0 %v496, 126
        %v623 = vpop.permute.xlu0 %622
        %624 = vrot.lane.b32.xlu0 %v497, 126
        %v625 = vpop.permute.xlu0 %624
        %626 = vrot.lane.b32.xlu0 %v498, 126
        %v627 = vpop.permute.xlu0 %626
        %628 = vrot.lane.b32.xlu0 %v499, 126
        %v629 = vpop.permute.xlu0 %628
        %630 = vrot.lane.b32.xlu0 %v500, 126
        %v631 = vpop.permute.xlu0 %630
        %s648 = scalar_lea.vmem %s297, 64 [#allocation2]
        %649 = vst.msk [vmem:[%s648] sm:$0xf] %vm501, %v601
        %650 = vst.msk [vmem:[%s648 + $0x4] sm:$0xf] %vm501, %v603
        %651 = vst.msk [vmem:[%s648 + $0x8] sm:$0xf] %vm501, %v605
        %652 = vst.msk [vmem:[%s648 + $0xc] sm:$0xf] %vm501, %v607
        %653 = vst.msk [vmem:[%s648 + $0x10] sm:$0xf] %vm501, %v609
        %654 = vst.msk [vmem:[%s648 + $0x14] sm:$0xf] %vm501, %v611
        %655 = vst.msk [vmem:[%s648 + $0x18] sm:$0xf] %vm501, %v613
        %656 = vst.msk [vmem:[%s648 + $0x1c] sm:$0xf] %vm501, %v615
        %657 = vst.msk [vmem:[%s648 + $0x20] sm:$0xf] %vm501, %v617
        %658 = vst.msk [vmem:[%s648 + $0x24] sm:$0xf] %vm501, %v619
        %659 = vst.msk [vmem:[%s648 + $0x28] sm:$0xf] %vm501, %v621
        %660 = vst.msk [vmem:[%s648 + $0x2c] sm:$0xf] %vm501, %v623
        %661 = vst.msk [vmem:[%s648 + $0x30] sm:$0xf] %vm501, %v625
        %662 = vst.msk [vmem:[%s648 + $0x34] sm:$0xf] %vm501, %v627
        %663 = vst.msk [vmem:[%s648 + $0x38] sm:$0xf] %vm501, %v629
        %664 = vst.msk [vmem:[%s648 + $0x3c] sm:$0xf] %vm501, %v631
        %665 = vrot.lane.b32.xlu0 %v485, 122
        %v666 = vpop.permute.xlu0 %665
        %667 = vrot.lane.b32.xlu0 %v486, 122
        %v668 = vpop.permute.xlu0 %667
        %669 = vrot.lane.b32.xlu0 %v487, 122
        %v670 = vpop.permute.xlu0 %669
        %671 = vrot.lane.b32.xlu0 %v488, 122
        %v672 = vpop.permute.xlu0 %671
        %673 = vrot.lane.b32.xlu0 %v489, 122
        %v674 = vpop.permute.xlu0 %673
        %675 = vrot.lane.b32.xlu0 %v490, 122
        %v676 = vpop.permute.xlu0 %675
        %677 = vrot.lane.b32.xlu0 %v491, 122
        %v678 = vpop.permute.xlu0 %677
        %679 = vrot.lane.b32.xlu0 %v492, 122
        %v680 = vpop.permute.xlu0 %679
        %681 = vrot.lane.b32.xlu0 %v493, 122
        %v682 = vpop.permute.xlu0 %681
        %683 = vrot.lane.b32.xlu0 %v494, 122
        %v684 = vpop.permute.xlu0 %683
        %685 = vrot.lane.b32.xlu0 %v495, 122
        %v686 = vpop.permute.xlu0 %685
        %687 = vrot.lane.b32.xlu0 %v496, 122
        %v688 = vpop.permute.xlu0 %687
        %689 = vrot.lane.b32.xlu0 %v497, 122
        %v690 = vpop.permute.xlu0 %689
        %691 = vrot.lane.b32.xlu0 %v498, 122
        %v692 = vpop.permute.xlu0 %691
        %693 = vrot.lane.b32.xlu0 %v499, 122
        %v694 = vpop.permute.xlu0 %693
        %695 = vrot.lane.b32.xlu0 %v500, 122
        %v696 = vpop.permute.xlu0 %695
        %s713 = scalar_lea.vmem %s309, 64 [#allocation4]
        %714 = vst.msk [vmem:[%s713] sm:$0xf] %vm501, %v666
        %715 = vst.msk [vmem:[%s713 + $0x4] sm:$0xf] %vm501, %v668
        %716 = vst.msk [vmem:[%s713 + $0x8] sm:$0xf] %vm501, %v670
        %717 = vst.msk [vmem:[%s713 + $0xc] sm:$0xf] %vm501, %v672
        %718 = vst.msk [vmem:[%s713 + $0x10] sm:$0xf] %vm501, %v674
        %719 = vst.msk [vmem:[%s713 + $0x14] sm:$0xf] %vm501, %v676
        %720 = vst.msk [vmem:[%s713 + $0x18] sm:$0xf] %vm501, %v678
        %721 = vst.msk [vmem:[%s713 + $0x1c] sm:$0xf] %vm501, %v680
        %722 = vst.msk [vmem:[%s713 + $0x20] sm:$0xf] %vm501, %v682
        %723 = vst.msk [vmem:[%s713 + $0x24] sm:$0xf] %vm501, %v684
        %724 = vst.msk [vmem:[%s713 + $0x28] sm:$0xf] %vm501, %v686
        %725 = vst.msk [vmem:[%s713 + $0x2c] sm:$0xf] %vm501, %v688
        %726 = vst.msk [vmem:[%s713 + $0x30] sm:$0xf] %vm501, %v690
        %727 = vst.msk [vmem:[%s713 + $0x34] sm:$0xf] %vm501, %v692
        %728 = vst.msk [vmem:[%s713 + $0x38] sm:$0xf] %vm501, %v694
        %729 = vst.msk [vmem:[%s713 + $0x3c] sm:$0xf] %vm501, %v696
        %731 = vst [vmem:[#allocation1] sm:$0xff] %v598
        %s732 = scalar_lea.vmem [#allocation1], 1
        %v733 = vld [vmem:[%s732] ss:$4 sm:$0xff]
        %s735 = scalar_lea.vmem %s303, 1 [#allocation3]
        %736 = vst [vmem:[%s735] sm:$0x1] %v733
        %s737 = sand.u32 %s153, 1
        %s738 = sand.u32 %s153, 1
        %s739 = smul.addr %s738, 128
        %s740 = scalar_lea.vmem [#allocation2], %s739
        %s741 = sand.u32 %s181, 1
        %s742 = sand.u32 %s181, 1
        %s743 = smul.addr %s742, 2
        %s744 = scalar_lea.vmem [#allocation3], %s743
        %s745 = sand.u32 %s209, 1
        %s746 = sand.u32 %s209, 1
        %s747 = smul.addr %s746, 128
        %s748 = scalar_lea.vmem [#allocation4], %s747
        // Predicated region
        $region41: #{self_att_2d.3} parent=39 // pred_check
          %p749 = pneg %p163
        $region42: #{self_att_2d.3} parent=39 // pred_check_branch
          %751 = sbr.rel (%p749) target = $region44
        $region43: #{self_att_2d.3} parent=39 // pred_region
          %s752 = smul.u32 16, %s24
          %s753 = smul.addr %s23, 64
          %s754 = sadd.s32 %s752, %s753
          %s755 = smul.addr %s754, 4
          %s756 = scalar_lea.vmem %s5, %s755
          // Predicated region
          $region45: #{self_att_2d.3} parent=43 // pred_check
            _
          $region46: #{self_att_2d.3} parent=43 // pred_check_branch
            %758 = sbr.rel (0) target = $region48
          $region47: #{self_att_2d.3} parent=43 // pred_region
            // Predicated region
            $region49: #{self_att_2d.3} parent=47 // pred_check
              _
            $region50: #{self_att_2d.3} parent=47 // pred_check_branch
              %760 = sbr.rel target = $region52
            $region51: #{self_att_2d.3} parent=47 // pred_region
              // Predicated region
              $region64: #{self_att_2d.3} parent=51 // pred_check
                _
              $region65: #{self_att_2d.3} parent=51 // pred_check_branch
                %838 = sbr.rel (0) target = $region67
              $region66: #{self_att_2d.3} parent=51 // pred_region
                loop: start=0, step=1, limit=1
                $region68: #{self_att_2d.3} parent=66 // loop_pre_header
                  _
                $region69: #{self_att_2d.3} parent=66 // loop_header
                  %s840 = sphi 0, %s844
                  %p841 = scmp.ge.s32.totalorder %s840, 1
                  %s845 = sphi %s740, %s740
                  %s846 = sphi %s756, %s756
                $region70: #{self_att_2d.3} parent=66 // loop_header_branch
                  %843 = sbr.rel (%p841) target = $region74
                $region71: #{self_att_2d.3} parent=66 // loop_body
                  _
                $region72: #{self_att_2d.3} parent=66 // loop_footer
                  %s844 = sadd.s32 1, %s840
                $region73: #{self_att_2d.3} parent=66 // loop_footer_branch
                  %839 = sbr.rel target = $region69
                $region74: #{self_att_2d.3} parent=66 // loop_exit
                  _
                %s848 = ssub.s32 16, 1
                loop: start=0, step=1, limit=1
                $region75: #{self_att_2d.3} parent=66 // loop_pre_header
                  _
                $region76: #{self_att_2d.3} parent=66 // loop_header
                  %s850 = sphi 0, %s854
                  %p851 = scmp.ge.s32.totalorder %s850, 1
                  %s855 = sphi %s740, %s740
                  %s856 = sphi %s756, %s756
                $region77: #{self_att_2d.3} parent=66 // loop_header_branch
                  %853 = sbr.rel (%p851) target = $region81
                $region78: #{self_att_2d.3} parent=66 // loop_body
                  %v857 = vld [vmem:[%s855] sm:%s848]
                  %858 = vst [vmem:[%s856] sm:%s848] %v857
                  %v859 = vld [vmem:[%s855 + $0x4] sm:%s848]
                  %860 = vst [vmem:[%s856 + $0x4] sm:%s848] %v859
                  %v861 = vld [vmem:[%s855 + $0x8] sm:%s848]
                  %862 = vst [vmem:[%s856 + $0x8] sm:%s848] %v861
                  %v863 = vld [vmem:[%s855 + $0xc] sm:%s848]
                  %864 = vst [vmem:[%s856 + $0xc] sm:%s848] %v863
                  %v865 = vld [vmem:[%s855 + $0x10] sm:%s848]
                  %866 = vst [vmem:[%s856 + $0x10] sm:%s848] %v865
                  %v867 = vld [vmem:[%s855 + $0x14] sm:%s848]
                  %868 = vst [vmem:[%s856 + $0x14] sm:%s848] %v867
                  %v869 = vld [vmem:[%s855 + $0x18] sm:%s848]
                  %870 = vst [vmem:[%s856 + $0x18] sm:%s848] %v869
                  %v871 = vld [vmem:[%s855 + $0x1c] sm:%s848]
                  %872 = vst [vmem:[%s856 + $0x1c] sm:%s848] %v871
                  %v873 = vld [vmem:[%s855 + $0x20] sm:%s848]
                  %874 = vst [vmem:[%s856 + $0x20] sm:%s848] %v873
                  %v875 = vld [vmem:[%s855 + $0x24] sm:%s848]
                  %876 = vst [vmem:[%s856 + $0x24] sm:%s848] %v875
                  %v877 = vld [vmem:[%s855 + $0x28] sm:%s848]
                  %878 = vst [vmem:[%s856 + $0x28] sm:%s848] %v877
                  %v879 = vld [vmem:[%s855 + $0x2c] sm:%s848]
                  %880 = vst [vmem:[%s856 + $0x2c] sm:%s848] %v879
                  %v881 = vld [vmem:[%s855 + $0x30] sm:%s848]
                  %882 = vst [vmem:[%s856 + $0x30] sm:%s848] %v881
                  %v883 = vld [vmem:[%s855 + $0x34] sm:%s848]
                  %884 = vst [vmem:[%s856 + $0x34] sm:%s848] %v883
                  %v885 = vld [vmem:[%s855 + $0x38] sm:%s848]
                  %886 = vst [vmem:[%s856 + $0x38] sm:%s848] %v885
                  %v887 = vld [vmem:[%s855 + $0x3c] sm:%s848]
                  %888 = vst [vmem:[%s856 + $0x3c] sm:%s848] %v887
                  %v889 = vld [vmem:[%s855 + $0x40] sm:%s848]
                  %890 = vst [vmem:[%s856 + $0x80] sm:%s848] %v889
                  %v891 = vld [vmem:[%s855 + $0x44] sm:%s848]
                  %892 = vst [vmem:[%s856 + $0x84] sm:%s848] %v891
                  %v893 = vld [vmem:[%s855 + $0x48] sm:%s848]
                  %894 = vst [vmem:[%s856 + $0x88] sm:%s848] %v893
                  %v895 = vld [vmem:[%s855 + $0x4c] sm:%s848]
                  %896 = vst [vmem:[%s856 + $0x8c] sm:%s848] %v895
                  %v897 = vld [vmem:[%s855 + $0x50] sm:%s848]
                  %898 = vst [vmem:[%s856 + $0x90] sm:%s848] %v897
                  %v899 = vld [vmem:[%s855 + $0x54] sm:%s848]
                  %900 = vst [vmem:[%s856 + $0x94] sm:%s848] %v899
                  %v901 = vld [vmem:[%s855 + $0x58] sm:%s848]
                  %902 = vst [vmem:[%s856 + $0x98] sm:%s848] %v901
                  %v903 = vld [vmem:[%s855 + $0x5c] sm:%s848]
                  %904 = vst [vmem:[%s856 + $0x9c] sm:%s848] %v903
                  %v905 = vld [vmem:[%s855 + $0x60] sm:%s848]
                  %906 = vst [vmem:[%s856 + $0xa0] sm:%s848] %v905
                  %v907 = vld [vmem:[%s855 + $0x64] sm:%s848]
                  %908 = vst [vmem:[%s856 + $0xa4] sm:%s848] %v907
                  %v909 = vld [vmem:[%s855 + $0x68] sm:%s848]
                  %910 = vst [vmem:[%s856 + $0xa8] sm:%s848] %v909
                  %v911 = vld [vmem:[%s855 + $0x6c] sm:%s848]
                  %912 = vst [vmem:[%s856 + $0xac] sm:%s848] %v911
                  %v913 = vld [vmem:[%s855 + $0x70] sm:%s848]
                  %914 = vst [vmem:[%s856 + $0xb0] sm:%s848] %v913
                  %v915 = vld [vmem:[%s855 + $0x74] sm:%s848]
                  %916 = vst [vmem:[%s856 + $0xb4] sm:%s848] %v915
                  %v917 = vld [vmem:[%s855 + $0x78] sm:%s848]
                  %918 = vst [vmem:[%s856 + $0xb8] sm:%s848] %v917
                  %v919 = vld [vmem:[%s855 + $0x7c] sm:%s848]
                  %920 = vst [vmem:[%s856 + $0xbc] sm:%s848] %v919
                $region79: #{self_att_2d.3} parent=66 // loop_footer
                  %s854 = sadd.s32 1, %s850
                $region80: #{self_att_2d.3} parent=66 // loop_footer_branch
                  %849 = sbr.rel target = $region76
                $region81: #{self_att_2d.3} parent=66 // loop_exit
                  _
              $region67: #{self_att_2d.3} parent=51 // pred_fallthru
                _
            $region52: #{self_att_2d.3} parent=47 // pred_fallthru
              _
            // Predicated region
            $region53: #{self_att_2d.3} parent=47 // pred_check
              _
            $region54: #{self_att_2d.3} parent=47 // pred_check_branch
              %762 = sbr.rel (0) target = $region56
            $region55: #{self_att_2d.3} parent=47 // pred_region
              %s764 = ssub.s32 16, 1
              loop: start=0, step=1, limit=1
              $region57: #{self_att_2d.3} parent=55 // loop_pre_header
                _
              $region58: #{self_att_2d.3} parent=55 // loop_header
                %s766 = sphi 0, %s770
                %p767 = scmp.ge.s32.totalorder %s766, 1
                %s771 = sphi %s740, %s740
                %s772 = sphi %s756, %s756
              $region59: #{self_att_2d.3} parent=55 // loop_header_branch
                %769 = sbr.rel (%p767) target = $region63
              $region60: #{self_att_2d.3} parent=55 // loop_body
                %v773 = vld [vmem:[%s771] sm:%s764]
                %774 = vst [vmem:[%s772] sm:%s764] %v773
                %v775 = vld [vmem:[%s771 + $0x4] sm:%s764]
                %776 = vst [vmem:[%s772 + $0x4] sm:%s764] %v775
                %v777 = vld [vmem:[%s771 + $0x8] sm:%s764]
                %778 = vst [vmem:[%s772 + $0x8] sm:%s764] %v777
                %v779 = vld [vmem:[%s771 + $0xc] sm:%s764]
                %780 = vst [vmem:[%s772 + $0xc] sm:%s764] %v779
                %v781 = vld [vmem:[%s771 + $0x10] sm:%s764]
                %782 = vst [vmem:[%s772 + $0x10] sm:%s764] %v781
                %v783 = vld [vmem:[%s771 + $0x14] sm:%s764]
                %784 = vst [vmem:[%s772 + $0x14] sm:%s764] %v783
                %v785 = vld [vmem:[%s771 + $0x18] sm:%s764]
                %786 = vst [vmem:[%s772 + $0x18] sm:%s764] %v785
                %v787 = vld [vmem:[%s771 + $0x1c] sm:%s764]
                %788 = vst [vmem:[%s772 + $0x1c] sm:%s764] %v787
                %v789 = vld [vmem:[%s771 + $0x20] sm:%s764]
                %790 = vst [vmem:[%s772 + $0x20] sm:%s764] %v789
                %v791 = vld [vmem:[%s771 + $0x24] sm:%s764]
                %792 = vst [vmem:[%s772 + $0x24] sm:%s764] %v791
                %v793 = vld [vmem:[%s771 + $0x28] sm:%s764]
                %794 = vst [vmem:[%s772 + $0x28] sm:%s764] %v793
                %v795 = vld [vmem:[%s771 + $0x2c] sm:%s764]
                %796 = vst [vmem:[%s772 + $0x2c] sm:%s764] %v795
                %v797 = vld [vmem:[%s771 + $0x30] sm:%s764]
                %798 = vst [vmem:[%s772 + $0x30] sm:%s764] %v797
                %v799 = vld [vmem:[%s771 + $0x34] sm:%s764]
                %800 = vst [vmem:[%s772 + $0x34] sm:%s764] %v799
                %v801 = vld [vmem:[%s771 + $0x38] sm:%s764]
                %802 = vst [vmem:[%s772 + $0x38] sm:%s764] %v801
                %v803 = vld [vmem:[%s771 + $0x3c] sm:%s764]
                %804 = vst [vmem:[%s772 + $0x3c] sm:%s764] %v803
                %v805 = vld [vmem:[%s771 + $0x40] sm:%s764]
                %806 = vst [vmem:[%s772 + $0x80] sm:%s764] %v805
                %v807 = vld [vmem:[%s771 + $0x44] sm:%s764]
                %808 = vst [vmem:[%s772 + $0x84] sm:%s764] %v807
                %v809 = vld [vmem:[%s771 + $0x48] sm:%s764]
                %810 = vst [vmem:[%s772 + $0x88] sm:%s764] %v809
                %v811 = vld [vmem:[%s771 + $0x4c] sm:%s764]
                %812 = vst [vmem:[%s772 + $0x8c] sm:%s764] %v811
                %v813 = vld [vmem:[%s771 + $0x50] sm:%s764]
                %814 = vst [vmem:[%s772 + $0x90] sm:%s764] %v813
                %v815 = vld [vmem:[%s771 + $0x54] sm:%s764]
                %816 = vst [vmem:[%s772 + $0x94] sm:%s764] %v815
                %v817 = vld [vmem:[%s771 + $0x58] sm:%s764]
                %818 = vst [vmem:[%s772 + $0x98] sm:%s764] %v817
                %v819 = vld [vmem:[%s771 + $0x5c] sm:%s764]
                %820 = vst [vmem:[%s772 + $0x9c] sm:%s764] %v819
                %v821 = vld [vmem:[%s771 + $0x60] sm:%s764]
                %822 = vst [vmem:[%s772 + $0xa0] sm:%s764] %v821
                %v823 = vld [vmem:[%s771 + $0x64] sm:%s764]
                %824 = vst [vmem:[%s772 + $0xa4] sm:%s764] %v823
                %v825 = vld [vmem:[%s771 + $0x68] sm:%s764]
                %826 = vst [vmem:[%s772 + $0xa8] sm:%s764] %v825
                %v827 = vld [vmem:[%s771 + $0x6c] sm:%s764]
                %828 = vst [vmem:[%s772 + $0xac] sm:%s764] %v827
                %v829 = vld [vmem:[%s771 + $0x70] sm:%s764]
                %830 = vst [vmem:[%s772 + $0xb0] sm:%s764] %v829
                %v831 = vld [vmem:[%s771 + $0x74] sm:%s764]
                %832 = vst [vmem:[%s772 + $0xb4] sm:%s764] %v831
                %v833 = vld [vmem:[%s771 + $0x78] sm:%s764]
                %834 = vst [vmem:[%s772 + $0xb8] sm:%s764] %v833
                %v835 = vld [vmem:[%s771 + $0x7c] sm:%s764]
                %836 = vst [vmem:[%s772 + $0xbc] sm:%s764] %v835
              $region61: #{self_att_2d.3} parent=55 // loop_footer
                %s770 = sadd.s32 1, %s766
              $region62: #{self_att_2d.3} parent=55 // loop_footer_branch
                %765 = sbr.rel target = $region58
              $region63: #{self_att_2d.3} parent=55 // loop_exit
                _
            $region56: #{self_att_2d.3} parent=47 // pred_fallthru
              _
          $region48: #{self_att_2d.3} parent=43 // pred_fallthru
            _
          %921 = vnop
        $region44: #{self_att_2d.3} parent=39 // pred_fallthru
          _
        // Predicated region
        $region82: #{self_att_2d.3} parent=39 // pred_check
          %p922 = pneg %p191
        $region83: #{self_att_2d.3} parent=39 // pred_check_branch
          %924 = sbr.rel (%p922) target = $region85
        $region84: #{self_att_2d.3} parent=39 // pred_region
          %s925 = smul.addr %s23, 4
          %s926 = sadd.s32 %s24, %s925
          %s927 = scalar_lea.vmem %s6, %s926
          // Predicated region
          $region86: #{self_att_2d.3} parent=84 // pred_check
            _
          $region87: #{self_att_2d.3} parent=84 // pred_check_branch
            %929 = sbr.rel (0) target = $region89
          $region88: #{self_att_2d.3} parent=84 // pred_region
            // Predicated region
            $region90: #{self_att_2d.3} parent=88 // pred_check
              _
            $region91: #{self_att_2d.3} parent=88 // pred_check_branch
              %931 = sbr.rel target = $region93
            $region92: #{self_att_2d.3} parent=88 // pred_region
              // Predicated region
              $region105: #{self_att_2d.3} parent=92 // pred_check
                _
              $region106: #{self_att_2d.3} parent=92 // pred_check_branch
                %949 = sbr.rel (0) target = $region108
              $region107: #{self_att_2d.3} parent=92 // pred_region
                %s951 = ssub.s32 2, 1
                loop: start=0, step=1, limit=1
                $region109: #{self_att_2d.3} parent=107 // loop_pre_header
                  _
                $region110: #{self_att_2d.3} parent=107 // loop_header
                  %s953 = sphi 0, %s957
                  %p954 = scmp.ge.s32.totalorder %s953, 1
                  %s958 = sphi %s744, %s744
                  %s959 = sphi %s927, %s927
                $region111: #{self_att_2d.3} parent=107 // loop_header_branch
                  %956 = sbr.rel (%p954) target = $region115
                $region112: #{self_att_2d.3} parent=107 // loop_body
                  %v960 = vld [vmem:[%s958] sm:%s951]
                  %961 = vst [vmem:[%s959] sm:%s951] %v960
                  %v962 = vld [vmem:[%s958 + $0x1] sm:%s951]
                  %963 = vst [vmem:[%s959 + $0x2] sm:%s951] %v962
                $region113: #{self_att_2d.3} parent=107 // loop_footer
                  %s957 = sadd.s32 1, %s953
                $region114: #{self_att_2d.3} parent=107 // loop_footer_branch
                  %952 = sbr.rel target = $region110
                $region115: #{self_att_2d.3} parent=107 // loop_exit
                  _
              $region108: #{self_att_2d.3} parent=92 // pred_fallthru
                _
            $region93: #{self_att_2d.3} parent=88 // pred_fallthru
              _
            // Predicated region
            $region94: #{self_att_2d.3} parent=88 // pred_check
              _
            $region95: #{self_att_2d.3} parent=88 // pred_check_branch
              %933 = sbr.rel (0) target = $region97
            $region96: #{self_att_2d.3} parent=88 // pred_region
              %s935 = ssub.s32 2, 1
              loop: start=0, step=1, limit=1
              $region98: #{self_att_2d.3} parent=96 // loop_pre_header
                _
              $region99: #{self_att_2d.3} parent=96 // loop_header
                %s937 = sphi 0, %s941
                %p938 = scmp.ge.s32.totalorder %s937, 1
                %s942 = sphi %s744, %s744
                %s943 = sphi %s927, %s927
              $region100: #{self_att_2d.3} parent=96 // loop_header_branch
                %940 = sbr.rel (%p938) target = $region104
              $region101: #{self_att_2d.3} parent=96 // loop_body
                %v944 = vld [vmem:[%s942] sm:%s935]
                %945 = vst [vmem:[%s943] sm:%s935] %v944
                %v946 = vld [vmem:[%s942 + $0x1] sm:%s935]
                %947 = vst [vmem:[%s943 + $0x2] sm:%s935] %v946
              $region102: #{self_att_2d.3} parent=96 // loop_footer
                %s941 = sadd.s32 1, %s937
              $region103: #{self_att_2d.3} parent=96 // loop_footer_branch
                %936 = sbr.rel target = $region99
              $region104: #{self_att_2d.3} parent=96 // loop_exit
                _
            $region97: #{self_att_2d.3} parent=88 // pred_fallthru
              _
          $region89: #{self_att_2d.3} parent=84 // pred_fallthru
            _
          %964 = vnop
        $region85: #{self_att_2d.3} parent=39 // pred_fallthru
          _
        // Predicated region
        $region116: #{self_att_2d.3} parent=39 // pred_check
          %p965 = pneg %p219
        $region117: #{self_att_2d.3} parent=39 // pred_check_branch
          %967 = sbr.rel (%p965) target = $region119
        $region118: #{self_att_2d.3} parent=39 // pred_region
          %s968 = smul.u32 16, %s24
          %s969 = smul.addr %s23, 64
          %s970 = sadd.s32 %s968, %s969
          %s971 = smul.addr %s970, 4
          %s972 = scalar_lea.vmem %s7, %s971
          // Predicated region
          $region120: #{self_att_2d.3} parent=118 // pred_check
            _
          $region121: #{self_att_2d.3} parent=118 // pred_check_branch
            %974 = sbr.rel (0) target = $region123
          $region122: #{self_att_2d.3} parent=118 // pred_region
            // Predicated region
            $region124: #{self_att_2d.3} parent=122 // pred_check
              _
            $region125: #{self_att_2d.3} parent=122 // pred_check_branch
              %976 = sbr.rel target = $region127
            $region126: #{self_att_2d.3} parent=122 // pred_region
              // Predicated region
              $region139: #{self_att_2d.3} parent=126 // pred_check
                _
              $region140: #{self_att_2d.3} parent=126 // pred_check_branch
                %1054 = sbr.rel (0) target = $region142
              $region141: #{self_att_2d.3} parent=126 // pred_region
                loop: start=0, step=1, limit=1
                $region143: #{self_att_2d.3} parent=141 // loop_pre_header
                  _
                $region144: #{self_att_2d.3} parent=141 // loop_header
                  %s1056 = sphi 0, %s1060
                  %p1057 = scmp.ge.s32.totalorder %s1056, 1
                  %s1061 = sphi %s748, %s748
                  %s1062 = sphi %s972, %s972
                $region145: #{self_att_2d.3} parent=141 // loop_header_branch
                  %1059 = sbr.rel (%p1057) target = $region149
                $region146: #{self_att_2d.3} parent=141 // loop_body
                  _
                $region147: #{self_att_2d.3} parent=141 // loop_footer
                  %s1060 = sadd.s32 1, %s1056
                $region148: #{self_att_2d.3} parent=141 // loop_footer_branch
                  %1055 = sbr.rel target = $region144
                $region149: #{self_att_2d.3} parent=141 // loop_exit
                  _
                %s1064 = ssub.s32 16, 1
                loop: start=0, step=1, limit=1
                $region150: #{self_att_2d.3} parent=141 // loop_pre_header
                  _
                $region151: #{self_att_2d.3} parent=141 // loop_header
                  %s1066 = sphi 0, %s1070
                  %p1067 = scmp.ge.s32.totalorder %s1066, 1
                  %s1071 = sphi %s748, %s748
                  %s1072 = sphi %s972, %s972
                $region152: #{self_att_2d.3} parent=141 // loop_header_branch
                  %1069 = sbr.rel (%p1067) target = $region156
                $region153: #{self_att_2d.3} parent=141 // loop_body
                  %v1073 = vld [vmem:[%s1071] sm:%s1064]
                  %1074 = vst [vmem:[%s1072] sm:%s1064] %v1073
                  %v1075 = vld [vmem:[%s1071 + $0x4] sm:%s1064]
                  %1076 = vst [vmem:[%s1072 + $0x4] sm:%s1064] %v1075
                  %v1077 = vld [vmem:[%s1071 + $0x8] sm:%s1064]
                  %1078 = vst [vmem:[%s1072 + $0x8] sm:%s1064] %v1077
                  %v1079 = vld [vmem:[%s1071 + $0xc] sm:%s1064]
                  %1080 = vst [vmem:[%s1072 + $0xc] sm:%s1064] %v1079
                  %v1081 = vld [vmem:[%s1071 + $0x10] sm:%s1064]
                  %1082 = vst [vmem:[%s1072 + $0x10] sm:%s1064] %v1081
                  %v1083 = vld [vmem:[%s1071 + $0x14] sm:%s1064]
                  %1084 = vst [vmem:[%s1072 + $0x14] sm:%s1064] %v1083
                  %v1085 = vld [vmem:[%s1071 + $0x18] sm:%s1064]
                  %1086 = vst [vmem:[%s1072 + $0x18] sm:%s1064] %v1085
                  %v1087 = vld [vmem:[%s1071 + $0x1c] sm:%s1064]
                  %1088 = vst [vmem:[%s1072 + $0x1c] sm:%s1064] %v1087
                  %v1089 = vld [vmem:[%s1071 + $0x20] sm:%s1064]
                  %1090 = vst [vmem:[%s1072 + $0x20] sm:%s1064] %v1089
                  %v1091 = vld [vmem:[%s1071 + $0x24] sm:%s1064]
                  %1092 = vst [vmem:[%s1072 + $0x24] sm:%s1064] %v1091
                  %v1093 = vld [vmem:[%s1071 + $0x28] sm:%s1064]
                  %1094 = vst [vmem:[%s1072 + $0x28] sm:%s1064] %v1093
                  %v1095 = vld [vmem:[%s1071 + $0x2c] sm:%s1064]
                  %1096 = vst [vmem:[%s1072 + $0x2c] sm:%s1064] %v1095
                  %v1097 = vld [vmem:[%s1071 + $0x30] sm:%s1064]
                  %1098 = vst [vmem:[%s1072 + $0x30] sm:%s1064] %v1097
                  %v1099 = vld [vmem:[%s1071 + $0x34] sm:%s1064]
                  %1100 = vst [vmem:[%s1072 + $0x34] sm:%s1064] %v1099
                  %v1101 = vld [vmem:[%s1071 + $0x38] sm:%s1064]
                  %1102 = vst [vmem:[%s1072 + $0x38] sm:%s1064] %v1101
                  %v1103 = vld [vmem:[%s1071 + $0x3c] sm:%s1064]
                  %1104 = vst [vmem:[%s1072 + $0x3c] sm:%s1064] %v1103
                  %v1105 = vld [vmem:[%s1071 + $0x40] sm:%s1064]
                  %1106 = vst [vmem:[%s1072 + $0x80] sm:%s1064] %v1105
                  %v1107 = vld [vmem:[%s1071 + $0x44] sm:%s1064]
                  %1108 = vst [vmem:[%s1072 + $0x84] sm:%s1064] %v1107
                  %v1109 = vld [vmem:[%s1071 + $0x48] sm:%s1064]
                  %1110 = vst [vmem:[%s1072 + $0x88] sm:%s1064] %v1109
                  %v1111 = vld [vmem:[%s1071 + $0x4c] sm:%s1064]
                  %1112 = vst [vmem:[%s1072 + $0x8c] sm:%s1064] %v1111
                  %v1113 = vld [vmem:[%s1071 + $0x50] sm:%s1064]
                  %1114 = vst [vmem:[%s1072 + $0x90] sm:%s1064] %v1113
                  %v1115 = vld [vmem:[%s1071 + $0x54] sm:%s1064]
                  %1116 = vst [vmem:[%s1072 + $0x94] sm:%s1064] %v1115
                  %v1117 = vld [vmem:[%s1071 + $0x58] sm:%s1064]
                  %1118 = vst [vmem:[%s1072 + $0x98] sm:%s1064] %v1117
                  %v1119 = vld [vmem:[%s1071 + $0x5c] sm:%s1064]
                  %1120 = vst [vmem:[%s1072 + $0x9c] sm:%s1064] %v1119
                  %v1121 = vld [vmem:[%s1071 + $0x60] sm:%s1064]
                  %1122 = vst [vmem:[%s1072 + $0xa0] sm:%s1064] %v1121
                  %v1123 = vld [vmem:[%s1071 + $0x64] sm:%s1064]
                  %1124 = vst [vmem:[%s1072 + $0xa4] sm:%s1064] %v1123
                  %v1125 = vld [vmem:[%s1071 + $0x68] sm:%s1064]
                  %1126 = vst [vmem:[%s1072 + $0xa8] sm:%s1064] %v1125
                  %v1127 = vld [vmem:[%s1071 + $0x6c] sm:%s1064]
                  %1128 = vst [vmem:[%s1072 + $0xac] sm:%s1064] %v1127
                  %v1129 = vld [vmem:[%s1071 + $0x70] sm:%s1064]
                  %1130 = vst [vmem:[%s1072 + $0xb0] sm:%s1064] %v1129
                  %v1131 = vld [vmem:[%s1071 + $0x74] sm:%s1064]
                  %1132 = vst [vmem:[%s1072 + $0xb4] sm:%s1064] %v1131
                  %v1133 = vld [vmem:[%s1071 + $0x78] sm:%s1064]
                  %1134 = vst [vmem:[%s1072 + $0xb8] sm:%s1064] %v1133
                  %v1135 = vld [vmem:[%s1071 + $0x7c] sm:%s1064]
                  %1136 = vst [vmem:[%s1072 + $0xbc] sm:%s1064] %v1135
                $region154: #{self_att_2d.3} parent=141 // loop_footer
                  %s1070 = sadd.s32 1, %s1066
                $region155: #{self_att_2d.3} parent=141 // loop_footer_branch
                  %1065 = sbr.rel target = $region151
                $region156: #{self_att_2d.3} parent=141 // loop_exit
                  _
              $region142: #{self_att_2d.3} parent=126 // pred_fallthru
                _
            $region127: #{self_att_2d.3} parent=122 // pred_fallthru
              _
            // Predicated region
            $region128: #{self_att_2d.3} parent=122 // pred_check
              _
            $region129: #{self_att_2d.3} parent=122 // pred_check_branch
              %978 = sbr.rel (0) target = $region131
            $region130: #{self_att_2d.3} parent=122 // pred_region
              %s980 = ssub.s32 16, 1
              loop: start=0, step=1, limit=1
              $region132: #{self_att_2d.3} parent=130 // loop_pre_header
                _
              $region133: #{self_att_2d.3} parent=130 // loop_header
                %s982 = sphi 0, %s986
                %p983 = scmp.ge.s32.totalorder %s982, 1
                %s987 = sphi %s748, %s748
                %s988 = sphi %s972, %s972
              $region134: #{self_att_2d.3} parent=130 // loop_header_branch
                %985 = sbr.rel (%p983) target = $region138
              $region135: #{self_att_2d.3} parent=130 // loop_body
                %v989 = vld [vmem:[%s987] sm:%s980]
                %990 = vst [vmem:[%s988] sm:%s980] %v989
                %v991 = vld [vmem:[%s987 + $0x4] sm:%s980]
                %992 = vst [vmem:[%s988 + $0x4] sm:%s980] %v991
                %v993 = vld [vmem:[%s987 + $0x8] sm:%s980]
                %994 = vst [vmem:[%s988 + $0x8] sm:%s980] %v993
                %v995 = vld [vmem:[%s987 + $0xc] sm:%s980]
                %996 = vst [vmem:[%s988 + $0xc] sm:%s980] %v995
                %v997 = vld [vmem:[%s987 + $0x10] sm:%s980]
                %998 = vst [vmem:[%s988 + $0x10] sm:%s980] %v997
                %v999 = vld [vmem:[%s987 + $0x14] sm:%s980]
                %1000 = vst [vmem:[%s988 + $0x14] sm:%s980] %v999
                %v1001 = vld [vmem:[%s987 + $0x18] sm:%s980]
                %1002 = vst [vmem:[%s988 + $0x18] sm:%s980] %v1001
                %v1003 = vld [vmem:[%s987 + $0x1c] sm:%s980]
                %1004 = vst [vmem:[%s988 + $0x1c] sm:%s980] %v1003
                %v1005 = vld [vmem:[%s987 + $0x20] sm:%s980]
                %1006 = vst [vmem:[%s988 + $0x20] sm:%s980] %v1005
                %v1007 = vld [vmem:[%s987 + $0x24] sm:%s980]
                %1008 = vst [vmem:[%s988 + $0x24] sm:%s980] %v1007
                %v1009 = vld [vmem:[%s987 + $0x28] sm:%s980]
                %1010 = vst [vmem:[%s988 + $0x28] sm:%s980] %v1009
                %v1011 = vld [vmem:[%s987 + $0x2c] sm:%s980]
                %1012 = vst [vmem:[%s988 + $0x2c] sm:%s980] %v1011
                %v1013 = vld [vmem:[%s987 + $0x30] sm:%s980]
                %1014 = vst [vmem:[%s988 + $0x30] sm:%s980] %v1013
                %v1015 = vld [vmem:[%s987 + $0x34] sm:%s980]
                %1016 = vst [vmem:[%s988 + $0x34] sm:%s980] %v1015
                %v1017 = vld [vmem:[%s987 + $0x38] sm:%s980]
                %1018 = vst [vmem:[%s988 + $0x38] sm:%s980] %v1017
                %v1019 = vld [vmem:[%s987 + $0x3c] sm:%s980]
                %1020 = vst [vmem:[%s988 + $0x3c] sm:%s980] %v1019
                %v1021 = vld [vmem:[%s987 + $0x40] sm:%s980]
                %1022 = vst [vmem:[%s988 + $0x80] sm:%s980] %v1021
                %v1023 = vld [vmem:[%s987 + $0x44] sm:%s980]
                %1024 = vst [vmem:[%s988 + $0x84] sm:%s980] %v1023
                %v1025 = vld [vmem:[%s987 + $0x48] sm:%s980]
                %1026 = vst [vmem:[%s988 + $0x88] sm:%s980] %v1025
                %v1027 = vld [vmem:[%s987 + $0x4c] sm:%s980]
                %1028 = vst [vmem:[%s988 + $0x8c] sm:%s980] %v1027
                %v1029 = vld [vmem:[%s987 + $0x50] sm:%s980]
                %1030 = vst [vmem:[%s988 + $0x90] sm:%s980] %v1029
                %v1031 = vld [vmem:[%s987 + $0x54] sm:%s980]
                %1032 = vst [vmem:[%s988 + $0x94] sm:%s980] %v1031
                %v1033 = vld [vmem:[%s987 + $0x58] sm:%s980]
                %1034 = vst [vmem:[%s988 + $0x98] sm:%s980] %v1033
                %v1035 = vld [vmem:[%s987 + $0x5c] sm:%s980]
                %1036 = vst [vmem:[%s988 + $0x9c] sm:%s980] %v1035
                %v1037 = vld [vmem:[%s987 + $0x60] sm:%s980]
                %1038 = vst [vmem:[%s988 + $0xa0] sm:%s980] %v1037
                %v1039 = vld [vmem:[%s987 + $0x64] sm:%s980]
                %1040 = vst [vmem:[%s988 + $0xa4] sm:%s980] %v1039
                %v1041 = vld [vmem:[%s987 + $0x68] sm:%s980]
                %1042 = vst [vmem:[%s988 + $0xa8] sm:%s980] %v1041
                %v1043 = vld [vmem:[%s987 + $0x6c] sm:%s980]
                %1044 = vst [vmem:[%s988 + $0xac] sm:%s980] %v1043
                %v1045 = vld [vmem:[%s987 + $0x70] sm:%s980]
                %1046 = vst [vmem:[%s988 + $0xb0] sm:%s980] %v1045
                %v1047 = vld [vmem:[%s987 + $0x74] sm:%s980]
                %1048 = vst [vmem:[%s988 + $0xb4] sm:%s980] %v1047
                %v1049 = vld [vmem:[%s987 + $0x78] sm:%s980]
                %1050 = vst [vmem:[%s988 + $0xb8] sm:%s980] %v1049
                %v1051 = vld [vmem:[%s987 + $0x7c] sm:%s980]
                %1052 = vst [vmem:[%s988 + $0xbc] sm:%s980] %v1051
              $region136: #{self_att_2d.3} parent=130 // loop_footer
                %s986 = sadd.s32 1, %s982
              $region137: #{self_att_2d.3} parent=130 // loop_footer_branch
                %981 = sbr.rel target = $region133
              $region138: #{self_att_2d.3} parent=130 // loop_exit
                _
            $region131: #{self_att_2d.3} parent=122 // pred_fallthru
              _
          $region123: #{self_att_2d.3} parent=118 // pred_fallthru
            _
          %1137 = vnop
        $region119: #{self_att_2d.3} parent=39 // pred_fallthru
          _
      $region40: #{self_att_2d.3} parent=5 // pred_fallthru
        _
      %p1138 = scmp.le.s32.totalorder 2, %s14
      // Predicated region
      $region157: #{self_att_2d.3} parent=5 // pred_check
        %p1139 = pneg %p1138
      $region158: #{self_att_2d.3} parent=5 // pred_check_branch
        %1141 = sbr.rel (%p1139) target = $region160
      $region159: #{self_att_2d.3} parent=5 // pred_region
        %s1142 = ssub.s32 %s14, 2
        // Predicated region
        $region161: #{self_att_2d.3} parent=159 // pred_check
          %p1143 = pneg %p169
        $region162: #{self_att_2d.3} parent=159 // pred_check_branch
          %1145 = sbr.rel (%p1143) target = $region164
        $region163: #{self_att_2d.3} parent=159 // pred_region
          %s1146 = sand.u32 %s154, 1
          %s1147 = sand.u32 %s154, 1
          %s1148 = smul.addr %s1147, 128
          %s1149 = scalar_lea.vmem [#allocation2], %s1148
        $region164: #{self_att_2d.3} parent=159 // pred_fallthru
          _
        // Predicated region
        $region165: #{self_att_2d.3} parent=159 // pred_check
          %p1150 = pneg %p197
        $region166: #{self_att_2d.3} parent=159 // pred_check_branch
          %1152 = sbr.rel (%p1150) target = $region168
        $region167: #{self_att_2d.3} parent=159 // pred_region
          %s1153 = sand.u32 %s182, 1
          %s1154 = sand.u32 %s182, 1
          %s1155 = smul.addr %s1154, 2
          %s1156 = scalar_lea.vmem [#allocation3], %s1155
        $region168: #{self_att_2d.3} parent=159 // pred_fallthru
          _
        // Predicated region
        $region169: #{self_att_2d.3} parent=159 // pred_check
          %p1157 = pneg %p225
        $region170: #{self_att_2d.3} parent=159 // pred_check_branch
          %1159 = sbr.rel (%p1157) target = $region172
        $region171: #{self_att_2d.3} parent=159 // pred_region
          %s1160 = sand.u32 %s210, 1
          %s1161 = sand.u32 %s210, 1
          %s1162 = smul.addr %s1161, 128
          %s1163 = scalar_lea.vmem [#allocation4], %s1162
        $region172: #{self_att_2d.3} parent=159 // pred_fallthru
          _
      $region160: #{self_att_2d.3} parent=5 // pred_fallthru
        _
    $region6: #{self_att_2d.3} parent=1 // loop_footer
      %s18 = sadd.s32 1, %s14
    $region7: #{self_att_2d.3} parent=1 // loop_footer_branch
      %13 = sbr.rel target = $region3
    $region8: #{self_att_2d.3} parent=1 // loop_exit
      _

// kernel: self_att_2d.5
$region0: #{self_att_2d.5}
  #allocation0 [shape = 'u32[]', space=smem, size = 0x4, offset = 0x4, fixed_abs, tag = 'smem constant byte address 0x4 - core index']
  #allocation1 [shape = 'u32[72,128]{1,0:T(1,128)}', space=vmem, size = 0x9000, scoped, tag = 'internal scratch']
  %s0 = inlined_call_operand.vmem [shape: f32[2,256,4], index: 0, kind: input, shape index: {}]
  %s1 = inlined_call_operand.vmem [shape: bf16[2,256,4], index: 1, kind: input, shape index: {}]
  %s2 = inlined_call_operand.vmem [shape: bf16[4,4], index: 2, kind: input, shape index: {}]
  %s3 = inlined_call_operand.vmem [shape: f32[1,4], index: 3, kind: input, shape index: {}]
  %s4 = inlined_call_operand.vmem [shape: f32[2,256,4], index: 4, kind: output, shape index: {}]
  %s5 = sld [smem:[#allocation0]]
  $region49: #{self_att_2d.5} parent=0
    _
  %s7 = ssub.s32 1, %s5
  %s8 = scalar_select 0, %s7, %s5
  loop: start=0, step=1, limit=6
  $region2: #{self_att_2d.5} parent=0 // loop_pre_header
    _
  $region3: #{self_att_2d.5} parent=0 // loop_header
    %s10 = sphi 0, %s14
    %p11 = scmp.ge.s32.totalorder %s10, 6
    %s17 = sphi 0, %s29
    %s18 = sphi 0, %s25
    %s19 = sphi 0, %s17
    %s20 = sphi 0, %s18
    %s21 = sphi 0, %s19
    %s22 = sphi 0, %s20
    %s34 = sphi 0, %s36
    %s37 = sphi 0, %s34
    %s38 = sphi 0, %s37
    %s54 = sphi 0, %s38
    %s62 = sphi 0, %s64
    %s65 = sphi 0, %s62
    %s66 = sphi 0, %s65
    %s82 = sphi 0, %s66
    %s86 = sphi 0, %s86
    %s88 = sphi 0, %s86
    %s89 = sphi 0, %s88
    %s103 = sphi 0, %s89
    %s107 = sphi 0, %s107
    %s109 = sphi 0, %s107
    %s110 = sphi 0, %s109
    %s124 = sphi 0, %s110
    %s132 = sphi 0, %s134
    %s135 = sphi 0, %s132
    %s136 = sphi 0, %s135
    %s152 = sphi 0, %s136
  $region4: #{self_att_2d.5} parent=0 // loop_header_branch
    %13 = sbr.rel (%p11) target = $region8
  $region5: #{self_att_2d.5} parent=0 // loop_body
    %s15 = ssub.s32 %s10, 1
    %s16 = ssub.s32 %s10, 2
    %s23 = sadd.s32 1, %s18
    %p24 = scmp.ge.s32.totalorder %s23, 2
    %s25 = scalar_select %p24, 0, %s23
    %s26 = sadd.s32 1, %s17
    %s27 = scalar_select %p24, %s26, %s17
    %p28 = scmp.ge.s32.totalorder %s27, 2
    %s29 = scalar_select %p28, 0, %s27
    %s30 = ssub.s32 %s17, %s29
    %s31 = ssub.s32 %s18, %s25
    %s32 = sor.u32 %s30, %s31
    %p33 = scmp.eq.s32.totalorder %s32, 0
    %s35 = sadd.s32 %s34, 1
    %s36 = scalar_select %p33, %s34, %s35
    %p39 = pneg %p33
    %p40 = scmp.eq.s32.totalorder %s10, 3
    %p41 = por %p39, %p40
    %p42 = scmp.ne.s32.totalorder %s34, %s37
    %p43 = scmp.eq.s32.totalorder %s10, 0
    %p44 = por %p42, %p43
    %p45 = scmp.ne.s32.totalorder %s34, %s37
    %p46 = scmp.eq.s32.totalorder %s15, 3
    %p47 = por %p45, %p46
    %p48 = scmp.ne.s32.totalorder %s37, %s38
    %p49 = scmp.eq.s32.totalorder %s15, 0
    %p50 = por %p48, %p49
    %p51 = scmp.ne.s32.totalorder %s37, %s38
    %p52 = scmp.eq.s32.totalorder %s16, 3
    %p53 = por %p51, %p52
    %p55 = scmp.ne.s32.totalorder %s38, %s54
    %p56 = scmp.eq.s32.totalorder %s16, 0
    %p57 = por %p55, %p56
    %s58 = ssub.s32 %s17, %s29
    %s59 = ssub.s32 %s18, %s25
    %s60 = sor.u32 %s58, %s59
    %p61 = scmp.eq.s32.totalorder %s60, 0
    %s63 = sadd.s32 %s62, 1
    %s64 = scalar_select %p61, %s62, %s63
    %p67 = pneg %p61
    %p68 = scmp.eq.s32.totalorder %s10, 3
    %p69 = por %p67, %p68
    %p70 = scmp.ne.s32.totalorder %s62, %s65
    %p71 = scmp.eq.s32.totalorder %s10, 0
    %p72 = por %p70, %p71
    %p73 = scmp.ne.s32.totalorder %s62, %s65
    %p74 = scmp.eq.s32.totalorder %s15, 3
    %p75 = por %p73, %p74
    %p76 = scmp.ne.s32.totalorder %s65, %s66
    %p77 = scmp.eq.s32.totalorder %s15, 0
    %p78 = por %p76, %p77
    %p79 = scmp.ne.s32.totalorder %s65, %s66
    %p80 = scmp.eq.s32.totalorder %s16, 3
    %p81 = por %p79, %p80
    %p83 = scmp.ne.s32.totalorder %s66, %s82
    %p84 = scmp.eq.s32.totalorder %s16, 0
    %p85 = por %p83, %p84
    %s87 = sadd.s32 %s86, 1
    %p90 = scmp.eq.s32.totalorder %s10, 3
    %p91 = scmp.ne.s32.totalorder %s86, %s88
    %p92 = scmp.eq.s32.totalorder %s10, 0
    %p93 = por %p91, %p92
    %p94 = scmp.ne.s32.totalorder %s86, %s88
    %p95 = scmp.eq.s32.totalorder %s15, 3
    %p96 = por %p94, %p95
    %p97 = scmp.ne.s32.totalorder %s88, %s89
    %p98 = scmp.eq.s32.totalorder %s15, 0
    %p99 = por %p97, %p98
    %p100 = scmp.ne.s32.totalorder %s88, %s89
    %p101 = scmp.eq.s32.totalorder %s16, 3
    %p102 = por %p100, %p101
    %p104 = scmp.ne.s32.totalorder %s89, %s103
    %p105 = scmp.eq.s32.totalorder %s16, 0
    %p106 = por %p104, %p105
    %s108 = sadd.s32 %s107, 1
    %p111 = scmp.eq.s32.totalorder %s10, 3
    %p112 = scmp.ne.s32.totalorder %s107, %s109
    %p113 = scmp.eq.s32.totalorder %s10, 0
    %p114 = por %p112, %p113
    %p115 = scmp.ne.s32.totalorder %s107, %s109
    %p116 = scmp.eq.s32.totalorder %s15, 3
    %p117 = por %p115, %p116
    %p118 = scmp.ne.s32.totalorder %s109, %s110
    %p119 = scmp.eq.s32.totalorder %s15, 0
    %p120 = por %p118, %p119
    %p121 = scmp.ne.s32.totalorder %s109, %s110
    %p122 = scmp.eq.s32.totalorder %s16, 3
    %p123 = por %p121, %p122
    %p125 = scmp.ne.s32.totalorder %s110, %s124
    %p126 = scmp.eq.s32.totalorder %s16, 0
    %p127 = por %p125, %p126
    %s128 = ssub.s32 %s17, %s29
    %s129 = ssub.s32 %s18, %s25
    %s130 = sor.u32 %s128, %s129
    %p131 = scmp.eq.s32.totalorder %s130, 0
    %s133 = sadd.s32 %s132, 1
    %s134 = scalar_select %p131, %s132, %s133
    %p137 = pneg %p131
    %p138 = scmp.eq.s32.totalorder %s10, 3
    %p139 = por %p137, %p138
    %p140 = scmp.ne.s32.totalorder %s132, %s135
    %p141 = scmp.eq.s32.totalorder %s10, 0
    %p142 = por %p140, %p141
    %p143 = scmp.ne.s32.totalorder %s132, %s135
    %p144 = scmp.eq.s32.totalorder %s15, 3
    %p145 = por %p143, %p144
    %p146 = scmp.ne.s32.totalorder %s135, %s136
    %p147 = scmp.eq.s32.totalorder %s15, 0
    %p148 = por %p146, %p147
    %p149 = scmp.ne.s32.totalorder %s135, %s136
    %p150 = scmp.eq.s32.totalorder %s16, 3
    %p151 = por %p149, %p150
    %p153 = scmp.ne.s32.totalorder %s136, %s152
    %p154 = scmp.eq.s32.totalorder %s16, 0
    %p155 = por %p153, %p154
    %p156 = scmp.le.s32.totalorder 1, %s10
    %p157 = scmp.lt.s32.totalorder %s10, 5
    %p158 = pnand %p156, %p157
    %p159 = pneg %p158
    // Predicated region
    $region9: #{self_att_2d.5} parent=5 // pred_check
      _
    $region10: #{self_att_2d.5} parent=5 // pred_check_branch
      %161 = sbr.rel (%p158) target = $region12
    $region11: #{self_att_2d.5} parent=5 // pred_region
      %s162 = ssub.s32 %s10, 1
      // Predicated region
      $region13: #{self_att_2d.5} parent=11 // pred_check
        %p163 = pneg %p99
      $region14: #{self_att_2d.5} parent=11 // pred_check_branch
        %165 = sbr.rel (%p163) target = $region16
      $region15: #{self_att_2d.5} parent=11 // pred_region
        _
      $region16: #{self_att_2d.5} parent=11 // pred_fallthru
        _
      // Predicated region
      $region17: #{self_att_2d.5} parent=11 // pred_check
        %p166 = pneg %p120
      $region18: #{self_att_2d.5} parent=11 // pred_check_branch
        %168 = sbr.rel (%p166) target = $region20
      $region19: #{self_att_2d.5} parent=11 // pred_region
        _
      $region20: #{self_att_2d.5} parent=11 // pred_fallthru
        _
    $region12: #{self_att_2d.5} parent=5 // pred_fallthru
      _
    %p169 = scmp.lt.s32.totalorder %s10, 4
    // Predicated region
    $region21: #{self_att_2d.5} parent=5 // pred_check
      %p170 = pneg %p169
    $region22: #{self_att_2d.5} parent=5 // pred_check_branch
      %172 = sbr.rel (%p170) target = $region24
    $region23: #{self_att_2d.5} parent=5 // pred_region
      // Predicated region
      $region25: #{self_att_2d.5} parent=23 // pred_check
        %p173 = pneg %p44
      $region26: #{self_att_2d.5} parent=23 // pred_check_branch
        %175 = sbr.rel (%p173) target = $region28
      $region27: #{self_att_2d.5} parent=23 // pred_region
        %s176 = smul.u32 16, %s18
        %p177 = scmp.lt.s32.totalorder %s17, 1
        %s178 = scalar_select %p177, %s17, 1
        %p179 = scmp.lt.s32.totalorder %s176, 31
        %s180 = scalar_select %p179, %s176, 31
        %s181 = smul.addr %s178, 32
        %s182 = sadd.s32 %s180, %s181
        %s183 = smul.addr %s182, 8
        %s184 = scalar_lea.vmem %s0, %s183
        %s185 = smul.u32 16, %s18
      $region28: #{self_att_2d.5} parent=23 // pred_fallthru
        _
      // Predicated region
      $region29: #{self_att_2d.5} parent=23 // pred_check
        %p186 = pneg %p72
      $region30: #{self_att_2d.5} parent=23 // pred_check_branch
        %188 = sbr.rel (%p186) target = $region32
      $region31: #{self_att_2d.5} parent=23 // pred_region
        %s189 = smul.u32 16, %s18
        %p190 = scmp.lt.s32.totalorder %s17, 1
        %s191 = scalar_select %p190, %s17, 1
        %p192 = scmp.lt.s32.totalorder %s189, 31
        %s193 = scalar_select %p192, %s189, 31
        %s194 = smul.addr %s191, 32
        %s195 = sadd.s32 %s193, %s194
        %s196 = smul.addr %s195, 4
        %s197 = scalar_lea.vmem %s1, %s196
        %s198 = smul.u32 16, %s18
      $region32: #{self_att_2d.5} parent=23 // pred_fallthru
        _
    $region24: #{self_att_2d.5} parent=5 // pred_fallthru
      _
    %p199 = scmp.le.s32.totalorder 1, %s10
    %p200 = scmp.lt.s32.totalorder %s10, 5
    %p201 = pnand %p199, %p200
    %p202 = pneg %p201
    // Predicated region
    $region33: #{self_att_2d.5} parent=5 // pred_check
      _
    $region34: #{self_att_2d.5} parent=5 // pred_check_branch
      %204 = sbr.rel (%p201) target = $region36
    $region35: #{self_att_2d.5} parent=5 // pred_region
      %s205 = ssub.s32 %s10, 1
      %s206 = smul.u32 16, %s20
      %p207 = scmp.lt.s32.totalorder %s19, 1
      %s208 = scalar_select %p207, %s19, 1
      %p209 = scmp.lt.s32.totalorder %s206, 31
      %s210 = scalar_select %p209, %s206, 31
      %s211 = smul.addr %s208, 32
      %s212 = sadd.s32 %s210, %s211
      %s213 = smul.addr %s212, 8
      %s214 = scalar_lea.vmem %s0, %s213
      %p215 = pneg %p50
      %p216 = pneg %p47
      %s217 = smul.u32 16, %s20
      %p218 = scmp.lt.s32.totalorder %s19, 1
      %s219 = scalar_select %p218, %s19, 1
      %p220 = scmp.lt.s32.totalorder %s217, 31
      %s221 = scalar_select %p220, %s217, 31
      %s222 = smul.addr %s219, 32
      %s223 = sadd.s32 %s221, %s222
      %s224 = smul.addr %s223, 4
      %s225 = scalar_lea.vmem %s1, %s224
      %p226 = pneg %p78
      %p227 = pneg %p75
      %p228 = pneg %p99
      %p229 = pneg %p96
      %p230 = pneg %p120
      %p231 = pneg %p117
      %p232 = pneg %p148
      %p233 = pneg %p145
      %s234 = smul.u32 16, %s20
      %p235 = scmp.lt.s32.totalorder %s19, 1
      %s236 = scalar_select %p235, %s19, 1
      %p237 = scmp.lt.s32.totalorder %s234, 31
      %s238 = scalar_select %p237, %s234, 31
      %s239 = smul.addr %s236, 32
      %s240 = sadd.s32 %s238, %s239
      %s241 = smul.addr %s240, 8
      %s242 = scalar_lea.vmem %s4, %s241
      %s243 = smul.u32 16, %s20
      %p244 = scmp.lt.s32.totalorder %s19, 1
      %s245 = scalar_select %p244, %s19, 1
      %p246 = scmp.lt.s32.totalorder %s243, 31
      %s247 = scalar_select %p246, %s243, 31
      %s248 = smul.addr %s245, 32
      %s249 = sadd.s32 %s247, %s248
      %s250 = smul.addr %s249, 8
      %s251 = scalar_lea.vmem %s0, %s250
      %s252 = smul.u32 16, %s20
      %s253 = smul.u32 16, %s20
      %p254 = scmp.lt.s32.totalorder %s19, 1
      %s255 = scalar_select %p254, %s19, 1
      %p256 = scmp.lt.s32.totalorder %s253, 31
      %s257 = scalar_select %p256, %s253, 31
      %s258 = smul.addr %s255, 32
      %s259 = sadd.s32 %s257, %s258
      %s260 = smul.addr %s259, 4
      %s261 = scalar_lea.vmem %s1, %s260
      %s262 = smul.u32 16, %s20
      %s263 = smul.u32 16, %s20
      %p264 = scmp.lt.s32.totalorder %s19, 1
      %s265 = scalar_select %p264, %s19, 1
      %p266 = scmp.lt.s32.totalorder %s263, 31
      %s267 = scalar_select %p266, %s263, 31
      %s268 = smul.addr %s265, 32
      %s269 = sadd.s32 %s267, %s268
      %s270 = smul.addr %s269, 8
      %s271 = scalar_lea.vmem %s4, %s270
      %s272 = smul.u32 16, %s20
      %v274 = vld [vmem:[%s251] sm:$0xff]
      %v275 = vld [vmem:[%s251 + $0x8] sm:$0xff]
      %v276 = vld [vmem:[%s251 + $0x10] sm:$0xff]
      %v277 = vld [vmem:[%s251 + $0x18] sm:$0xff]
      %v278 = vld [vmem:[%s251 + $0x20] sm:$0xff]
      %v279 = vld [vmem:[%s251 + $0x28] sm:$0xff]
      %v280 = vld [vmem:[%s251 + $0x30] sm:$0xff]
      %v281 = vld [vmem:[%s251 + $0x38] sm:$0xff]
      %v282 = vld [vmem:[%s251 + $0x40] sm:$0xff]
      %v283 = vld [vmem:[%s251 + $0x48] sm:$0xff]
      %v284 = vld [vmem:[%s251 + $0x50] sm:$0xff]
      %v285 = vld [vmem:[%s251 + $0x58] sm:$0xff]
      %v286 = vld [vmem:[%s251 + $0x60] sm:$0xff]
      %v287 = vld [vmem:[%s251 + $0x68] sm:$0xff]
      %v288 = vld [vmem:[%s251 + $0x70] sm:$0xff]
      %v289 = vld [vmem:[%s251 + $0x78] sm:$0xff]
      %v290 = vld [vmem:[%s3] sm:$0x1]
      %v292 = vperm.slane %v290, 0
      %v294 = vadd.f32 %v274, %v292
      %v295 = vadd.f32 %v275, %v292
      %v296 = vadd.f32 %v276, %v292
      %v297 = vadd.f32 %v277, %v292
      %v298 = vadd.f32 %v278, %v292
      %v299 = vadd.f32 %v279, %v292
      %v300 = vadd.f32 %v280, %v292
      %v301 = vadd.f32 %v281, %v292
      %v302 = vadd.f32 %v282, %v292
      %v303 = vadd.f32 %v283, %v292
      %v304 = vadd.f32 %v284, %v292
      %v305 = vadd.f32 %v285, %v292
      %v306 = vadd.f32 %v286, %v292
      %v307 = vadd.f32 %v287, %v292
      %v308 = vadd.f32 %v288, %v292
      %v309 = vadd.f32 %v289, %v292
      %v310 = vld [vmem:[%s261] sm:$0xf]
      %v311 = vld [vmem:[%s261 + $0x4] sm:$0xf]
      %v312 = vld [vmem:[%s261 + $0x8] sm:$0xf]
      %v313 = vld [vmem:[%s261 + $0xc] sm:$0xf]
      %v314 = vld [vmem:[%s261 + $0x10] sm:$0xf]
      %v315 = vld [vmem:[%s261 + $0x14] sm:$0xf]
      %v316 = vld [vmem:[%s261 + $0x18] sm:$0xf]
      %v317 = vld [vmem:[%s261 + $0x1c] sm:$0xf]
      %v318 = vld [vmem:[%s261 + $0x20] sm:$0xf]
      %v319 = vld [vmem:[%s261 + $0x24] sm:$0xf]
      %v320 = vld [vmem:[%s261 + $0x28] sm:$0xf]
      %v321 = vld [vmem:[%s261 + $0x2c] sm:$0xf]
      %v322 = vld [vmem:[%s261 + $0x30] sm:$0xf]
      %v323 = vld [vmem:[%s261 + $0x34] sm:$0xf]
      %v324 = vld [vmem:[%s261 + $0x38] sm:$0xf]
      %v325 = vld [vmem:[%s261 + $0x3c] sm:$0xf]
      %v326 = vld [vmem:[%s2] sm:$0x3]
      %v343 = vunpack.c.l.b16 %v310
      %v344 = vunpack.c.l.b16 %v311
      %v345 = vunpack.c.l.b16 %v312
      %v346 = vunpack.c.l.b16 %v313
      %v347 = vunpack.c.l.b16 %v314
      %v348 = vunpack.c.l.b16 %v315
      %v349 = vunpack.c.l.b16 %v316
      %v350 = vunpack.c.l.b16 %v317
      %v351 = vunpack.c.l.b16 %v318
      %v352 = vunpack.c.l.b16 %v319
      %v353 = vunpack.c.l.b16 %v320
      %v354 = vunpack.c.l.b16 %v321
      %v355 = vunpack.c.l.b16 %v322
      %v356 = vunpack.c.l.b16 %v323
      %v357 = vunpack.c.l.b16 %v324
      %v358 = vunpack.c.l.b16 %v325
      %v359 = vpack.c.b16 %v344, %v343
      %v360 = vpack.c.b16 %v346, %v345
      %v361 = vpack.c.b16 %v348, %v347
      %v362 = vpack.c.b16 %v350, %v349
      %v363 = vpack.c.b16 %v352, %v351
      %v364 = vpack.c.b16 %v354, %v353
      %v365 = vpack.c.b16 %v356, %v355
      %v366 = vpack.c.b16 %v358, %v357
      %vm367 = vcmask 31744
      %v369 = vsel %vm367, %v359, 0
      %v372 = vsel %vm367, %v360, 0
      %v375 = vsel %vm367, %v361, 0
      %v378 = vsel %vm367, %v362, 0
      %v381 = vsel %vm367, %v363, 0
      %v384 = vsel %vm367, %v364, 0
      %v387 = vsel %vm367, %v365, 0
      %v390 = vsel %vm367, %v366, 0
      %vm392 = vcmask 1041408
      %v394 = vsel %vm392, %v326, 0
      %396 = vmatpush.bf16.msra.mxu0 0
      %397 = vmatpush.bf16.msra.mxu0 0
      %398 = vmatpush.bf16.msra.mxu0 0
      %399 = vmatpush.bf16.msra.mxu0 0
      %400 = vmatpush.bf16.msra.mxu0 0
      %401 = vmatpush.bf16.msra.mxu0 0
      %402 = vmatpush.bf16.msra.mxu0 0
      %403 = vmatpush.bf16.msra.mxu0 %v394
      %404 = vmatmul.bf16.gmra.mxu0 %v369
      %v405 = vpop.f32.mrf.mxu0
      %v406 = vadd.f32 0.0, %v405
      %v407 = vpop.f32.mrf.mxu0
      %v408 = vadd.f32 0.0, %v407
      %409 = vmatmul.bf16.gmra.mxu0 %v372
      %v410 = vpop.f32.mrf.mxu0
      %v411 = vadd.f32 0.0, %v410
      %v412 = vpop.f32.mrf.mxu0
      %v413 = vadd.f32 0.0, %v412
      %414 = vmatmul.bf16.gmra.mxu0 %v375
      %v415 = vpop.f32.mrf.mxu0
      %v416 = vadd.f32 0.0, %v415
      %v417 = vpop.f32.mrf.mxu0
      %v418 = vadd.f32 0.0, %v417
      %419 = vmatmul.bf16.gmra.mxu0 %v378
      %v420 = vpop.f32.mrf.mxu0
      %v421 = vadd.f32 0.0, %v420
      %v422 = vpop.f32.mrf.mxu0
      %v423 = vadd.f32 0.0, %v422
      %424 = vmatmul.bf16.gmra.mxu0 %v381
      %v425 = vpop.f32.mrf.mxu0
      %v426 = vadd.f32 0.0, %v425
      %v427 = vpop.f32.mrf.mxu0
      %v428 = vadd.f32 0.0, %v427
      %429 = vmatmul.bf16.gmra.mxu0 %v384
      %v430 = vpop.f32.mrf.mxu0
      %v431 = vadd.f32 0.0, %v430
      %v432 = vpop.f32.mrf.mxu0
      %v433 = vadd.f32 0.0, %v432
      %434 = vmatmul.bf16.gmra.mxu0 %v387
      %v435 = vpop.f32.mrf.mxu0
      %v436 = vadd.f32 0.0, %v435
      %v437 = vpop.f32.mrf.mxu0
      %v438 = vadd.f32 0.0, %v437
      %439 = vmatmul.bf16.gmra.mxu0 %v390
      %v440 = vpop.f32.mrf.mxu0
      %v441 = vadd.f32 0.0, %v440
      %v442 = vpop.f32.mrf.mxu0
      %v443 = vadd.f32 0.0, %v442
      %444 = vdwg.mxu0
      %v445 = vadd.f32 %v294, %v406
      %v446 = vadd.f32 %v295, %v408
      %v447 = vadd.f32 %v296, %v411
      %v448 = vadd.f32 %v297, %v413
      %v449 = vadd.f32 %v298, %v416
      %v450 = vadd.f32 %v299, %v418
      %v451 = vadd.f32 %v300, %v421
      %v452 = vadd.f32 %v301, %v423
      %v453 = vadd.f32 %v302, %v426
      %v454 = vadd.f32 %v303, %v428
      %v455 = vadd.f32 %v304, %v431
      %v456 = vadd.f32 %v305, %v433
      %v457 = vadd.f32 %v306, %v436
      %v458 = vadd.f32 %v307, %v438
      %v459 = vadd.f32 %v308, %v441
      %v460 = vadd.f32 %v309, %v443
      %461 = vst.msk [vmem:[%s271] sm:$0xff] %vm367, %v445
      %462 = vst.msk [vmem:[%s271 + $0x8] sm:$0xff] %vm367, %v446
      %463 = vst.msk [vmem:[%s271 + $0x10] sm:$0xff] %vm367, %v447
      %464 = vst.msk [vmem:[%s271 + $0x18] sm:$0xff] %vm367, %v448
      %465 = vst.msk [vmem:[%s271 + $0x20] sm:$0xff] %vm367, %v449
      %466 = vst.msk [vmem:[%s271 + $0x28] sm:$0xff] %vm367, %v450
      %467 = vst.msk [vmem:[%s271 + $0x30] sm:$0xff] %vm367, %v451
      %468 = vst.msk [vmem:[%s271 + $0x38] sm:$0xff] %vm367, %v452
      %469 = vst.msk [vmem:[%s271 + $0x40] sm:$0xff] %vm367, %v453
      %470 = vst.msk [vmem:[%s271 + $0x48] sm:$0xff] %vm367, %v454
      %471 = vst.msk [vmem:[%s271 + $0x50] sm:$0xff] %vm367, %v455
      %472 = vst.msk [vmem:[%s271 + $0x58] sm:$0xff] %vm367, %v456
      %473 = vst.msk [vmem:[%s271 + $0x60] sm:$0xff] %vm367, %v457
      %474 = vst.msk [vmem:[%s271 + $0x68] sm:$0xff] %vm367, %v458
      %475 = vst.msk [vmem:[%s271 + $0x70] sm:$0xff] %vm367, %v459
      %476 = vst.msk [vmem:[%s271 + $0x78] sm:$0xff] %vm367, %v460
      %s477 = smul.u32 16, %s20
      %p478 = scmp.lt.s32.totalorder %s19, 1
      %s479 = scalar_select %p478, %s19, 1
      %p480 = scmp.lt.s32.totalorder %s477, 31
      %s481 = scalar_select %p480, %s477, 31
      %s482 = smul.addr %s479, 32
      %s483 = sadd.s32 %s481, %s482
      %s484 = smul.addr %s483, 8
      %s485 = scalar_lea.vmem %s4, %s484
      // Predicated region
      $region37: #{self_att_2d.5} parent=35 // pred_check
        %p486 = pneg %p145
      $region38: #{self_att_2d.5} parent=35 // pred_check_branch
        %488 = sbr.rel (%p486) target = $region40
      $region39: #{self_att_2d.5} parent=35 // pred_region
        %s489 = smul.u32 16, %s20
      $region40: #{self_att_2d.5} parent=35 // pred_fallthru
        _
    $region36: #{self_att_2d.5} parent=5 // pred_fallthru
      _
    %p490 = scmp.le.s32.totalorder 2, %s10
    // Predicated region
    $region41: #{self_att_2d.5} parent=5 // pred_check
      %p491 = pneg %p490
    $region42: #{self_att_2d.5} parent=5 // pred_check_branch
      %493 = sbr.rel (%p491) target = $region44
    $region43: #{self_att_2d.5} parent=5 // pred_region
      %s494 = ssub.s32 %s10, 2
      // Predicated region
      $region45: #{self_att_2d.5} parent=43 // pred_check
        %p495 = pneg %p151
      $region46: #{self_att_2d.5} parent=43 // pred_check_branch
        %497 = sbr.rel (%p495) target = $region48
      $region47: #{self_att_2d.5} parent=43 // pred_region
        %s498 = smul.u32 16, %s22
        %p499 = scmp.lt.s32.totalorder %s21, 1
        %s500 = scalar_select %p499, %s21, 1
        %p501 = scmp.lt.s32.totalorder %s498, 31
        %s502 = scalar_select %p501, %s498, 31
        %s503 = smul.addr %s500, 32
        %s504 = sadd.s32 %s502, %s503
        %s505 = smul.addr %s504, 8
        %s506 = scalar_lea.vmem %s4, %s505
      $region48: #{self_att_2d.5} parent=43 // pred_fallthru
        _
    $region44: #{self_att_2d.5} parent=5 // pred_fallthru
      _
  $region6: #{self_att_2d.5} parent=0 // loop_footer
    %s14 = sadd.s32 1, %s10
  $region7: #{self_att_2d.5} parent=0 // loop_footer_branch
    %9 = sbr.rel target = $region3
  $region8: #{self_att_2d.5} parent=0 // loop_exit
    _

// kernel: self_att_2d.4
$region0: #{self_att_2d.4}
  #allocation0 [shape = 'u32[]', space=smem, size = 0x4, offset = 0x4, fixed_abs, tag = 'smem constant byte address 0x4 - core index']
  #allocation1 [shape = 'u32[72,128]{1,0:T(1,128)}', space=vmem, size = 0x9000, scoped, tag = 'internal scratch']
  #allocation2 [shape = 'f32[128,1]{1,0:T(8,128)}', space=vmem, size = 0x10000, scoped, tag = 'scratch operand']
  #allocation3 [shape = 'f32[128,1]{1,0:T(8,128)}', space=vmem, size = 0x10000, scoped, tag = 'scratch operand']
  #allocation4 [shape = 'f32[128,2]{1,0:T(8,128)}', space=vmem, size = 0x10000, scoped, tag = 'scratch operand']
  %s0 = inlined_call_operand.vmem [shape: bf16[2,2,256,2], index: 0, kind: input, shape index: {}]
  %s1 = inlined_call_operand.vmem [shape: bf16[2,2,2,256], index: 1, kind: input, shape index: {}]
  %s2 = inlined_call_operand.vmem [shape: bf16[2,2,256,2], index: 2, kind: input, shape index: {}]
  %s3 = inlined_call_operand.vmem [shape: bf16[2,2,256,2], index: 3, kind: output, shape index: {}]
  %s4 = sld [smem:[#allocation0]]
  $region53: #{self_att_2d.4} parent=0
    _
  %s6 = ssub.s32 1, %s4
  %s7 = scalar_select 0, %s6, %s4
  loop: start=0, step=1, limit=18
  $region2: #{self_att_2d.4} parent=0 // loop_pre_header
    _
  $region3: #{self_att_2d.4} parent=0 // loop_header
    %s9 = sphi 0, %s13
    %p10 = scmp.ge.s32.totalorder %s9, 18
    %s16 = sphi 0, %s42
    %s17 = sphi 0, %s38
    %s18 = sphi 0, %s34
    %s19 = sphi 0, %s30
    %s20 = sphi 0, %s16
    %s21 = sphi 0, %s17
    %s22 = sphi 0, %s18
    %s23 = sphi 0, %s19
    %s24 = sphi 0, %s20
    %s25 = sphi 0, %s21
    %s26 = sphi 0, %s22
    %s27 = sphi 0, %s23
    %s49 = sphi 0, %s51
    %s52 = sphi 0, %s49
    %s53 = sphi 0, %s52
    %s69 = sphi 0, %s53
    %s79 = sphi 0, %s81
    %s82 = sphi 0, %s79
    %s83 = sphi 0, %s82
    %s99 = sphi 0, %s83
    %s109 = sphi 0, %s111
    %s112 = sphi 0, %s109
    %s113 = sphi 0, %s112
    %s129 = sphi 0, %s113
    %s139 = sphi 0, %s141
    %s142 = sphi 0, %s139
    %s143 = sphi 0, %s142
    %s159 = sphi 0, %s143
  $region4: #{self_att_2d.4} parent=0 // loop_header_branch
    %12 = sbr.rel (%p10) target = $region8
  $region5: #{self_att_2d.4} parent=0 // loop_body
    %s14 = ssub.s32 %s9, 1
    %s15 = ssub.s32 %s9, 2
    %s28 = sadd.s32 1, %s19
    %p29 = scmp.ge.s32.totalorder %s28, 2
    %s30 = scalar_select %p29, 0, %s28
    %s31 = sadd.s32 1, %s18
    %s32 = scalar_select %p29, %s31, %s18
    %p33 = scmp.ge.s32.totalorder %s32, 2
    %s34 = scalar_select %p33, 0, %s32
    %s35 = sadd.s32 1, %s17
    %s36 = scalar_select %p33, %s35, %s17
    %p37 = scmp.ge.s32.totalorder %s36, 2
    %s38 = scalar_select %p37, 0, %s36
    %s39 = sadd.s32 1, %s16
    %s40 = scalar_select %p37, %s39, %s16
    %p41 = scmp.ge.s32.totalorder %s40, 2
    %s42 = scalar_select %p41, 0, %s40
    %s43 = ssub.s32 %s16, %s42
    %s44 = ssub.s32 %s17, %s38
    %s45 = sor.u32 %s43, %s44
    %s46 = ssub.s32 %s18, %s34
    %s47 = sor.u32 %s45, %s46
    %p48 = scmp.eq.s32.totalorder %s47, 0
    %s50 = sadd.s32 %s49, 1
    %s51 = scalar_select %p48, %s49, %s50
    %p54 = pneg %p48
    %p55 = scmp.eq.s32.totalorder %s9, 15
    %p56 = por %p54, %p55
    %p57 = scmp.ne.s32.totalorder %s49, %s52
    %p58 = scmp.eq.s32.totalorder %s9, 0
    %p59 = por %p57, %p58
    %p60 = scmp.ne.s32.totalorder %s49, %s52
    %p61 = scmp.eq.s32.totalorder %s14, 15
    %p62 = por %p60, %p61
    %p63 = scmp.ne.s32.totalorder %s52, %s53
    %p64 = scmp.eq.s32.totalorder %s14, 0
    %p65 = por %p63, %p64
    %p66 = scmp.ne.s32.totalorder %s52, %s53
    %p67 = scmp.eq.s32.totalorder %s15, 15
    %p68 = por %p66, %p67
    %p70 = scmp.ne.s32.totalorder %s53, %s69
    %p71 = scmp.eq.s32.totalorder %s15, 0
    %p72 = por %p70, %p71
    %s73 = ssub.s32 %s16, %s42
    %s74 = ssub.s32 %s17, %s38
    %s75 = sor.u32 %s73, %s74
    %s76 = ssub.s32 %s19, %s30
    %s77 = sor.u32 %s75, %s76
    %p78 = scmp.eq.s32.totalorder %s77, 0
    %s80 = sadd.s32 %s79, 1
    %s81 = scalar_select %p78, %s79, %s80
    %p84 = pneg %p78
    %p85 = scmp.eq.s32.totalorder %s9, 15
    %p86 = por %p84, %p85
    %p87 = scmp.ne.s32.totalorder %s79, %s82
    %p88 = scmp.eq.s32.totalorder %s9, 0
    %p89 = por %p87, %p88
    %p90 = scmp.ne.s32.totalorder %s79, %s82
    %p91 = scmp.eq.s32.totalorder %s14, 15
    %p92 = por %p90, %p91
    %p93 = scmp.ne.s32.totalorder %s82, %s83
    %p94 = scmp.eq.s32.totalorder %s14, 0
    %p95 = por %p93, %p94
    %p96 = scmp.ne.s32.totalorder %s82, %s83
    %p97 = scmp.eq.s32.totalorder %s15, 15
    %p98 = por %p96, %p97
    %p100 = scmp.ne.s32.totalorder %s83, %s99
    %p101 = scmp.eq.s32.totalorder %s15, 0
    %p102 = por %p100, %p101
    %s103 = ssub.s32 %s16, %s42
    %s104 = ssub.s32 %s17, %s38
    %s105 = sor.u32 %s103, %s104
    %s106 = ssub.s32 %s19, %s30
    %s107 = sor.u32 %s105, %s106
    %p108 = scmp.eq.s32.totalorder %s107, 0
    %s110 = sadd.s32 %s109, 1
    %s111 = scalar_select %p108, %s109, %s110
    %p114 = pneg %p108
    %p115 = scmp.eq.s32.totalorder %s9, 15
    %p116 = por %p114, %p115
    %p117 = scmp.ne.s32.totalorder %s109, %s112
    %p118 = scmp.eq.s32.totalorder %s9, 0
    %p119 = por %p117, %p118
    %p120 = scmp.ne.s32.totalorder %s109, %s112
    %p121 = scmp.eq.s32.totalorder %s14, 15
    %p122 = por %p120, %p121
    %p123 = scmp.ne.s32.totalorder %s112, %s113
    %p124 = scmp.eq.s32.totalorder %s14, 0
    %p125 = por %p123, %p124
    %p126 = scmp.ne.s32.totalorder %s112, %s113
    %p127 = scmp.eq.s32.totalorder %s15, 15
    %p128 = por %p126, %p127
    %p130 = scmp.ne.s32.totalorder %s113, %s129
    %p131 = scmp.eq.s32.totalorder %s15, 0
    %p132 = por %p130, %p131
    %s133 = ssub.s32 %s16, %s42
    %s134 = ssub.s32 %s17, %s38
    %s135 = sor.u32 %s133, %s134
    %s136 = ssub.s32 %s18, %s34
    %s137 = sor.u32 %s135, %s136
    %p138 = scmp.eq.s32.totalorder %s137, 0
    %s140 = sadd.s32 %s139, 1
    %s141 = scalar_select %p138, %s139, %s140
    %p144 = pneg %p138
    %p145 = scmp.eq.s32.totalorder %s9, 15
    %p146 = por %p144, %p145
    %p147 = scmp.ne.s32.totalorder %s139, %s142
    %p148 = scmp.eq.s32.totalorder %s9, 0
    %p149 = por %p147, %p148
    %p150 = scmp.ne.s32.totalorder %s139, %s142
    %p151 = scmp.eq.s32.totalorder %s14, 15
    %p152 = por %p150, %p151
    %p153 = scmp.ne.s32.totalorder %s142, %s143
    %p154 = scmp.eq.s32.totalorder %s14, 0
    %p155 = por %p153, %p154
    %p156 = scmp.ne.s32.totalorder %s142, %s143
    %p157 = scmp.eq.s32.totalorder %s15, 15
    %p158 = por %p156, %p157
    %p160 = scmp.ne.s32.totalorder %s143, %s159
    %p161 = scmp.eq.s32.totalorder %s15, 0
    %p162 = por %p160, %p161
    %p163 = scmp.le.s32.totalorder 1, %s9
    %p164 = scmp.lt.s32.totalorder %s9, 17
    %p165 = pnand %p163, %p164
    %p166 = pneg %p165
    // Predicated region
    $region9: #{self_att_2d.4} parent=5 // pred_check
      _
    $region10: #{self_att_2d.4} parent=5 // pred_check_branch
      %168 = sbr.rel (%p165) target = $region12
    $region11: #{self_att_2d.4} parent=5 // pred_region
      %s169 = ssub.s32 %s9, 1
    $region12: #{self_att_2d.4} parent=5 // pred_fallthru
      _
    %p170 = scmp.lt.s32.totalorder %s9, 16
    // Predicated region
    $region13: #{self_att_2d.4} parent=5 // pred_check
      %p171 = pneg %p170
    $region14: #{self_att_2d.4} parent=5 // pred_check_branch
      %173 = sbr.rel (%p171) target = $region16
    $region15: #{self_att_2d.4} parent=5 // pred_region
      // Predicated region
      $region17: #{self_att_2d.4} parent=15 // pred_check
        %p174 = pneg %p59
      $region18: #{self_att_2d.4} parent=15 // pred_check_branch
        %176 = sbr.rel (%p174) target = $region20
      $region19: #{self_att_2d.4} parent=15 // pred_region
        %s177 = smul.u32 16, %s18
        %p178 = scmp.lt.s32.totalorder %s16, 1
        %s179 = scalar_select %p178, %s16, 1
        %p180 = scmp.lt.s32.totalorder %s17, 1
        %s181 = scalar_select %p180, %s17, 1
        %p182 = scmp.lt.s32.totalorder %s177, 31
        %s183 = scalar_select %p182, %s177, 31
        %s184 = smul.addr %s181, 32
        %s185 = sadd.s32 %s183, %s184
        %s186 = smul.addr %s179, 64
        %s187 = sadd.s32 %s185, %s186
        %s188 = smul.addr %s187, 4
        %s189 = scalar_lea.vmem %s0, %s188
        %s190 = smul.u32 16, %s18
      $region20: #{self_att_2d.4} parent=15 // pred_fallthru
        _
      // Predicated region
      $region21: #{self_att_2d.4} parent=15 // pred_check
        %p191 = pneg %p89
      $region22: #{self_att_2d.4} parent=15 // pred_check_branch
        %193 = sbr.rel (%p191) target = $region24
      $region23: #{self_att_2d.4} parent=15 // pred_region
        %p194 = scmp.lt.s32.totalorder %s16, 1
        %s195 = scalar_select %p194, %s16, 1
        %p196 = scmp.lt.s32.totalorder %s17, 1
        %s197 = scalar_select %p196, %s17, 1
        %p198 = scmp.lt.s32.totalorder %s19, 1
        %s199 = scalar_select %p198, %s19, 1
        %s200 = smul.addr %s197, 2
        %s201 = sadd.s32 %s199, %s200
        %s202 = smul.addr %s195, 4
        %s203 = sadd.s32 %s201, %s202
        %s204 = scalar_lea.vmem %s1, %s203
      $region24: #{self_att_2d.4} parent=15 // pred_fallthru
        _
      // Predicated region
      $region25: #{self_att_2d.4} parent=15 // pred_check
        %p205 = pneg %p119
      $region26: #{self_att_2d.4} parent=15 // pred_check_branch
        %207 = sbr.rel (%p205) target = $region28
      $region27: #{self_att_2d.4} parent=15 // pred_region
        %s208 = smul.u32 16, %s19
        %p209 = scmp.lt.s32.totalorder %s16, 1
        %s210 = scalar_select %p209, %s16, 1
        %p211 = scmp.lt.s32.totalorder %s17, 1
        %s212 = scalar_select %p211, %s17, 1
        %p213 = scmp.lt.s32.totalorder %s208, 31
        %s214 = scalar_select %p213, %s208, 31
        %s215 = smul.addr %s212, 32
        %s216 = sadd.s32 %s214, %s215
        %s217 = smul.addr %s210, 64
        %s218 = sadd.s32 %s216, %s217
        %s219 = smul.addr %s218, 4
        %s220 = scalar_lea.vmem %s2, %s219
        %s221 = smul.u32 16, %s19
      $region28: #{self_att_2d.4} parent=15 // pred_fallthru
        _
    $region16: #{self_att_2d.4} parent=5 // pred_fallthru
      _
    %p222 = scmp.le.s32.totalorder 1, %s9
    %p223 = scmp.lt.s32.totalorder %s9, 17
    %p224 = pnand %p222, %p223
    %p225 = pneg %p224
    // Predicated region
    $region29: #{self_att_2d.4} parent=5 // pred_check
      _
    $region30: #{self_att_2d.4} parent=5 // pred_check_branch
      %227 = sbr.rel (%p224) target = $region32
    $region31: #{self_att_2d.4} parent=5 // pred_region
      %s228 = ssub.s32 %s9, 1
      %s229 = smul.u32 16, %s22
      %p230 = scmp.lt.s32.totalorder %s20, 1
      %s231 = scalar_select %p230, %s20, 1
      %p232 = scmp.lt.s32.totalorder %s21, 1
      %s233 = scalar_select %p232, %s21, 1
      %p234 = scmp.lt.s32.totalorder %s229, 31
      %s235 = scalar_select %p234, %s229, 31
      %s236 = smul.addr %s233, 32
      %s237 = sadd.s32 %s235, %s236
      %s238 = smul.addr %s231, 64
      %s239 = sadd.s32 %s237, %s238
      %s240 = smul.addr %s239, 4
      %s241 = scalar_lea.vmem %s0, %s240
      %p242 = pneg %p65
      %p243 = pneg %p62
      %p244 = scmp.lt.s32.totalorder %s20, 1
      %s245 = scalar_select %p244, %s20, 1
      %p246 = scmp.lt.s32.totalorder %s21, 1
      %s247 = scalar_select %p246, %s21, 1
      %p248 = scmp.lt.s32.totalorder %s23, 1
      %s249 = scalar_select %p248, %s23, 1
      %s250 = smul.addr %s247, 2
      %s251 = sadd.s32 %s249, %s250
      %s252 = smul.addr %s245, 4
      %s253 = sadd.s32 %s251, %s252
      %s254 = scalar_lea.vmem %s1, %s253
      %p255 = pneg %p95
      %p256 = pneg %p92
      %s257 = smul.u32 16, %s23
      %p258 = scmp.lt.s32.totalorder %s20, 1
      %s259 = scalar_select %p258, %s20, 1
      %p260 = scmp.lt.s32.totalorder %s21, 1
      %s261 = scalar_select %p260, %s21, 1
      %p262 = scmp.lt.s32.totalorder %s257, 31
      %s263 = scalar_select %p262, %s257, 31
      %s264 = smul.addr %s261, 32
      %s265 = sadd.s32 %s263, %s264
      %s266 = smul.addr %s259, 64
      %s267 = sadd.s32 %s265, %s266
      %s268 = smul.addr %s267, 4
      %s269 = scalar_lea.vmem %s2, %s268
      %p270 = pneg %p125
      %p271 = pneg %p122
      %p272 = pneg %p155
      %p273 = pneg %p152
      %s274 = smul.u32 16, %s22
      %p275 = scmp.lt.s32.totalorder %s20, 1
      %s276 = scalar_select %p275, %s20, 1
      %p277 = scmp.lt.s32.totalorder %s21, 1
      %s278 = scalar_select %p277, %s21, 1
      %p279 = scmp.lt.s32.totalorder %s274, 31
      %s280 = scalar_select %p279, %s274, 31
      %s281 = smul.addr %s278, 32
      %s282 = sadd.s32 %s280, %s281
      %s283 = smul.addr %s276, 64
      %s284 = sadd.s32 %s282, %s283
      %s285 = smul.addr %s284, 4
      %s286 = scalar_lea.vmem %s3, %s285
      %s287 = smul.u32 16, %s22
      %p288 = scmp.lt.s32.totalorder %s20, 1
      %s289 = scalar_select %p288, %s20, 1
      %p290 = scmp.lt.s32.totalorder %s21, 1
      %s291 = scalar_select %p290, %s21, 1
      %p292 = scmp.lt.s32.totalorder %s287, 31
      %s293 = scalar_select %p292, %s287, 31
      %s294 = smul.addr %s291, 32
      %s295 = sadd.s32 %s293, %s294
      %s296 = smul.addr %s289, 64
      %s297 = sadd.s32 %s295, %s296
      %s298 = smul.addr %s297, 4
      %s299 = scalar_lea.vmem %s0, %s298
      %s300 = smul.u32 16, %s22
      %p301 = scmp.lt.s32.totalorder %s20, 1
      %s302 = scalar_select %p301, %s20, 1
      %p303 = scmp.lt.s32.totalorder %s21, 1
      %s304 = scalar_select %p303, %s21, 1
      %p305 = scmp.lt.s32.totalorder %s23, 1
      %s306 = scalar_select %p305, %s23, 1
      %s307 = smul.addr %s304, 2
      %s308 = sadd.s32 %s306, %s307
      %s309 = smul.addr %s302, 4
      %s310 = sadd.s32 %s308, %s309
      %s311 = scalar_lea.vmem %s1, %s310
      %s312 = smul.u32 16, %s23
      %p313 = scmp.lt.s32.totalorder %s20, 1
      %s314 = scalar_select %p313, %s20, 1
      %p315 = scmp.lt.s32.totalorder %s21, 1
      %s316 = scalar_select %p315, %s21, 1
      %p317 = scmp.lt.s32.totalorder %s312, 31
      %s318 = scalar_select %p317, %s312, 31
      %s319 = smul.addr %s316, 32
      %s320 = sadd.s32 %s318, %s319
      %s321 = smul.addr %s314, 64
      %s322 = sadd.s32 %s320, %s321
      %s323 = smul.addr %s322, 4
      %s324 = scalar_lea.vmem %s2, %s323
      %s325 = smul.u32 16, %s23
      %s326 = smul.u32 16, %s22
      %p327 = scmp.lt.s32.totalorder %s20, 1
      %s328 = scalar_select %p327, %s20, 1
      %p329 = scmp.lt.s32.totalorder %s21, 1
      %s330 = scalar_select %p329, %s21, 1
      %p331 = scmp.lt.s32.totalorder %s326, 31
      %s332 = scalar_select %p331, %s326, 31
      %s333 = smul.addr %s330, 32
      %s334 = sadd.s32 %s332, %s333
      %s335 = smul.addr %s328, 64
      %s336 = sadd.s32 %s334, %s335
      %s337 = smul.addr %s336, 4
      %s338 = scalar_lea.vmem %s3, %s337
      %s339 = smul.u32 16, %s22
      %p341 = scmp.eq.s32.totalorder %s23, 0
      // Predicated region
      $region33: #{self_att_2d.4} parent=31 // pred_check
        %p342 = pneg %p341
      $region34: #{self_att_2d.4} parent=31 // pred_check_branch
        %344 = sbr.rel (%p342) target = $region36
      $region35: #{self_att_2d.4} parent=31 // pred_region
        %vm345 = vcmask 7168
        %346 = vst.msk [vmem:[#allocation2] sm:$0xff] %vm345, -inf
        %347 = vst.msk [vmem:[#allocation2 + $0x8] sm:$0xff] %vm345, -inf
        %348 = vst.msk [vmem:[#allocation2 + $0x10] sm:$0xff] %vm345, -inf
        %349 = vst.msk [vmem:[#allocation2 + $0x18] sm:$0xff] %vm345, -inf
        %350 = vst.msk [vmem:[#allocation2 + $0x20] sm:$0xff] %vm345, -inf
        %351 = vst.msk [vmem:[#allocation2 + $0x28] sm:$0xff] %vm345, -inf
        %352 = vst.msk [vmem:[#allocation2 + $0x30] sm:$0xff] %vm345, -inf
        %353 = vst.msk [vmem:[#allocation2 + $0x38] sm:$0xff] %vm345, -inf
        %354 = vst.msk [vmem:[#allocation2 + $0x40] sm:$0xff] %vm345, -inf
        %355 = vst.msk [vmem:[#allocation2 + $0x48] sm:$0xff] %vm345, -inf
        %356 = vst.msk [vmem:[#allocation2 + $0x50] sm:$0xff] %vm345, -inf
        %357 = vst.msk [vmem:[#allocation2 + $0x58] sm:$0xff] %vm345, -inf
        %358 = vst.msk [vmem:[#allocation2 + $0x60] sm:$0xff] %vm345, -inf
        %359 = vst.msk [vmem:[#allocation2 + $0x68] sm:$0xff] %vm345, -inf
        %360 = vst.msk [vmem:[#allocation2 + $0x70] sm:$0xff] %vm345, -inf
        %361 = vst.msk [vmem:[#allocation2 + $0x78] sm:$0xff] %vm345, -inf
        %362 = vst.msk [vmem:[#allocation3] sm:$0xff] %vm345, 0.0
        %363 = vst.msk [vmem:[#allocation3 + $0x8] sm:$0xff] %vm345, 0.0
        %364 = vst.msk [vmem:[#allocation3 + $0x10] sm:$0xff] %vm345, 0.0
        %365 = vst.msk [vmem:[#allocation3 + $0x18] sm:$0xff] %vm345, 0.0
        %366 = vst.msk [vmem:[#allocation3 + $0x20] sm:$0xff] %vm345, 0.0
        %367 = vst.msk [vmem:[#allocation3 + $0x28] sm:$0xff] %vm345, 0.0
        %368 = vst.msk [vmem:[#allocation3 + $0x30] sm:$0xff] %vm345, 0.0
        %369 = vst.msk [vmem:[#allocation3 + $0x38] sm:$0xff] %vm345, 0.0
        %370 = vst.msk [vmem:[#allocation3 + $0x40] sm:$0xff] %vm345, 0.0
        %371 = vst.msk [vmem:[#allocation3 + $0x48] sm:$0xff] %vm345, 0.0
        %372 = vst.msk [vmem:[#allocation3 + $0x50] sm:$0xff] %vm345, 0.0
        %373 = vst.msk [vmem:[#allocation3 + $0x58] sm:$0xff] %vm345, 0.0
        %374 = vst.msk [vmem:[#allocation3 + $0x60] sm:$0xff] %vm345, 0.0
        %375 = vst.msk [vmem:[#allocation3 + $0x68] sm:$0xff] %vm345, 0.0
        %376 = vst.msk [vmem:[#allocation3 + $0x70] sm:$0xff] %vm345, 0.0
        %377 = vst.msk [vmem:[#allocation3 + $0x78] sm:$0xff] %vm345, 0.0
        %vm378 = vcmask 15360
        %379 = vst.msk [vmem:[#allocation4] sm:$0xff] %vm378, 0.0
        %380 = vst.msk [vmem:[#allocation4 + $0x8] sm:$0xff] %vm378, 0.0
        %381 = vst.msk [vmem:[#allocation4 + $0x10] sm:$0xff] %vm378, 0.0
        %382 = vst.msk [vmem:[#allocation4 + $0x18] sm:$0xff] %vm378, 0.0
        %383 = vst.msk [vmem:[#allocation4 + $0x20] sm:$0xff] %vm378, 0.0
        %384 = vst.msk [vmem:[#allocation4 + $0x28] sm:$0xff] %vm378, 0.0
        %385 = vst.msk [vmem:[#allocation4 + $0x30] sm:$0xff] %vm378, 0.0
        %386 = vst.msk [vmem:[#allocation4 + $0x38] sm:$0xff] %vm378, 0.0
        %387 = vst.msk [vmem:[#allocation4 + $0x40] sm:$0xff] %vm378, 0.0
        %388 = vst.msk [vmem:[#allocation4 + $0x48] sm:$0xff] %vm378, 0.0
        %389 = vst.msk [vmem:[#allocation4 + $0x50] sm:$0xff] %vm378, 0.0
        %390 = vst.msk [vmem:[#allocation4 + $0x58] sm:$0xff] %vm378, 0.0
        %391 = vst.msk [vmem:[#allocation4 + $0x60] sm:$0xff] %vm378, 0.0
        %392 = vst.msk [vmem:[#allocation4 + $0x68] sm:$0xff] %vm378, 0.0
        %393 = vst.msk [vmem:[#allocation4 + $0x70] sm:$0xff] %vm378, 0.0
        %394 = vst.msk [vmem:[#allocation4 + $0x78] sm:$0xff] %vm378, 0.0
      $region36: #{self_att_2d.4} parent=31 // pred_fallthru
        _
      %v395 = vld [vmem:[%s299] sm:$0xf]
      %v396 = vld [vmem:[%s299 + $0x4] sm:$0xf]
      %v397 = vld [vmem:[%s299 + $0x8] sm:$0xf]
      %v398 = vld [vmem:[%s299 + $0xc] sm:$0xf]
      %v399 = vld [vmem:[%s299 + $0x10] sm:$0xf]
      %v400 = vld [vmem:[%s299 + $0x14] sm:$0xf]
      %v401 = vld [vmem:[%s299 + $0x18] sm:$0xf]
      %v402 = vld [vmem:[%s299 + $0x1c] sm:$0xf]
      %v403 = vld [vmem:[%s299 + $0x20] sm:$0xf]
      %v404 = vld [vmem:[%s299 + $0x24] sm:$0xf]
      %v405 = vld [vmem:[%s299 + $0x28] sm:$0xf]
      %v406 = vld [vmem:[%s299 + $0x2c] sm:$0xf]
      %v407 = vld [vmem:[%s299 + $0x30] sm:$0xf]
      %v408 = vld [vmem:[%s299 + $0x34] sm:$0xf]
      %v409 = vld [vmem:[%s299 + $0x38] sm:$0xf]
      %v410 = vld [vmem:[%s299 + $0x3c] sm:$0xf]
      %v411 = vld [vmem:[%s311] sm:$0x1]
      %v428 = vunpack.c.l.b16 %v395
      %v429 = vunpack.c.l.b16 %v396
      %v430 = vunpack.c.l.b16 %v397
      %v431 = vunpack.c.l.b16 %v398
      %v432 = vunpack.c.l.b16 %v399
      %v433 = vunpack.c.l.b16 %v400
      %v434 = vunpack.c.l.b16 %v401
      %v435 = vunpack.c.l.b16 %v402
      %v436 = vunpack.c.l.b16 %v403
      %v437 = vunpack.c.l.b16 %v404
      %v438 = vunpack.c.l.b16 %v405
      %v439 = vunpack.c.l.b16 %v406
      %v440 = vunpack.c.l.b16 %v407
      %v441 = vunpack.c.l.b16 %v408
      %v442 = vunpack.c.l.b16 %v409
      %v443 = vunpack.c.l.b16 %v410
      %v444 = vpack.c.b16 %v429, %v428
      %v445 = vpack.c.b16 %v431, %v430
      %v446 = vpack.c.b16 %v433, %v432
      %v447 = vpack.c.b16 %v435, %v434
      %v448 = vpack.c.b16 %v437, %v436
      %v449 = vpack.c.b16 %v439, %v438
      %v450 = vpack.c.b16 %v441, %v440
      %v451 = vpack.c.b16 %v443, %v442
      %vm452 = vcmask 15360
      %v454 = vsel %vm452, %v444, 0
      %v457 = vsel %vm452, %v445, 0
      %v460 = vsel %vm452, %v446, 0
      %v463 = vsel %vm452, %v447, 0
      %v466 = vsel %vm452, %v448, 0
      %v469 = vsel %vm452, %v449, 0
      %v472 = vsel %vm452, %v450, 0
      %v475 = vsel %vm452, %v451, 0
      %vm477 = vcmask 1040384
      %v479 = vsel %vm477, %v411, 0
      %481 = vmatpush.bf16.msra.mxu0 0
      %482 = vmatpush.bf16.msra.mxu0 0
      %483 = vmatpush.bf16.msra.mxu0 0
      %484 = vmatpush.bf16.msra.mxu0 0
      %485 = vmatpush.bf16.msra.mxu0 0
      %486 = vmatpush.bf16.msra.mxu0 0
      %487 = vmatpush.bf16.msra.mxu0 0
      %488 = vmatpush.bf16.msra.mxu0 %v479
      %489 = vmatmul.bf16.gmra.mxu0 %v454
      %v490 = vpop.f32.mrf.mxu0
      %v491 = vadd.f32 0.0, %v490
      %v492 = vpop.f32.mrf.mxu0
      %v493 = vadd.f32 0.0, %v492
      %494 = vmatmul.bf16.gmra.mxu0 %v457
      %v495 = vpop.f32.mrf.mxu0
      %v496 = vadd.f32 0.0, %v495
      %v497 = vpop.f32.mrf.mxu0
      %v498 = vadd.f32 0.0, %v497
      %499 = vmatmul.bf16.gmra.mxu0 %v460
      %v500 = vpop.f32.mrf.mxu0
      %v501 = vadd.f32 0.0, %v500
      %v502 = vpop.f32.mrf.mxu0
      %v503 = vadd.f32 0.0, %v502
      %504 = vmatmul.bf16.gmra.mxu0 %v463
      %v505 = vpop.f32.mrf.mxu0
      %v506 = vadd.f32 0.0, %v505
      %v507 = vpop.f32.mrf.mxu0
      %v508 = vadd.f32 0.0, %v507
      %509 = vmatmul.bf16.gmra.mxu0 %v466
      %v510 = vpop.f32.mrf.mxu0
      %v511 = vadd.f32 0.0, %v510
      %v512 = vpop.f32.mrf.mxu0
      %v513 = vadd.f32 0.0, %v512
      %514 = vmatmul.bf16.gmra.mxu0 %v469
      %v515 = vpop.f32.mrf.mxu0
      %v516 = vadd.f32 0.0, %v515
      %v517 = vpop.f32.mrf.mxu0
      %v518 = vadd.f32 0.0, %v517
      %519 = vmatmul.bf16.gmra.mxu0 %v472
      %v520 = vpop.f32.mrf.mxu0
      %v521 = vadd.f32 0.0, %v520
      %v522 = vpop.f32.mrf.mxu0
      %v523 = vadd.f32 0.0, %v522
      %524 = vmatmul.bf16.gmra.mxu0 %v475
      %v525 = vpop.f32.mrf.mxu0
      %v526 = vadd.f32 0.0, %v525
      %v527 = vpop.f32.mrf.mxu0
      %v528 = vadd.f32 0.0, %v527
      %529 = vdwg.mxu0
      %v530 = vld [vmem:[#allocation2] sm:$0xff]
      %v531 = vld [vmem:[#allocation2 + $0x8] sm:$0xff]
      %v532 = vld [vmem:[#allocation2 + $0x10] sm:$0xff]
      %v533 = vld [vmem:[#allocation2 + $0x18] sm:$0xff]
      %v534 = vld [vmem:[#allocation2 + $0x20] sm:$0xff]
      %v535 = vld [vmem:[#allocation2 + $0x28] sm:$0xff]
      %v536 = vld [vmem:[#allocation2 + $0x30] sm:$0xff]
      %v537 = vld [vmem:[#allocation2 + $0x38] sm:$0xff]
      %v538 = vld [vmem:[#allocation2 + $0x40] sm:$0xff]
      %v539 = vld [vmem:[#allocation2 + $0x48] sm:$0xff]
      %v540 = vld [vmem:[#allocation2 + $0x50] sm:$0xff]
      %v541 = vld [vmem:[#allocation2 + $0x58] sm:$0xff]
      %v542 = vld [vmem:[#allocation2 + $0x60] sm:$0xff]
      %v543 = vld [vmem:[#allocation2 + $0x68] sm:$0xff]
      %v544 = vld [vmem:[#allocation2 + $0x70] sm:$0xff]
      %v545 = vld [vmem:[#allocation2 + $0x78] sm:$0xff]
      %546 = vmax.xlane.f32.xlu0 %v491
      %v547 = vpop.xlane.xlu0 %546
      %548 = vmax.xlane.f32.xlu0 %v493
      %v549 = vpop.xlane.xlu0 %548
      %550 = vmax.xlane.f32.xlu0 %v496
      %v551 = vpop.xlane.xlu0 %550
      %552 = vmax.xlane.f32.xlu0 %v498
      %v553 = vpop.xlane.xlu0 %552
      %554 = vmax.xlane.f32.xlu0 %v501
      %v555 = vpop.xlane.xlu0 %554
      %556 = vmax.xlane.f32.xlu0 %v503
      %v557 = vpop.xlane.xlu0 %556
      %558 = vmax.xlane.f32.xlu0 %v506
      %v559 = vpop.xlane.xlu0 %558
      %560 = vmax.xlane.f32.xlu0 %v508
      %v561 = vpop.xlane.xlu0 %560
      %562 = vmax.xlane.f32.xlu0 %v511
      %v563 = vpop.xlane.xlu0 %562
      %564 = vmax.xlane.f32.xlu0 %v513
      %v565 = vpop.xlane.xlu0 %564
      %566 = vmax.xlane.f32.xlu0 %v516
      %v567 = vpop.xlane.xlu0 %566
      %568 = vmax.xlane.f32.xlu0 %v518
      %v569 = vpop.xlane.xlu0 %568
      %570 = vmax.xlane.f32.xlu0 %v521
      %v571 = vpop.xlane.xlu0 %570
      %572 = vmax.xlane.f32.xlu0 %v523
      %v573 = vpop.xlane.xlu0 %572
      %574 = vmax.xlane.f32.xlu0 %v526
      %v575 = vpop.xlane.xlu0 %574
      %576 = vmax.xlane.f32.xlu0 %v528
      %v577 = vpop.xlane.xlu0 %576
      %v578 = vmax.f32 %v530, %v547
      %v579 = vmax.f32 %v531, %v549
      %v580 = vmax.f32 %v532, %v551
      %v581 = vmax.f32 %v533, %v553
      %v582 = vmax.f32 %v534, %v555
      %v583 = vmax.f32 %v535, %v557
      %v584 = vmax.f32 %v536, %v559
      %v585 = vmax.f32 %v537, %v561
      %v586 = vmax.f32 %v538, %v563
      %v587 = vmax.f32 %v539, %v565
      %v588 = vmax.f32 %v540, %v567
      %v589 = vmax.f32 %v541, %v569
      %v590 = vmax.f32 %v542, %v571
      %v591 = vmax.f32 %v543, %v573
      %v592 = vmax.f32 %v544, %v575
      %v593 = vmax.f32 %v545, %v577
      %v594 = vsub.f32 %v530, %v578
      %v595 = vsub.f32 %v531, %v579
      %v596 = vsub.f32 %v532, %v580
      %v597 = vsub.f32 %v533, %v581
      %v598 = vsub.f32 %v534, %v582
      %v599 = vsub.f32 %v535, %v583
      %v600 = vsub.f32 %v536, %v584
      %v601 = vsub.f32 %v537, %v585
      %v602 = vsub.f32 %v538, %v586
      %v603 = vsub.f32 %v539, %v587
      %v604 = vsub.f32 %v540, %v588
      %v605 = vsub.f32 %v541, %v589
      %v606 = vsub.f32 %v542, %v590
      %v607 = vsub.f32 %v543, %v591
      %v608 = vsub.f32 %v544, %v592
      %v609 = vsub.f32 %v545, %v593
      %v610 = vmul.f32 %v594, 1.442695
      %v611 = vpow.pop %v610
      %v612 = vmul.f32 %v595, 1.442695
      %v613 = vpow.pop %v612
      %v614 = vmul.f32 %v596, 1.442695
      %v615 = vpow.pop %v614
      %v616 = vmul.f32 %v597, 1.442695
      %v617 = vpow.pop %v616
      %v618 = vmul.f32 %v598, 1.442695
      %v619 = vpow.pop %v618
      %v620 = vmul.f32 %v599, 1.442695
      %v621 = vpow.pop %v620
      %v622 = vmul.f32 %v600, 1.442695
      %v623 = vpow.pop %v622
      %v624 = vmul.f32 %v601, 1.442695
      %v625 = vpow.pop %v624
      %v626 = vmul.f32 %v602, 1.442695
      %v627 = vpow.pop %v626
      %v628 = vmul.f32 %v603, 1.442695
      %v629 = vpow.pop %v628
      %v630 = vmul.f32 %v604, 1.442695
      %v631 = vpow.pop %v630
      %v632 = vmul.f32 %v605, 1.442695
      %v633 = vpow.pop %v632
      %v634 = vmul.f32 %v606, 1.442695
      %v635 = vpow.pop %v634
      %v636 = vmul.f32 %v607, 1.442695
      %v637 = vpow.pop %v636
      %v638 = vmul.f32 %v608, 1.442695
      %v639 = vpow.pop %v638
      %v640 = vmul.f32 %v609, 1.442695
      %v641 = vpow.pop %v640
      %643 = vset.pattern.permute.xlu0 0
      %644 = vperm.xlu0 %643, %v578
      %v645 = vpop.permute.xlu0 %644
      %648 = vset.pattern.permute.xlu0 0
      %649 = vperm.xlu0 %648, %v579
      %v650 = vpop.permute.xlu0 %649
      %653 = vset.pattern.permute.xlu0 0
      %654 = vperm.xlu0 %653, %v580
      %v655 = vpop.permute.xlu0 %654
      %658 = vset.pattern.permute.xlu0 0
      %659 = vperm.xlu0 %658, %v581
      %v660 = vpop.permute.xlu0 %659
      %663 = vset.pattern.permute.xlu0 0
      %664 = vperm.xlu0 %663, %v582
      %v665 = vpop.permute.xlu0 %664
      %668 = vset.pattern.permute.xlu0 0
      %669 = vperm.xlu0 %668, %v583
      %v670 = vpop.permute.xlu0 %669
      %673 = vset.pattern.permute.xlu0 0
      %674 = vperm.xlu0 %673, %v584
      %v675 = vpop.permute.xlu0 %674
      %678 = vset.pattern.permute.xlu0 0
      %679 = vperm.xlu0 %678, %v585
      %v680 = vpop.permute.xlu0 %679
      %683 = vset.pattern.permute.xlu0 0
      %684 = vperm.xlu0 %683, %v586
      %v685 = vpop.permute.xlu0 %684
      %688 = vset.pattern.permute.xlu0 0
      %689 = vperm.xlu0 %688, %v587
      %v690 = vpop.permute.xlu0 %689
      %693 = vset.pattern.permute.xlu0 0
      %694 = vperm.xlu0 %693, %v588
      %v695 = vpop.permute.xlu0 %694
      %698 = vset.pattern.permute.xlu0 0
      %699 = vperm.xlu0 %698, %v589
      %v700 = vpop.permute.xlu0 %699
      %703 = vset.pattern.permute.xlu0 0
      %704 = vperm.xlu0 %703, %v590
      %v705 = vpop.permute.xlu0 %704
      %708 = vset.pattern.permute.xlu0 0
      %709 = vperm.xlu0 %708, %v591
      %v710 = vpop.permute.xlu0 %709
      %713 = vset.pattern.permute.xlu0 0
      %714 = vperm.xlu0 %713, %v592
      %v715 = vpop.permute.xlu0 %714
      %718 = vset.pattern.permute.xlu0 0
      %719 = vperm.xlu0 %718, %v593
      %v720 = vpop.permute.xlu0 %719
      %v722 = vsub.f32 %v491, %v645
      %v723 = vsub.f32 %v493, %v650
      %v724 = vsub.f32 %v496, %v655
      %v725 = vsub.f32 %v498, %v660
      %v726 = vsub.f32 %v501, %v665
      %v727 = vsub.f32 %v503, %v670
      %v728 = vsub.f32 %v506, %v675
      %v729 = vsub.f32 %v508, %v680
      %v730 = vsub.f32 %v511, %v685
      %v731 = vsub.f32 %v513, %v690
      %v732 = vsub.f32 %v516, %v695
      %v733 = vsub.f32 %v518, %v700
      %v734 = vsub.f32 %v521, %v705
      %v735 = vsub.f32 %v523, %v710
      %v736 = vsub.f32 %v526, %v715
      %v737 = vsub.f32 %v528, %v720
      %v738 = vmul.f32 %v722, 1.442695
      %v739 = vpow.pop %v738
      %v740 = vmul.f32 %v723, 1.442695
      %v741 = vpow.pop %v740
      %v742 = vmul.f32 %v724, 1.442695
      %v743 = vpow.pop %v742
      %v744 = vmul.f32 %v725, 1.442695
      %v745 = vpow.pop %v744
      %v746 = vmul.f32 %v726, 1.442695
      %v747 = vpow.pop %v746
      %v748 = vmul.f32 %v727, 1.442695
      %v749 = vpow.pop %v748
      %v750 = vmul.f32 %v728, 1.442695
      %v751 = vpow.pop %v750
      %v752 = vmul.f32 %v729, 1.442695
      %v753 = vpow.pop %v752
      %v754 = vmul.f32 %v730, 1.442695
      %v755 = vpow.pop %v754
      %v756 = vmul.f32 %v731, 1.442695
      %v757 = vpow.pop %v756
      %v758 = vmul.f32 %v732, 1.442695
      %v759 = vpow.pop %v758
      %v760 = vmul.f32 %v733, 1.442695
      %v761 = vpow.pop %v760
      %v762 = vmul.f32 %v734, 1.442695
      %v763 = vpow.pop %v762
      %v764 = vmul.f32 %v735, 1.442695
      %v765 = vpow.pop %v764
      %v766 = vmul.f32 %v736, 1.442695
      %v767 = vpow.pop %v766
      %v768 = vmul.f32 %v737, 1.442695
      %v769 = vpow.pop %v768
      %v770 = vld [vmem:[#allocation3] sm:$0xff]
      %v771 = vld [vmem:[#allocation3 + $0x8] sm:$0xff]
      %v772 = vld [vmem:[#allocation3 + $0x10] sm:$0xff]
      %v773 = vld [vmem:[#allocation3 + $0x18] sm:$0xff]
      %v774 = vld [vmem:[#allocation3 + $0x20] sm:$0xff]
      %v775 = vld [vmem:[#allocation3 + $0x28] sm:$0xff]
      %v776 = vld [vmem:[#allocation3 + $0x30] sm:$0xff]
      %v777 = vld [vmem:[#allocation3 + $0x38] sm:$0xff]
      %v778 = vld [vmem:[#allocation3 + $0x40] sm:$0xff]
      %v779 = vld [vmem:[#allocation3 + $0x48] sm:$0xff]
      %v780 = vld [vmem:[#allocation3 + $0x50] sm:$0xff]
      %v781 = vld [vmem:[#allocation3 + $0x58] sm:$0xff]
      %v782 = vld [vmem:[#allocation3 + $0x60] sm:$0xff]
      %v783 = vld [vmem:[#allocation3 + $0x68] sm:$0xff]
      %v784 = vld [vmem:[#allocation3 + $0x70] sm:$0xff]
      %v785 = vld [vmem:[#allocation3 + $0x78] sm:$0xff]
      %v786 = vmul.f32 %v611, %v770
      %v787 = vmul.f32 %v613, %v771
      %v788 = vmul.f32 %v615, %v772
      %v789 = vmul.f32 %v617, %v773
      %v790 = vmul.f32 %v619, %v774
      %v791 = vmul.f32 %v621, %v775
      %v792 = vmul.f32 %v623, %v776
      %v793 = vmul.f32 %v625, %v777
      %v794 = vmul.f32 %v627, %v778
      %v795 = vmul.f32 %v629, %v779
      %v796 = vmul.f32 %v631, %v780
      %v797 = vmul.f32 %v633, %v781
      %v798 = vmul.f32 %v635, %v782
      %v799 = vmul.f32 %v637, %v783
      %v800 = vmul.f32 %v639, %v784
      %v801 = vmul.f32 %v641, %v785
      %802 = vadd.xlane.f32.xlu0 %v739
      %v803 = vpop.xlane.xlu0 %802
      %804 = vadd.xlane.f32.xlu0 %v741
      %v805 = vpop.xlane.xlu0 %804
      %806 = vadd.xlane.f32.xlu0 %v743
      %v807 = vpop.xlane.xlu0 %806
      %808 = vadd.xlane.f32.xlu0 %v745
      %v809 = vpop.xlane.xlu0 %808
      %810 = vadd.xlane.f32.xlu0 %v747
      %v811 = vpop.xlane.xlu0 %810
      %812 = vadd.xlane.f32.xlu0 %v749
      %v813 = vpop.xlane.xlu0 %812
      %814 = vadd.xlane.f32.xlu0 %v751
      %v815 = vpop.xlane.xlu0 %814
      %816 = vadd.xlane.f32.xlu0 %v753
      %v817 = vpop.xlane.xlu0 %816
      %818 = vadd.xlane.f32.xlu0 %v755
      %v819 = vpop.xlane.xlu0 %818
      %820 = vadd.xlane.f32.xlu0 %v757
      %v821 = vpop.xlane.xlu0 %820
      %822 = vadd.xlane.f32.xlu0 %v759
      %v823 = vpop.xlane.xlu0 %822
      %824 = vadd.xlane.f32.xlu0 %v761
      %v825 = vpop.xlane.xlu0 %824
      %826 = vadd.xlane.f32.xlu0 %v763
      %v827 = vpop.xlane.xlu0 %826
      %828 = vadd.xlane.f32.xlu0 %v765
      %v829 = vpop.xlane.xlu0 %828
      %830 = vadd.xlane.f32.xlu0 %v767
      %v831 = vpop.xlane.xlu0 %830
      %832 = vadd.xlane.f32.xlu0 %v769
      %v833 = vpop.xlane.xlu0 %832
      %v834 = vadd.f32 %v786, %v803
      %v835 = vadd.f32 %v787, %v805
      %v836 = vadd.f32 %v788, %v807
      %v837 = vadd.f32 %v789, %v809
      %v838 = vadd.f32 %v790, %v811
      %v839 = vadd.f32 %v791, %v813
      %v840 = vadd.f32 %v792, %v815
      %v841 = vadd.f32 %v793, %v817
      %v842 = vadd.f32 %v794, %v819
      %v843 = vadd.f32 %v795, %v821
      %v844 = vadd.f32 %v796, %v823
      %v845 = vadd.f32 %v797, %v825
      %v846 = vadd.f32 %v798, %v827
      %v847 = vadd.f32 %v799, %v829
      %v848 = vadd.f32 %v800, %v831
      %v849 = vadd.f32 %v801, %v833
      %vm850 = vcmask 7168
      %851 = vst.msk [vmem:[#allocation3] sm:$0xff] %vm850, %v834
      %852 = vst.msk [vmem:[#allocation3 + $0x8] sm:$0xff] %vm850, %v835
      %853 = vst.msk [vmem:[#allocation3 + $0x10] sm:$0xff] %vm850, %v836
      %854 = vst.msk [vmem:[#allocation3 + $0x18] sm:$0xff] %vm850, %v837
      %855 = vst.msk [vmem:[#allocation3 + $0x20] sm:$0xff] %vm850, %v838
      %856 = vst.msk [vmem:[#allocation3 + $0x28] sm:$0xff] %vm850, %v839
      %857 = vst.msk [vmem:[#allocation3 + $0x30] sm:$0xff] %vm850, %v840
      %858 = vst.msk [vmem:[#allocation3 + $0x38] sm:$0xff] %vm850, %v841
      %859 = vst.msk [vmem:[#allocation3 + $0x40] sm:$0xff] %vm850, %v842
      %860 = vst.msk [vmem:[#allocation3 + $0x48] sm:$0xff] %vm850, %v843
      %861 = vst.msk [vmem:[#allocation3 + $0x50] sm:$0xff] %vm850, %v844
      %862 = vst.msk [vmem:[#allocation3 + $0x58] sm:$0xff] %vm850, %v845
      %863 = vst.msk [vmem:[#allocation3 + $0x60] sm:$0xff] %vm850, %v846
      %864 = vst.msk [vmem:[#allocation3 + $0x68] sm:$0xff] %vm850, %v847
      %865 = vst.msk [vmem:[#allocation3 + $0x70] sm:$0xff] %vm850, %v848
      %866 = vst.msk [vmem:[#allocation3 + $0x78] sm:$0xff] %vm850, %v849
      %v867 = vld [vmem:[#allocation4] sm:$0xff]
      %v868 = vld [vmem:[#allocation4 + $0x8] sm:$0xff]
      %v869 = vld [vmem:[#allocation4 + $0x10] sm:$0xff]
      %v870 = vld [vmem:[#allocation4 + $0x18] sm:$0xff]
      %v871 = vld [vmem:[#allocation4 + $0x20] sm:$0xff]
      %v872 = vld [vmem:[#allocation4 + $0x28] sm:$0xff]
      %v873 = vld [vmem:[#allocation4 + $0x30] sm:$0xff]
      %v874 = vld [vmem:[#allocation4 + $0x38] sm:$0xff]
      %v875 = vld [vmem:[#allocation4 + $0x40] sm:$0xff]
      %v876 = vld [vmem:[#allocation4 + $0x48] sm:$0xff]
      %v877 = vld [vmem:[#allocation4 + $0x50] sm:$0xff]
      %v878 = vld [vmem:[#allocation4 + $0x58] sm:$0xff]
      %v879 = vld [vmem:[#allocation4 + $0x60] sm:$0xff]
      %v880 = vld [vmem:[#allocation4 + $0x68] sm:$0xff]
      %v881 = vld [vmem:[#allocation4 + $0x70] sm:$0xff]
      %v882 = vld [vmem:[#allocation4 + $0x78] sm:$0xff]
      %884 = vset.pattern.permute.xlu0 0
      %885 = vperm.xlu0 %884, %v611
      %v886 = vpop.permute.xlu0 %885
      %889 = vset.pattern.permute.xlu0 0
      %890 = vperm.xlu0 %889, %v613
      %v891 = vpop.permute.xlu0 %890
      %894 = vset.pattern.permute.xlu0 0
      %895 = vperm.xlu0 %894, %v615
      %v896 = vpop.permute.xlu0 %895
      %899 = vset.pattern.permute.xlu0 0
      %900 = vperm.xlu0 %899, %v617
      %v901 = vpop.permute.xlu0 %900
      %904 = vset.pattern.permute.xlu0 0
      %905 = vperm.xlu0 %904, %v619
      %v906 = vpop.permute.xlu0 %905
      %909 = vset.pattern.permute.xlu0 0
      %910 = vperm.xlu0 %909, %v621
      %v911 = vpop.permute.xlu0 %910
      %914 = vset.pattern.permute.xlu0 0
      %915 = vperm.xlu0 %914, %v623
      %v916 = vpop.permute.xlu0 %915
      %919 = vset.pattern.permute.xlu0 0
      %920 = vperm.xlu0 %919, %v625
      %v921 = vpop.permute.xlu0 %920
      %924 = vset.pattern.permute.xlu0 0
      %925 = vperm.xlu0 %924, %v627
      %v926 = vpop.permute.xlu0 %925
      %929 = vset.pattern.permute.xlu0 0
      %930 = vperm.xlu0 %929, %v629
      %v931 = vpop.permute.xlu0 %930
      %934 = vset.pattern.permute.xlu0 0
      %935 = vperm.xlu0 %934, %v631
      %v936 = vpop.permute.xlu0 %935
      %939 = vset.pattern.permute.xlu0 0
      %940 = vperm.xlu0 %939, %v633
      %v941 = vpop.permute.xlu0 %940
      %944 = vset.pattern.permute.xlu0 0
      %945 = vperm.xlu0 %944, %v635
      %v946 = vpop.permute.xlu0 %945
      %949 = vset.pattern.permute.xlu0 0
      %950 = vperm.xlu0 %949, %v637
      %v951 = vpop.permute.xlu0 %950
      %954 = vset.pattern.permute.xlu0 0
      %955 = vperm.xlu0 %954, %v639
      %v956 = vpop.permute.xlu0 %955
      %959 = vset.pattern.permute.xlu0 0
      %960 = vperm.xlu0 %959, %v641
      %v961 = vpop.permute.xlu0 %960
      %v963 = vmul.f32 %v886, %v867
      %v964 = vmul.f32 %v891, %v868
      %v965 = vmul.f32 %v896, %v869
      %v966 = vmul.f32 %v901, %v870
      %v967 = vmul.f32 %v906, %v871
      %v968 = vmul.f32 %v911, %v872
      %v969 = vmul.f32 %v916, %v873
      %v970 = vmul.f32 %v921, %v874
      %v971 = vmul.f32 %v926, %v875
      %v972 = vmul.f32 %v931, %v876
      %v973 = vmul.f32 %v936, %v877
      %v974 = vmul.f32 %v941, %v878
      %v975 = vmul.f32 %v946, %v879
      %v976 = vmul.f32 %v951, %v880
      %v977 = vmul.f32 %v956, %v881
      %v978 = vmul.f32 %v961, %v882
      %v979 = vpack.c.bf16 %v741, %v739
      %v980 = vpack.c.bf16 %v745, %v743
      %v981 = vpack.c.bf16 %v749, %v747
      %v982 = vpack.c.bf16 %v753, %v751
      %v983 = vpack.c.bf16 %v757, %v755
      %v984 = vpack.c.bf16 %v761, %v759
      %v985 = vpack.c.bf16 %v765, %v763
      %v986 = vpack.c.bf16 %v769, %v767
      %v987 = vld [vmem:[%s324] sm:$0xf]
      %v988 = vld [vmem:[%s324 + $0x4] sm:$0xf]
      %v989 = vld [vmem:[%s324 + $0x8] sm:$0xf]
      %v990 = vld [vmem:[%s324 + $0xc] sm:$0xf]
      %v991 = vld [vmem:[%s324 + $0x10] sm:$0xf]
      %v992 = vld [vmem:[%s324 + $0x14] sm:$0xf]
      %v993 = vld [vmem:[%s324 + $0x18] sm:$0xf]
      %v994 = vld [vmem:[%s324 + $0x1c] sm:$0xf]
      %v995 = vld [vmem:[%s324 + $0x20] sm:$0xf]
      %v996 = vld [vmem:[%s324 + $0x24] sm:$0xf]
      %v997 = vld [vmem:[%s324 + $0x28] sm:$0xf]
      %v998 = vld [vmem:[%s324 + $0x2c] sm:$0xf]
      %v999 = vld [vmem:[%s324 + $0x30] sm:$0xf]
      %v1000 = vld [vmem:[%s324 + $0x34] sm:$0xf]
      %v1001 = vld [vmem:[%s324 + $0x38] sm:$0xf]
      %v1002 = vld [vmem:[%s324 + $0x3c] sm:$0xf]
      %v1019 = vunpack.c.l.b16 %v987
      %v1020 = vunpack.c.l.b16 %v988
      %v1021 = vunpack.c.l.b16 %v989
      %v1022 = vunpack.c.l.b16 %v990
      %v1023 = vunpack.c.l.b16 %v991
      %v1024 = vunpack.c.l.b16 %v992
      %v1025 = vunpack.c.l.b16 %v993
      %v1026 = vunpack.c.l.b16 %v994
      %v1027 = vunpack.c.l.b16 %v995
      %v1028 = vunpack.c.l.b16 %v996
      %v1029 = vunpack.c.l.b16 %v997
      %v1030 = vunpack.c.l.b16 %v998
      %v1031 = vunpack.c.l.b16 %v999
      %v1032 = vunpack.c.l.b16 %v1000
      %v1033 = vunpack.c.l.b16 %v1001
      %v1034 = vunpack.c.l.b16 %v1002
      %v1035 = vpack.c.b16 %v1020, %v1019
      %v1036 = vpack.c.b16 %v1022, %v1021
      %v1037 = vpack.c.b16 %v1024, %v1023
      %v1038 = vpack.c.b16 %v1026, %v1025
      %v1039 = vpack.c.b16 %v1028, %v1027
      %v1040 = vpack.c.b16 %v1030, %v1029
      %v1041 = vpack.c.b16 %v1032, %v1031
      %v1042 = vpack.c.b16 %v1034, %v1033
      %1051 = vmatpush.bf16.msra.mxu0 %v1042
      %1052 = vmatpush.bf16.msra.mxu0 %v1041
      %1053 = vmatpush.bf16.msra.mxu0 %v1040
      %1054 = vmatpush.bf16.msra.mxu0 %v1039
      %1055 = vmatpush.bf16.msra.mxu0 %v1038
      %1056 = vmatpush.bf16.msra.mxu0 %v1037
      %1057 = vmatpush.bf16.msra.mxu0 %v1036
      %1058 = vmatpush.bf16.msra.mxu0 %v1035
      %1059 = vmatmul.bf16.gmra.mxu0 %v979
      %v1060 = vpop.f32.mrf.mxu0
      %v1061 = vadd.f32 0.0, %v1060
      %v1062 = vpop.f32.mrf.mxu0
      %v1063 = vadd.f32 0.0, %v1062
      %1064 = vmatmul.bf16.gmra.mxu0 %v980
      %v1065 = vpop.f32.mrf.mxu0
      %v1066 = vadd.f32 0.0, %v1065
      %v1067 = vpop.f32.mrf.mxu0
      %v1068 = vadd.f32 0.0, %v1067
      %1069 = vmatmul.bf16.gmra.mxu0 %v981
      %v1070 = vpop.f32.mrf.mxu0
      %v1071 = vadd.f32 0.0, %v1070
      %v1072 = vpop.f32.mrf.mxu0
      %v1073 = vadd.f32 0.0, %v1072
      %1074 = vmatmul.bf16.gmra.mxu0 %v982
      %v1075 = vpop.f32.mrf.mxu0
      %v1076 = vadd.f32 0.0, %v1075
      %v1077 = vpop.f32.mrf.mxu0
      %v1078 = vadd.f32 0.0, %v1077
      %1079 = vmatmul.bf16.gmra.mxu0 %v983
      %v1080 = vpop.f32.mrf.mxu0
      %v1081 = vadd.f32 0.0, %v1080
      %v1082 = vpop.f32.mrf.mxu0
      %v1083 = vadd.f32 0.0, %v1082
      %1084 = vmatmul.bf16.gmra.mxu0 %v984
      %v1085 = vpop.f32.mrf.mxu0
      %v1086 = vadd.f32 0.0, %v1085
      %v1087 = vpop.f32.mrf.mxu0
      %v1088 = vadd.f32 0.0, %v1087
      %1089 = vmatmul.bf16.gmra.mxu0 %v985
      %v1090 = vpop.f32.mrf.mxu0
      %v1091 = vadd.f32 0.0, %v1090
      %v1092 = vpop.f32.mrf.mxu0
      %v1093 = vadd.f32 0.0, %v1092
      %1094 = vmatmul.bf16.gmra.mxu0 %v986
      %v1095 = vpop.f32.mrf.mxu0
      %v1096 = vadd.f32 0.0, %v1095
      %v1097 = vpop.f32.mrf.mxu0
      %v1098 = vadd.f32 0.0, %v1097
      %1099 = vdwg.mxu0
      %v1100 = vadd.f32 %v963, %v1061
      %v1101 = vadd.f32 %v964, %v1063
      %v1102 = vadd.f32 %v965, %v1066
      %v1103 = vadd.f32 %v966, %v1068
      %v1104 = vadd.f32 %v967, %v1071
      %v1105 = vadd.f32 %v968, %v1073
      %v1106 = vadd.f32 %v969, %v1076
      %v1107 = vadd.f32 %v970, %v1078
      %v1108 = vadd.f32 %v971, %v1081
      %v1109 = vadd.f32 %v972, %v1083
      %v1110 = vadd.f32 %v973, %v1086
      %v1111 = vadd.f32 %v974, %v1088
      %v1112 = vadd.f32 %v975, %v1091
      %v1113 = vadd.f32 %v976, %v1093
      %v1114 = vadd.f32 %v977, %v1096
      %v1115 = vadd.f32 %v978, %v1098
      %1116 = vst.msk [vmem:[#allocation4] sm:$0xff] %vm452, %v1100
      %1117 = vst.msk [vmem:[#allocation4 + $0x8] sm:$0xff] %vm452, %v1101
      %1118 = vst.msk [vmem:[#allocation4 + $0x10] sm:$0xff] %vm452, %v1102
      %1119 = vst.msk [vmem:[#allocation4 + $0x18] sm:$0xff] %vm452, %v1103
      %1120 = vst.msk [vmem:[#allocation4 + $0x20] sm:$0xff] %vm452, %v1104
      %1121 = vst.msk [vmem:[#allocation4 + $0x28] sm:$0xff] %vm452, %v1105
      %1122 = vst.msk [vmem:[#allocation4 + $0x30] sm:$0xff] %vm452, %v1106
      %1123 = vst.msk [vmem:[#allocation4 + $0x38] sm:$0xff] %vm452, %v1107
      %1124 = vst.msk [vmem:[#allocation4 + $0x40] sm:$0xff] %vm452, %v1108
      %1125 = vst.msk [vmem:[#allocation4 + $0x48] sm:$0xff] %vm452, %v1109
      %1126 = vst.msk [vmem:[#allocation4 + $0x50] sm:$0xff] %vm452, %v1110
      %1127 = vst.msk [vmem:[#allocation4 + $0x58] sm:$0xff] %vm452, %v1111
      %1128 = vst.msk [vmem:[#allocation4 + $0x60] sm:$0xff] %vm452, %v1112
      %1129 = vst.msk [vmem:[#allocation4 + $0x68] sm:$0xff] %vm452, %v1113
      %1130 = vst.msk [vmem:[#allocation4 + $0x70] sm:$0xff] %vm452, %v1114
      %1131 = vst.msk [vmem:[#allocation4 + $0x78] sm:$0xff] %vm452, %v1115
      %1132 = vst.msk [vmem:[#allocation2] sm:$0xff] %vm850, %v578
      %1133 = vst.msk [vmem:[#allocation2 + $0x8] sm:$0xff] %vm850, %v579
      %1134 = vst.msk [vmem:[#allocation2 + $0x10] sm:$0xff] %vm850, %v580
      %1135 = vst.msk [vmem:[#allocation2 + $0x18] sm:$0xff] %vm850, %v581
      %1136 = vst.msk [vmem:[#allocation2 + $0x20] sm:$0xff] %vm850, %v582
      %1137 = vst.msk [vmem:[#allocation2 + $0x28] sm:$0xff] %vm850, %v583
      %1138 = vst.msk [vmem:[#allocation2 + $0x30] sm:$0xff] %vm850, %v584
      %1139 = vst.msk [vmem:[#allocation2 + $0x38] sm:$0xff] %vm850, %v585
      %1140 = vst.msk [vmem:[#allocation2 + $0x40] sm:$0xff] %vm850, %v586
      %1141 = vst.msk [vmem:[#allocation2 + $0x48] sm:$0xff] %vm850, %v587
      %1142 = vst.msk [vmem:[#allocation2 + $0x50] sm:$0xff] %vm850, %v588
      %1143 = vst.msk [vmem:[#allocation2 + $0x58] sm:$0xff] %vm850, %v589
      %1144 = vst.msk [vmem:[#allocation2 + $0x60] sm:$0xff] %vm850, %v590
      %1145 = vst.msk [vmem:[#allocation2 + $0x68] sm:$0xff] %vm850, %v591
      %1146 = vst.msk [vmem:[#allocation2 + $0x70] sm:$0xff] %vm850, %v592
      %1147 = vst.msk [vmem:[#allocation2 + $0x78] sm:$0xff] %vm850, %v593
      %p1148 = scmp.eq.s32.totalorder %s23, 1
      // Predicated region
      $region37: #{self_att_2d.4} parent=31 // pred_check
        %p1149 = pneg %p1148
      $region38: #{self_att_2d.4} parent=31 // pred_check_branch
        %1151 = sbr.rel (%p1149) target = $region40
      $region39: #{self_att_2d.4} parent=31 // pred_region
        %v1152 = vld [vmem:[#allocation3] sm:$0xff]
        %v1153 = vld [vmem:[#allocation3 + $0x8] sm:$0xff]
        %v1154 = vld [vmem:[#allocation3 + $0x10] sm:$0xff]
        %v1155 = vld [vmem:[#allocation3 + $0x18] sm:$0xff]
        %v1156 = vld [vmem:[#allocation3 + $0x20] sm:$0xff]
        %v1157 = vld [vmem:[#allocation3 + $0x28] sm:$0xff]
        %v1158 = vld [vmem:[#allocation3 + $0x30] sm:$0xff]
        %v1159 = vld [vmem:[#allocation3 + $0x38] sm:$0xff]
        %v1160 = vld [vmem:[#allocation3 + $0x40] sm:$0xff]
        %v1161 = vld [vmem:[#allocation3 + $0x48] sm:$0xff]
        %v1162 = vld [vmem:[#allocation3 + $0x50] sm:$0xff]
        %v1163 = vld [vmem:[#allocation3 + $0x58] sm:$0xff]
        %v1164 = vld [vmem:[#allocation3 + $0x60] sm:$0xff]
        %v1165 = vld [vmem:[#allocation3 + $0x68] sm:$0xff]
        %v1166 = vld [vmem:[#allocation3 + $0x70] sm:$0xff]
        %v1167 = vld [vmem:[#allocation3 + $0x78] sm:$0xff]
        %v1168 = vrcp.pop %v1152
        %v1169 = vrcp.pop %v1153
        %v1170 = vrcp.pop %v1154
        %v1171 = vrcp.pop %v1155
        %v1172 = vrcp.pop %v1156
        %v1173 = vrcp.pop %v1157
        %v1174 = vrcp.pop %v1158
        %v1175 = vrcp.pop %v1159
        %v1176 = vrcp.pop %v1160
        %v1177 = vrcp.pop %v1161
        %v1178 = vrcp.pop %v1162
        %v1179 = vrcp.pop %v1163
        %v1180 = vrcp.pop %v1164
        %v1181 = vrcp.pop %v1165
        %v1182 = vrcp.pop %v1166
        %v1183 = vrcp.pop %v1167
        %v1184 = vld [vmem:[#allocation4] sm:$0xff]
        %v1185 = vld [vmem:[#allocation4 + $0x8] sm:$0xff]
        %v1186 = vld [vmem:[#allocation4 + $0x10] sm:$0xff]
        %v1187 = vld [vmem:[#allocation4 + $0x18] sm:$0xff]
        %v1188 = vld [vmem:[#allocation4 + $0x20] sm:$0xff]
        %v1189 = vld [vmem:[#allocation4 + $0x28] sm:$0xff]
        %v1190 = vld [vmem:[#allocation4 + $0x30] sm:$0xff]
        %v1191 = vld [vmem:[#allocation4 + $0x38] sm:$0xff]
        %v1192 = vld [vmem:[#allocation4 + $0x40] sm:$0xff]
        %v1193 = vld [vmem:[#allocation4 + $0x48] sm:$0xff]
        %v1194 = vld [vmem:[#allocation4 + $0x50] sm:$0xff]
        %v1195 = vld [vmem:[#allocation4 + $0x58] sm:$0xff]
        %v1196 = vld [vmem:[#allocation4 + $0x60] sm:$0xff]
        %v1197 = vld [vmem:[#allocation4 + $0x68] sm:$0xff]
        %v1198 = vld [vmem:[#allocation4 + $0x70] sm:$0xff]
        %v1199 = vld [vmem:[#allocation4 + $0x78] sm:$0xff]
        %1201 = vset.pattern.permute.xlu0 0
        %1202 = vperm.xlu0 %1201, %v1168
        %v1203 = vpop.permute.xlu0 %1202
        %1206 = vset.pattern.permute.xlu0 0
        %1207 = vperm.xlu0 %1206, %v1169
        %v1208 = vpop.permute.xlu0 %1207
        %1211 = vset.pattern.permute.xlu0 0
        %1212 = vperm.xlu0 %1211, %v1170
        %v1213 = vpop.permute.xlu0 %1212
        %1216 = vset.pattern.permute.xlu0 0
        %1217 = vperm.xlu0 %1216, %v1171
        %v1218 = vpop.permute.xlu0 %1217
        %1221 = vset.pattern.permute.xlu0 0
        %1222 = vperm.xlu0 %1221, %v1172
        %v1223 = vpop.permute.xlu0 %1222
        %1226 = vset.pattern.permute.xlu0 0
        %1227 = vperm.xlu0 %1226, %v1173
        %v1228 = vpop.permute.xlu0 %1227
        %1231 = vset.pattern.permute.xlu0 0
        %1232 = vperm.xlu0 %1231, %v1174
        %v1233 = vpop.permute.xlu0 %1232
        %1236 = vset.pattern.permute.xlu0 0
        %1237 = vperm.xlu0 %1236, %v1175
        %v1238 = vpop.permute.xlu0 %1237
        %1241 = vset.pattern.permute.xlu0 0
        %1242 = vperm.xlu0 %1241, %v1176
        %v1243 = vpop.permute.xlu0 %1242
        %1246 = vset.pattern.permute.xlu0 0
        %1247 = vperm.xlu0 %1246, %v1177
        %v1248 = vpop.permute.xlu0 %1247
        %1251 = vset.pattern.permute.xlu0 0
        %1252 = vperm.xlu0 %1251, %v1178
        %v1253 = vpop.permute.xlu0 %1252
        %1256 = vset.pattern.permute.xlu0 0
        %1257 = vperm.xlu0 %1256, %v1179
        %v1258 = vpop.permute.xlu0 %1257
        %1261 = vset.pattern.permute.xlu0 0
        %1262 = vperm.xlu0 %1261, %v1180
        %v1263 = vpop.permute.xlu0 %1262
        %1266 = vset.pattern.permute.xlu0 0
        %1267 = vperm.xlu0 %1266, %v1181
        %v1268 = vpop.permute.xlu0 %1267
        %1271 = vset.pattern.permute.xlu0 0
        %1272 = vperm.xlu0 %1271, %v1182
        %v1273 = vpop.permute.xlu0 %1272
        %1276 = vset.pattern.permute.xlu0 0
        %1277 = vperm.xlu0 %1276, %v1183
        %v1278 = vpop.permute.xlu0 %1277
        %v1280 = vmul.f32 %v1184, %v1203
        %v1281 = vmul.f32 %v1185, %v1208
        %v1282 = vmul.f32 %v1186, %v1213
        %v1283 = vmul.f32 %v1187, %v1218
        %v1284 = vmul.f32 %v1188, %v1223
        %v1285 = vmul.f32 %v1189, %v1228
        %v1286 = vmul.f32 %v1190, %v1233
        %v1287 = vmul.f32 %v1191, %v1238
        %v1288 = vmul.f32 %v1192, %v1243
        %v1289 = vmul.f32 %v1193, %v1248
        %v1290 = vmul.f32 %v1194, %v1253
        %v1291 = vmul.f32 %v1195, %v1258
        %v1292 = vmul.f32 %v1196, %v1263
        %v1293 = vmul.f32 %v1197, %v1268
        %v1294 = vmul.f32 %v1198, %v1273
        %v1295 = vmul.f32 %v1199, %v1278
        %v1296 = vpack.c.bf16 %v1280, %v1280
        %v1297 = vpack.c.bf16 %v1281, %v1281
        %v1298 = vpack.c.bf16 %v1282, %v1282
        %v1299 = vpack.c.bf16 %v1283, %v1283
        %v1300 = vpack.c.bf16 %v1284, %v1284
        %v1301 = vpack.c.bf16 %v1285, %v1285
        %v1302 = vpack.c.bf16 %v1286, %v1286
        %v1303 = vpack.c.bf16 %v1287, %v1287
        %v1304 = vpack.c.bf16 %v1288, %v1288
        %v1305 = vpack.c.bf16 %v1289, %v1289
        %v1306 = vpack.c.bf16 %v1290, %v1290
        %v1307 = vpack.c.bf16 %v1291, %v1291
        %v1308 = vpack.c.bf16 %v1292, %v1292
        %v1309 = vpack.c.bf16 %v1293, %v1293
        %v1310 = vpack.c.bf16 %v1294, %v1294
        %v1311 = vpack.c.bf16 %v1295, %v1295
        %vm1312 = vcmask 11264
        %1313 = vst.msk [vmem:[%s338] sm:$0xf] %vm1312, %v1296
        %1314 = vst.msk [vmem:[%s338 + $0x4] sm:$0xf] %vm1312, %v1297
        %1315 = vst.msk [vmem:[%s338 + $0x8] sm:$0xf] %vm1312, %v1298
        %1316 = vst.msk [vmem:[%s338 + $0xc] sm:$0xf] %vm1312, %v1299
        %1317 = vst.msk [vmem:[%s338 + $0x10] sm:$0xf] %vm1312, %v1300
        %1318 = vst.msk [vmem:[%s338 + $0x14] sm:$0xf] %vm1312, %v1301
        %1319 = vst.msk [vmem:[%s338 + $0x18] sm:$0xf] %vm1312, %v1302
        %1320 = vst.msk [vmem:[%s338 + $0x1c] sm:$0xf] %vm1312, %v1303
        %1321 = vst.msk [vmem:[%s338 + $0x20] sm:$0xf] %vm1312, %v1304
        %1322 = vst.msk [vmem:[%s338 + $0x24] sm:$0xf] %vm1312, %v1305
        %1323 = vst.msk [vmem:[%s338 + $0x28] sm:$0xf] %vm1312, %v1306
        %1324 = vst.msk [vmem:[%s338 + $0x2c] sm:$0xf] %vm1312, %v1307
        %1325 = vst.msk [vmem:[%s338 + $0x30] sm:$0xf] %vm1312, %v1308
        %1326 = vst.msk [vmem:[%s338 + $0x34] sm:$0xf] %vm1312, %v1309
        %1327 = vst.msk [vmem:[%s338 + $0x38] sm:$0xf] %vm1312, %v1310
        %1328 = vst.msk [vmem:[%s338 + $0x3c] sm:$0xf] %vm1312, %v1311
      $region40: #{self_att_2d.4} parent=31 // pred_fallthru
        _
      %s1329 = smul.u32 16, %s22
      %p1330 = scmp.lt.s32.totalorder %s20, 1
      %s1331 = scalar_select %p1330, %s20, 1
      %p1332 = scmp.lt.s32.totalorder %s21, 1
      %s1333 = scalar_select %p1332, %s21, 1
      %p1334 = scmp.lt.s32.totalorder %s1329, 31
      %s1335 = scalar_select %p1334, %s1329, 31
      %s1336 = smul.addr %s1333, 32
      %s1337 = sadd.s32 %s1335, %s1336
      %s1338 = smul.addr %s1331, 64
      %s1339 = sadd.s32 %s1337, %s1338
      %s1340 = smul.addr %s1339, 4
      %s1341 = scalar_lea.vmem %s3, %s1340
      // Predicated region
      $region41: #{self_att_2d.4} parent=31 // pred_check
        %p1342 = pneg %p152
      $region42: #{self_att_2d.4} parent=31 // pred_check_branch
        %1344 = sbr.rel (%p1342) target = $region44
      $region43: #{self_att_2d.4} parent=31 // pred_region
        %s1345 = smul.u32 16, %s22
      $region44: #{self_att_2d.4} parent=31 // pred_fallthru
        _
    $region32: #{self_att_2d.4} parent=5 // pred_fallthru
      _
    %p1346 = scmp.le.s32.totalorder 2, %s9
    // Predicated region
    $region45: #{self_att_2d.4} parent=5 // pred_check
      %p1347 = pneg %p1346
    $region46: #{self_att_2d.4} parent=5 // pred_check_branch
      %1349 = sbr.rel (%p1347) target = $region48
    $region47: #{self_att_2d.4} parent=5 // pred_region
      %s1350 = ssub.s32 %s9, 2
      // Predicated region
      $region49: #{self_att_2d.4} parent=47 // pred_check
        %p1351 = pneg %p158
      $region50: #{self_att_2d.4} parent=47 // pred_check_branch
        %1353 = sbr.rel (%p1351) target = $region52
      $region51: #{self_att_2d.4} parent=47 // pred_region
        %s1354 = smul.u32 16, %s26
        %p1355 = scmp.lt.s32.totalorder %s24, 1
        %s1356 = scalar_select %p1355, %s24, 1
        %p1357 = scmp.lt.s32.totalorder %s25, 1
        %s1358 = scalar_select %p1357, %s25, 1
        %p1359 = scmp.lt.s32.totalorder %s1354, 31
        %s1360 = scalar_select %p1359, %s1354, 31
        %s1361 = smul.addr %s1358, 32
        %s1362 = sadd.s32 %s1360, %s1361
        %s1363 = smul.addr %s1356, 64
        %s1364 = sadd.s32 %s1362, %s1363
        %s1365 = smul.addr %s1364, 4
        %s1366 = scalar_lea.vmem %s3, %s1365
      $region52: #{self_att_2d.4} parent=47 // pred_fallthru
        _
    $region48: #{self_att_2d.4} parent=5 // pred_fallthru
      _
  $region6: #{self_att_2d.4} parent=0 // loop_footer
    %s13 = sadd.s32 1, %s9
  $region7: #{self_att_2d.4} parent=0 // loop_footer_branch
    %8 = sbr.rel target = $region3
  $region8: #{self_att_2d.4} parent=0 // loop_exit
    _

</llo_original>
